<compile_context>
chip_gen: v7x
topology: tpu7x:2x2x1
jax: 0.10.0
libtpu: 0.0.40
codegen_flags: <defaults>
</compile_context>

<pallas_src>
import functools

import jax
import jax.numpy as jnp
from jax.experimental import pallas as pl
from jax.experimental.pallas import tpu as pltpu


# ----------------------------- Pallas kernels ------------------------------

def _conv_pool_bias_kernel(p_ref, w_ref, b_ref, o_ref, *, cout):
    # p_ref: (1, M, 36*Cin) bf16   patch matrix for one image (M = H/2 * W/2)
    # w_ref: (36*Cin, 4*cout) bf16 combined pool-corner weights
    # b_ref: (1, cout) f32
    # o_ref: (1, M, cout) bf16     pooled NHWC-flattened output
    acc = jnp.dot(p_ref[0, :, :], w_ref[...],
                  preferred_element_type=jnp.float32)            # (M, 4*cout) f32
    c = cout
    pooled = jnp.maximum(
        jnp.maximum(acc[:, 0:c], acc[:, c:2 * c]),
        jnp.maximum(acc[:, 2 * c:3 * c], acc[:, 3 * c:4 * c]),
    )                                                            # max over 4 pool corners
    o_ref[0, :, :] = (pooled + b_ref[...]).astype(o_ref.dtype)


def _head_kernel(x_ref, w1_ref, b1_ref, w2_ref, b2_ref, o_ref):
    # x: (N,1024) bf16, w1: (1024,64) bf16, b1: (1,64) f32, w2: (64,10) bf16, b2: (1,10) f32
    h = jnp.dot(x_ref[...], w1_ref[...],
                preferred_element_type=jnp.float32) + b1_ref[...]
    o_ref[...] = jnp.dot(h.astype(w2_ref.dtype), w2_ref[...],
                         preferred_element_type=jnp.float32) + b2_ref[...]


# ------------------------- wrappers / host-side glue -------------------------

def _extract_patches(x):
    """NHWC bf16 (N,H,W,Cin) -> (N, (H/2)*(W/2), 36*Cin) patch matrix.

    Lane order: ((m*3+n)*4 + 2*r + s)*Cin + ci, i.e. 3x3 parity-plane windows of the
    padded input on the pooled (half-resolution) grid.  This is 9x smaller (and bf16)
    than a classic 25-tap f32 im2col.
    """
    N, H, W, Cin = x.shape
    H2, W2 = H // 2, W // 2
    Hp2, Wp2 = H2 + 2, W2 + 2
    xp = jnp.pad(x, ((0, 0), (2, 2), (2, 2), (0, 0)))             # (N, H+4, W+4, Cin)
    xq = xp.reshape(N, Hp2, 2, Wp2, 2, Cin)
    xq = jnp.transpose(xq, (0, 1, 3, 2, 4, 5)).reshape(N, Hp2, Wp2, 4 * Cin)
    wins = [xq[:, m:m + H2, n:n + W2, :] for m in range(3) for n in range(3)]
    return jnp.concatenate(wins, axis=-1).reshape(N, H2 * W2, 36 * Cin)


def conv5x5_pool2(x, w_big, b_row):
    """Fused Conv2d(5x5, padding=2) + bias + MaxPool2d(2) on NHWC bf16 input.

    x:     (N, H, W, Cin) bf16
    w_big: (36*Cin, 4*Cout) bf16 combined corner weights (see _prep_conv_weight)
    b_row: (1, Cout) f32
    returns (N, H/2, W/2, Cout) bf16.
    """
    N, H, W, Cin = x.shape
    H2, W2 = H // 2, W // 2
    K = 36 * Cin
    Cout = b_row.shape[1]

    patches = _extract_patches(x)                                 # (N, H2*W2, K)

    kernel = functools.partial(_conv_pool_bias_kernel, cout=Cout)
    out = pl.pallas_call(
        kernel,
        out_shape=jax.ShapeDtypeStruct((N, H2 * W2, Cout), jnp.bfloat16),
        grid=(N,),
        in_specs=[
            pl.BlockSpec((1, H2 * W2, K), lambda i: (i, 0, 0)),
            pl.BlockSpec((K, 4 * Cout), lambda i: (0, 0)),        # weights stay resident
            pl.BlockSpec((1, Cout), lambda i: (0, 0)),
        ],
        out_specs=pl.BlockSpec((1, H2 * W2, Cout), lambda i: (i, 0, 0)),
        compiler_params=pltpu.CompilerParams(
            dimension_semantics=("parallel",)),                   # v7x: both TensorCores
    )(patches, w_big, b_row)
    return out.reshape(N, H2, W2, Cout)


def linear_head(x, w1, b1, w2, b2):
    """Fused Linear(1024,64) + Linear(64,10), whole arrays resident in VMEM, no M padding."""
    N = x.shape[0]
    vmem = pl.BlockSpec(memory_space=pltpu.MemorySpace.VMEM)
    return pl.pallas_call(
        _head_kernel,
        out_shape=jax.ShapeDtypeStruct((N, w2.shape[1]), jnp.float32),
        in_specs=[vmem, vmem, vmem, vmem, vmem],
        out_specs=vmem,
    )(x, w1, b1, w2, b2)


# ---------------------- parameter init / preprocessing -----------------------

def init_params(key):
    ks = jax.random.split(key, 10)

    def conv_w(k, kh, kw, cin, cout):
        scale = 1.0 / jnp.sqrt(kh * kw * cin)
        return jax.random.uniform(k, (kh, kw, cin, cout), jnp.float32, -scale, scale)

    def lin_w(k, fin, fout):
        scale = 1.0 / jnp.sqrt(fin)
        return jax.random.uniform(k, (fin, fout), jnp.float32, -scale, scale)

    return {
        "w1": conv_w(ks[0], 5, 5, 3, 32),
        "b1": jax.random.uniform(ks[1], (32,), jnp.float32, -0.1, 0.1),
        "w2": conv_w(ks[2], 5, 5, 32, 32),
        "b2": jax.random.uniform(ks[3], (32,), jnp.float32, -0.05, 0.05),
        "w3": conv_w(ks[4], 5, 5, 32, 64),
        "b3": jax.random.uniform(ks[5], (64,), jnp.float32, -0.05, 0.05),
        "wl1": lin_w(ks[6], 1024, 64),
        "bl1": jax.random.uniform(ks[7], (64,), jnp.float32, -0.03, 0.03),
        "wl2": lin_w(ks[8], 64, 10),
        "bl2": jax.random.uniform(ks[9], (10,), jnp.float32, -0.1, 0.1),
    }


def _prep_conv_weight(w_hwio):
    """(5,5,Cin,Cout) HWIO -> (36*Cin, 4*Cout) bf16 combined pool-corner weight.

    Row order matches _extract_patches lanes ((m*3+n)*4 + 2r + s)*Cin + ci; the tap
    (dy, dx) = (2m+r-p, 2n+s-q) contributes to pool-corner column block j = 2p+q
    (zero-padded where the tap falls outside the 5x5 kernel).
    """
    KH, KW, Cin, Cout = w_hwio.shape
    corners = [jnp.pad(w_hwio, ((p, 1 - p), (q, 1 - q), (0, 0), (0, 0)))
               for p in (0, 1) for q in (0, 1)]                   # each (6,6,Cin,Cout)
    wc = jnp.concatenate(corners, axis=-1)                        # (6,6,Cin,4*Cout)
    wc = wc.reshape(3, 2, 3, 2, Cin, 4 * Cout)                    # (m, r, n, s, ci, :)
    wc = jnp.transpose(wc, (0, 2, 1, 3, 4, 5))                    # (m, n, r, s, ci, :)
    return wc.reshape(36 * Cin, 4 * Cout).astype(jnp.bfloat16)


def prepare_params(params):
    """One-time weight preprocessing (bf16 MXU operands, f32 row biases)."""
    prep = {}
    for i in (1, 2, 3):
        prep[f"w{i}"] = _prep_conv_weight(params[f"w{i}"])
        prep[f"b{i}"] = params[f"b{i}"].reshape(1, -1).astype(jnp.float32)
    # nn.Flatten on NCHW flattens in (C,H,W) order; our activations are flattened
    # (H,W,C) -> permute linear1's input rows once so semantics match.
    wl1 = params["wl1"].reshape(64, 4, 4, 64)                     # (c, h, w, out)
    wl1 = jnp.transpose(wl1, (1, 2, 0, 3)).reshape(1024, 64)      # (h*w*c, out)
    prep["wl1"] = wl1.astype(jnp.bfloat16)
    prep["bl1"] = params["bl1"].reshape(1, -1).astype(jnp.float32)
    prep["wl2"] = params["wl2"].astype(jnp.bfloat16)
    prep["bl2"] = params["bl2"].reshape(1, -1).astype(jnp.float32)
    return prep


# --------------------------------- forward ----------------------------------

@jax.jit
def forward(x_nchw, prep):
    # NCHW (PyTorch) -> NHWC (kernel layout), bf16 MXU operands
    x = jnp.transpose(x_nchw, (0, 2, 3, 1)).astype(jnp.bfloat16)  # (N,32,32, 3)
    x = conv5x5_pool2(x, prep["w1"], prep["b1"])                  # (N,16,16,32)
    x = conv5x5_pool2(x, prep["w2"], prep["b2"])                  # (N, 8, 8,32)
    x = conv5x5_pool2(x, prep["w3"], prep["b3"])                  # (N, 4, 4,64)
    n = x.shape[0]
    x = x.reshape(n, 4 * 4 * 64)                                  # (N, 1024) NHWC flatten
    return linear_head(x, prep["wl1"], prep["bl1"],
                       prep["wl2"], prep["bl2"])                  # (N, 10) f32


if __name__ == "__main__":
    key = jax.random.PRNGKey(0)
    k_x, k_p = jax.random.split(key)
    # forward requires 32x32 spatial so the flatten yields 1024 features
    x = jax.random.normal(k_x, (2, 3, 32, 32), dtype=jnp.float32)
    params = init_params(k_p)
    prep = prepare_params(params)

    out = forward(x, prep)
    out = jax.block_until_ready(out)
    assert out.shape == (2, 10), out.shape
    assert out.dtype == jnp.float32
    print("KERNEL_OK")
</pallas_src>

<mosaic_0001>
module attributes {stable_mosaic.version = 11 : i64} {
  func.func @_conv_pool_bias_kernel(%arg0: i32, %arg1: memref<1x256x108xbf16, #tpu.memory_space<vmem>>, %arg2: memref<108x128xbf16, #tpu.memory_space<vmem>>, %arg3: memref<1x32xf32, #tpu.memory_space<vmem>>, %arg4: memref<1x256x32xbf16, #tpu.memory_space<vmem>>) attributes {dimension_semantics = [#tpu.dimension_semantics<parallel>], iteration_bounds = array<i64: 2>, scalar_prefetch = 0 : i64, scratch_operands = 0 : i64, tpu.core_type = #tpu.core_type<tc>, window_params = [{transform_indices = @transform_0, window_bounds = array<i64: 1, 256, 108>}, {pipeline_mode = #tpu.pipeline_mode<synchronous>, transform_indices = @transform_1, window_bounds = array<i64: 108, 128>}, {pipeline_mode = #tpu.pipeline_mode<synchronous>, transform_indices = @transform_2, window_bounds = array<i64: 1, 32>}, {transform_indices = @transform_3, window_bounds = array<i64: 1, 256, 32>}]} {
    %c0 = arith.constant 0 : index
    %c0_0 = arith.constant 0 : index
    %c0_1 = arith.constant 0 : index
    %0 = vector.load %arg1[%c0, %c0_0, %c0_1] : memref<1x256x108xbf16, #tpu.memory_space<vmem>>, vector<1x256x108xbf16>
    %1 = vector.shape_cast %0 : vector<1x256x108xbf16> to vector<256x108xbf16>
    %c0_2 = arith.constant 0 : index
    %c0_3 = arith.constant 0 : index
    %2 = vector.load %arg2[%c0_2, %c0_3] : memref<108x128xbf16, #tpu.memory_space<vmem>>, vector<108x128xbf16>
    %cst = arith.constant dense<0.000000e+00> : vector<256x128xf32>
    %3 = tpu.matmul %1, %2, %cst {dimension_numbers = #tpu.dot_dimension_numbers<[1], [0], [0], [1], [0, 0, 1, 1], [], []>} : vector<256x108xbf16>, vector<108x128xbf16>, vector<256x128xf32> -> vector<256x128xf32>
    %4 = vector.extract_strided_slice %3 {offsets = [0, 0], sizes = [256, 32], strides = [1, 1]} : vector<256x128xf32> to vector<256x32xf32>
    %5 = vector.extract_strided_slice %3 {offsets = [0, 32], sizes = [256, 32], strides = [1, 1]} : vector<256x128xf32> to vector<256x32xf32>
    %6 = arith.maximumf %4, %5 : vector<256x32xf32>
    %7 = vector.extract_strided_slice %3 {offsets = [0, 64], sizes = [256, 32], strides = [1, 1]} : vector<256x128xf32> to vector<256x32xf32>
    %8 = vector.extract_strided_slice %3 {offsets = [0, 96], sizes = [256, 32], strides = [1, 1]} : vector<256x128xf32> to vector<256x32xf32>
    %9 = arith.maximumf %7, %8 : vector<256x32xf32>
    %10 = arith.maximumf %6, %9 : vector<256x32xf32>
    %c0_4 = arith.constant 0 : index
    %c0_5 = arith.constant 0 : index
    %11 = vector.load %arg3[%c0_4, %c0_5] : memref<1x32xf32, #tpu.memory_space<vmem>>, vector<1x32xf32>
    %12 = vector.broadcast %11 : vector<1x32xf32> to vector<256x32xf32>
    %13 = arith.addf %10, %12 : vector<256x32xf32>
    %14 = arith.truncf %13 : vector<256x32xf32> to vector<256x32xbf16>
    %c0_6 = arith.constant 0 : index
    %c0_7 = arith.constant 0 : index
    %c0_8 = arith.constant 0 : index
    %15 = vector.load %arg4[%c0_6, %c0_7, %c0_8] : memref<1x256x32xbf16, #tpu.memory_space<vmem>>, vector<1x256x32xbf16>
    %16 = vector.shape_cast %15 : vector<1x256x32xbf16> to vector<256x32xbf16>
    %17 = vector.shape_cast %14 : vector<256x32xbf16> to vector<1x256x32xbf16>
    tpu.vector_store %arg4[%c0_6, %c0_7, %c0_8], %17 {strides = array<i32>} : memref<1x256x32xbf16, #tpu.memory_space<vmem>>, vector<1x256x32xbf16>,
    return
  }
  func.func @transform_0(%arg0: i32) -> (i32, i32, i32) {
    %c0_i32 = arith.constant 0 : i32
    %c0_i32_0 = arith.constant 0 : i32
    %c0_i32_1 = arith.constant 0 : i32
    return %arg0, %c0_i32, %c0_i32_0 : i32, i32, i32
  }
  func.func @transform_1(%arg0: i32) -> (i32, i32) {
    %c0_i32 = arith.constant 0 : i32
    %c0_i32_0 = arith.constant 0 : i32
    %c0_i32_1 = arith.constant 0 : i32
    return %c0_i32, %c0_i32_0 : i32, i32
  }
  func.func @transform_2(%arg0: i32) -> (i32, i32) {
    %c0_i32 = arith.constant 0 : i32
    %c0_i32_0 = arith.constant 0 : i32
    %c0_i32_1 = arith.constant 0 : i32
    return %c0_i32, %c0_i32_0 : i32, i32
  }
  func.func @transform_3(%arg0: i32) -> (i32, i32, i32) {
    %c0_i32 = arith.constant 0 : i32
    %c0_i32_0 = arith.constant 0 : i32
    %c0_i32_1 = arith.constant 0 : i32
    return %arg0, %c0_i32, %c0_i32_0 : i32, i32, i32
  }
}

module attributes {stable_mosaic.version = 11 : i64} {
  func.func @_conv_pool_bias_kernel(%arg0: i32, %arg1: memref<1x64x1152xbf16, #tpu.memory_space<vmem>>, %arg2: memref<1152x128xbf16, #tpu.memory_space<vmem>>, %arg3: memref<1x32xf32, #tpu.memory_space<vmem>>, %arg4: memref<1x64x32xbf16, #tpu.memory_space<vmem>>) attributes {dimension_semantics = [#tpu.dimension_semantics<parallel>], iteration_bounds = array<i64: 2>, scalar_prefetch = 0 : i64, scratch_operands = 0 : i64, tpu.core_type = #tpu.core_type<tc>, window_params = [{transform_indices = @transform_0, window_bounds = array<i64: 1, 64, 1152>}, {pipeline_mode = #tpu.pipeline_mode<synchronous>, transform_indices = @transform_1, window_bounds = array<i64: 1152, 128>}, {pipeline_mode = #tpu.pipeline_mode<synchronous>, transform_indices = @transform_2, window_bounds = array<i64: 1, 32>}, {transform_indices = @transform_3, window_bounds = array<i64: 1, 64, 32>}]} {
    %c0 = arith.constant 0 : index
    %c0_0 = arith.constant 0 : index
    %c0_1 = arith.constant 0 : index
    %0 = vector.load %arg1[%c0, %c0_0, %c0_1] : memref<1x64x1152xbf16, #tpu.memory_space<vmem>>, vector<1x64x1152xbf16>
    %1 = vector.shape_cast %0 : vector<1x64x1152xbf16> to vector<64x1152xbf16>
    %c0_2 = arith.constant 0 : index
    %c0_3 = arith.constant 0 : index
    %2 = vector.load %arg2[%c0_2, %c0_3] : memref<1152x128xbf16, #tpu.memory_space<vmem>>, vector<1152x128xbf16>
    %cst = arith.constant dense<0.000000e+00> : vector<64x128xf32>
    %3 = tpu.matmul %1, %2, %cst {dimension_numbers = #tpu.dot_dimension_numbers<[1], [0], [0], [1], [0, 0, 1, 1], [], []>} : vector<64x1152xbf16>, vector<1152x128xbf16>, vector<64x128xf32> -> vector<64x128xf32>
    %4 = vector.extract_strided_slice %3 {offsets = [0, 0], sizes = [64, 32], strides = [1, 1]} : vector<64x128xf32> to vector<64x32xf32>
    %5 = vector.extract_strided_slice %3 {offsets = [0, 32], sizes = [64, 32], strides = [1, 1]} : vector<64x128xf32> to vector<64x32xf32>
    %6 = arith.maximumf %4, %5 : vector<64x32xf32>
    %7 = vector.extract_strided_slice %3 {offsets = [0, 64], sizes = [64, 32], strides = [1, 1]} : vector<64x128xf32> to vector<64x32xf32>
    %8 = vector.extract_strided_slice %3 {offsets = [0, 96], sizes = [64, 32], strides = [1, 1]} : vector<64x128xf32> to vector<64x32xf32>
    %9 = arith.maximumf %7, %8 : vector<64x32xf32>
    %10 = arith.maximumf %6, %9 : vector<64x32xf32>
    %c0_4 = arith.constant 0 : index
    %c0_5 = arith.constant 0 : index
    %11 = vector.load %arg3[%c0_4, %c0_5] : memref<1x32xf32, #tpu.memory_space<vmem>>, vector<1x32xf32>
    %12 = vector.broadcast %11 : vector<1x32xf32> to vector<64x32xf32>
    %13 = arith.addf %10, %12 : vector<64x32xf32>
    %14 = arith.truncf %13 : vector<64x32xf32> to vector<64x32xbf16>
    %c0_6 = arith.constant 0 : index
    %c0_7 = arith.constant 0 : index
    %c0_8 = arith.constant 0 : index
    %15 = vector.load %arg4[%c0_6, %c0_7, %c0_8] : memref<1x64x32xbf16, #tpu.memory_space<vmem>>, vector<1x64x32xbf16>
    %16 = vector.shape_cast %15 : vector<1x64x32xbf16> to vector<64x32xbf16>
    %17 = vector.shape_cast %14 : vector<64x32xbf16> to vector<1x64x32xbf16>
    tpu.vector_store %arg4[%c0_6, %c0_7, %c0_8], %17 {strides = array<i32>} : memref<1x64x32xbf16, #tpu.memory_space<vmem>>, vector<1x64x32xbf16>,
    return
  }
  func.func @transform_0(%arg0: i32) -> (i32, i32, i32) {
    %c0_i32 = arith.constant 0 : i32
    %c0_i32_0 = arith.constant 0 : i32
    %c0_i32_1 = arith.constant 0 : i32
    return %arg0, %c0_i32, %c0_i32_0 : i32, i32, i32
  }
  func.func @transform_1(%arg0: i32) -> (i32, i32) {
    %c0_i32 = arith.constant 0 : i32
    %c0_i32_0 = arith.constant 0 : i32
    %c0_i32_1 = arith.constant 0 : i32
    return %c0_i32, %c0_i32_0 : i32, i32
  }
  func.func @transform_2(%arg0: i32) -> (i32, i32) {
    %c0_i32 = arith.constant 0 : i32
    %c0_i32_0 = arith.constant 0 : i32
    %c0_i32_1 = arith.constant 0 : i32
    return %c0_i32, %c0_i32_0 : i32, i32
  }
  func.func @transform_3(%arg0: i32) -> (i32, i32, i32) {
    %c0_i32 = arith.constant 0 : i32
    %c0_i32_0 = arith.constant 0 : i32
    %c0_i32_1 = arith.constant 0 : i32
    return %arg0, %c0_i32, %c0_i32_0 : i32, i32, i32
  }
}

module attributes {stable_mosaic.version = 11 : i64} {
  func.func @_conv_pool_bias_kernel(%arg0: i32, %arg1: memref<1x16x1152xbf16, #tpu.memory_space<vmem>>, %arg2: memref<1152x256xbf16, #tpu.memory_space<vmem>>, %arg3: memref<1x64xf32, #tpu.memory_space<vmem>>, %arg4: memref<1x16x64xbf16, #tpu.memory_space<vmem>>) attributes {dimension_semantics = [#tpu.dimension_semantics<parallel>], iteration_bounds = array<i64: 2>, scalar_prefetch = 0 : i64, scratch_operands = 0 : i64, tpu.core_type = #tpu.core_type<tc>, window_params = [{transform_indices = @transform_0, window_bounds = array<i64: 1, 16, 1152>}, {pipeline_mode = #tpu.pipeline_mode<synchronous>, transform_indices = @transform_1, window_bounds = array<i64: 1152, 256>}, {pipeline_mode = #tpu.pipeline_mode<synchronous>, transform_indices = @transform_2, window_bounds = array<i64: 1, 64>}, {transform_indices = @transform_3, window_bounds = array<i64: 1, 16, 64>}]} {
    %c0 = arith.constant 0 : index
    %c0_0 = arith.constant 0 : index
    %c0_1 = arith.constant 0 : index
    %0 = vector.load %arg1[%c0, %c0_0, %c0_1] : memref<1x16x1152xbf16, #tpu.memory_space<vmem>>, vector<1x16x1152xbf16>
    %1 = vector.shape_cast %0 : vector<1x16x1152xbf16> to vector<16x1152xbf16>
    %c0_2 = arith.constant 0 : index
    %c0_3 = arith.constant 0 : index
    %2 = vector.load %arg2[%c0_2, %c0_3] : memref<1152x256xbf16, #tpu.memory_space<vmem>>, vector<1152x256xbf16>
    %cst = arith.constant dense<0.000000e+00> : vector<16x256xf32>
    %3 = tpu.matmul %1, %2, %cst {dimension_numbers = #tpu.dot_dimension_numbers<[1], [0], [0], [1], [0, 0, 1, 1], [], []>} : vector<16x1152xbf16>, vector<1152x256xbf16>, vector<16x256xf32> -> vector<16x256xf32>
    %4 = vector.extract_strided_slice %3 {offsets = [0, 0], sizes = [16, 64], strides = [1, 1]} : vector<16x256xf32> to vector<16x64xf32>
    %5 = vector.extract_strided_slice %3 {offsets = [0, 64], sizes = [16, 64], strides = [1, 1]} : vector<16x256xf32> to vector<16x64xf32>
    %6 = arith.maximumf %4, %5 : vector<16x64xf32>
    %7 = vector.extract_strided_slice %3 {offsets = [0, 128], sizes = [16, 64], strides = [1, 1]} : vector<16x256xf32> to vector<16x64xf32>
    %8 = vector.extract_strided_slice %3 {offsets = [0, 192], sizes = [16, 64], strides = [1, 1]} : vector<16x256xf32> to vector<16x64xf32>
    %9 = arith.maximumf %7, %8 : vector<16x64xf32>
    %10 = arith.maximumf %6, %9 : vector<16x64xf32>
    %c0_4 = arith.constant 0 : index
    %c0_5 = arith.constant 0 : index
    %11 = vector.load %arg3[%c0_4, %c0_5] : memref<1x64xf32, #tpu.memory_space<vmem>>, vector<1x64xf32>
    %12 = vector.broadcast %11 : vector<1x64xf32> to vector<16x64xf32>
    %13 = arith.addf %10, %12 : vector<16x64xf32>
    %14 = arith.truncf %13 : vector<16x64xf32> to vector<16x64xbf16>
    %c0_6 = arith.constant 0 : index
    %c0_7 = arith.constant 0 : index
    %c0_8 = arith.constant 0 : index
    %15 = vector.load %arg4[%c0_6, %c0_7, %c0_8] : memref<1x16x64xbf16, #tpu.memory_space<vmem>>, vector<1x16x64xbf16>
    %16 = vector.shape_cast %15 : vector<1x16x64xbf16> to vector<16x64xbf16>
    %17 = vector.shape_cast %14 : vector<16x64xbf16> to vector<1x16x64xbf16>
    tpu.vector_store %arg4[%c0_6, %c0_7, %c0_8], %17 {strides = array<i32>} : memref<1x16x64xbf16, #tpu.memory_space<vmem>>, vector<1x16x64xbf16>,
    return
  }
  func.func @transform_0(%arg0: i32) -> (i32, i32, i32) {
    %c0_i32 = arith.constant 0 : i32
    %c0_i32_0 = arith.constant 0 : i32
    %c0_i32_1 = arith.constant 0 : i32
    return %arg0, %c0_i32, %c0_i32_0 : i32, i32, i32
  }
  func.func @transform_1(%arg0: i32) -> (i32, i32) {
    %c0_i32 = arith.constant 0 : i32
    %c0_i32_0 = arith.constant 0 : i32
    %c0_i32_1 = arith.constant 0 : i32
    return %c0_i32, %c0_i32_0 : i32, i32
  }
  func.func @transform_2(%arg0: i32) -> (i32, i32) {
    %c0_i32 = arith.constant 0 : i32
    %c0_i32_0 = arith.constant 0 : i32
    %c0_i32_1 = arith.constant 0 : i32
    return %c0_i32, %c0_i32_0 : i32, i32
  }
  func.func @transform_3(%arg0: i32) -> (i32, i32, i32) {
    %c0_i32 = arith.constant 0 : i32
    %c0_i32_0 = arith.constant 0 : i32
    %c0_i32_1 = arith.constant 0 : i32
    return %arg0, %c0_i32, %c0_i32_0 : i32, i32, i32
  }
}

module attributes {stable_mosaic.version = 11 : i64} {
  func.func @_head_kernel(%arg0: memref<2x1024xbf16, #tpu.memory_space<vmem>>, %arg1: memref<1024x64xbf16, #tpu.memory_space<vmem>>, %arg2: memref<1x64xf32, #tpu.memory_space<vmem>>, %arg3: memref<64x10xbf16, #tpu.memory_space<vmem>>, %arg4: memref<1x10xf32, #tpu.memory_space<vmem>>, %arg5: memref<2x10xf32, #tpu.memory_space<vmem>>) attributes {dimension_semantics = [], scalar_prefetch = 0 : i64, scratch_operands = 0 : i64, tpu.core_type = #tpu.core_type<tc>} {
    %c0 = arith.constant 0 : index
    %c0_0 = arith.constant 0 : index
    %0 = vector.load %arg0[%c0, %c0_0] : memref<2x1024xbf16, #tpu.memory_space<vmem>>, vector<2x1024xbf16>
    %c0_1 = arith.constant 0 : index
    %c0_2 = arith.constant 0 : index
    %1 = vector.load %arg1[%c0_1, %c0_2] : memref<1024x64xbf16, #tpu.memory_space<vmem>>, vector<1024x64xbf16>
    %cst = arith.constant dense<0.000000e+00> : vector<2x64xf32>
    %2 = tpu.matmul %0, %1, %cst {dimension_numbers = #tpu.dot_dimension_numbers<[1], [0], [0], [1], [0, 0, 1, 1], [], []>} : vector<2x1024xbf16>, vector<1024x64xbf16>, vector<2x64xf32> -> vector<2x64xf32>
    %c0_3 = arith.constant 0 : index
    %c0_4 = arith.constant 0 : index
    %3 = vector.load %arg2[%c0_3, %c0_4] : memref<1x64xf32, #tpu.memory_space<vmem>>, vector<1x64xf32>
    %4 = vector.broadcast %3 : vector<1x64xf32> to vector<2x64xf32>
    %5 = arith.addf %2, %4 : vector<2x64xf32>
    %6 = arith.truncf %5 : vector<2x64xf32> to vector<2x64xbf16>
    %c0_5 = arith.constant 0 : index
    %c0_6 = arith.constant 0 : index
    %7 = vector.load %arg3[%c0_5, %c0_6] : memref<64x10xbf16, #tpu.memory_space<vmem>>, vector<64x10xbf16>
    %cst_7 = arith.constant dense<0.000000e+00> : vector<2x10xf32>
    %8 = tpu.matmul %6, %7, %cst_7 {dimension_numbers = #tpu.dot_dimension_numbers<[1], [0], [0], [1], [0, 0, 1, 1], [], []>} : vector<2x64xbf16>, vector<64x10xbf16>, vector<2x10xf32> -> vector<2x10xf32>
    %c0_8 = arith.constant 0 : index
    %c0_9 = arith.constant 0 : index
    %9 = vector.load %arg4[%c0_8, %c0_9] : memref<1x10xf32, #tpu.memory_space<vmem>>, vector<1x10xf32>
    %10 = vector.broadcast %9 : vector<1x10xf32> to vector<2x10xf32>
    %11 = arith.addf %8, %10 : vector<2x10xf32>
    %c0_10 = arith.constant 0 : index
    %c0_11 = arith.constant 0 : index
    %12 = vector.load %arg5[%c0_10, %c0_11] : memref<2x10xf32, #tpu.memory_space<vmem>>, vector<2x10xf32>
    tpu.vector_store %arg5[%c0_10, %c0_11], %11 {strides = array<i32>} : memref<2x10xf32, #tpu.memory_space<vmem>>, vector<2x10xf32>,
    return
  }
}

</mosaic_0001>

<llo_original>
// kernel: forward.4
$region0: #{forward.4}
  #allocation0 [shape = 'u32[]', space=smem, size = 0x4, offset = 0x4, fixed_abs, tag = 'smem constant byte address 0x4 - core index']
  #allocation1 [shape = 'u32[144,128]{1,0:T(1,128)}', space=vmem, size = 0x12000, scoped, tag = 'internal scratch']
  %s0 = inlined_call_operand.vmem [shape: bf16[2,256,108], index: 0, kind: input, shape index: {}]
  %s1 = inlined_call_operand.vmem [shape: bf16[108,128], index: 1, kind: input, shape index: {}]
  %s2 = inlined_call_operand.vmem [shape: f32[1,32], index: 2, kind: input, shape index: {}]
  %s3 = inlined_call_operand.vmem [shape: bf16[2,256,32], index: 3, kind: output, shape index: {}]
  %s4 = sld [smem:[#allocation0]]
  $region45: #{forward.4} parent=0
    _
  %s6 = ssub.s32 1, %s4
  %s7 = scalar_select 0, %s6, %s4
  loop: start=0, step=1, limit=4
  $region2: #{forward.4} parent=0 // loop_pre_header
    _
  $region3: #{forward.4} parent=0 // loop_header
    %s9 = sphi 0, %s13
    %p10 = scmp.ge.s32.totalorder %s9, 4
    %s19 = sphi 0, %s21
    %s22 = sphi 0, %s19
    %s23 = sphi 0, %s22
    %s39 = sphi 0, %s23
    %s43 = sphi 0, %s43
    %s45 = sphi 0, %s43
    %s46 = sphi 0, %s45
    %s60 = sphi 0, %s46
    %s64 = sphi 0, %s64
    %s66 = sphi 0, %s64
    %s67 = sphi 0, %s66
    %s81 = sphi 0, %s67
    %s87 = sphi 0, %s89
    %s90 = sphi 0, %s87
    %s91 = sphi 0, %s90
    %s107 = sphi 0, %s91
  $region4: #{forward.4} parent=0 // loop_header_branch
    %12 = sbr.rel (%p10) target = $region8
  $region5: #{forward.4} parent=0 // loop_body
    %s14 = ssub.s32 %s9, 1
    %s15 = ssub.s32 %s9, 2
    %s16 = sadd.s32 %s9, 1
    %s17 = ssub.s32 %s9, %s16
    %p18 = scmp.eq.s32.totalorder %s17, 0
    %s20 = sadd.s32 %s19, 1
    %s21 = scalar_select %p18, %s19, %s20
    %p24 = pneg %p18
    %p25 = scmp.eq.s32.totalorder %s9, 1
    %p26 = por %p24, %p25
    %p27 = scmp.ne.s32.totalorder %s19, %s22
    %p28 = scmp.eq.s32.totalorder %s9, 0
    %p29 = por %p27, %p28
    %p30 = scmp.ne.s32.totalorder %s19, %s22
    %p31 = scmp.eq.s32.totalorder %s14, 1
    %p32 = por %p30, %p31
    %p33 = scmp.ne.s32.totalorder %s22, %s23
    %p34 = scmp.eq.s32.totalorder %s14, 0
    %p35 = por %p33, %p34
    %p36 = scmp.ne.s32.totalorder %s22, %s23
    %p37 = scmp.eq.s32.totalorder %s15, 1
    %p38 = por %p36, %p37
    %p40 = scmp.ne.s32.totalorder %s23, %s39
    %p41 = scmp.eq.s32.totalorder %s15, 0
    %p42 = por %p40, %p41
    %s44 = sadd.s32 %s43, 1
    %p47 = scmp.eq.s32.totalorder %s9, 1
    %p48 = scmp.ne.s32.totalorder %s43, %s45
    %p49 = scmp.eq.s32.totalorder %s9, 0
    %p50 = por %p48, %p49
    %p51 = scmp.ne.s32.totalorder %s43, %s45
    %p52 = scmp.eq.s32.totalorder %s14, 1
    %p53 = por %p51, %p52
    %p54 = scmp.ne.s32.totalorder %s45, %s46
    %p55 = scmp.eq.s32.totalorder %s14, 0
    %p56 = por %p54, %p55
    %p57 = scmp.ne.s32.totalorder %s45, %s46
    %p58 = scmp.eq.s32.totalorder %s15, 1
    %p59 = por %p57, %p58
    %p61 = scmp.ne.s32.totalorder %s46, %s60
    %p62 = scmp.eq.s32.totalorder %s15, 0
    %p63 = por %p61, %p62
    %s65 = sadd.s32 %s64, 1
    %p68 = scmp.eq.s32.totalorder %s9, 1
    %p69 = scmp.ne.s32.totalorder %s64, %s66
    %p70 = scmp.eq.s32.totalorder %s9, 0
    %p71 = por %p69, %p70
    %p72 = scmp.ne.s32.totalorder %s64, %s66
    %p73 = scmp.eq.s32.totalorder %s14, 1
    %p74 = por %p72, %p73
    %p75 = scmp.ne.s32.totalorder %s66, %s67
    %p76 = scmp.eq.s32.totalorder %s14, 0
    %p77 = por %p75, %p76
    %p78 = scmp.ne.s32.totalorder %s66, %s67
    %p79 = scmp.eq.s32.totalorder %s15, 1
    %p80 = por %p78, %p79
    %p82 = scmp.ne.s32.totalorder %s67, %s81
    %p83 = scmp.eq.s32.totalorder %s15, 0
    %p84 = por %p82, %p83
    %s85 = ssub.s32 %s9, %s16
    %p86 = scmp.eq.s32.totalorder %s85, 0
    %s88 = sadd.s32 %s87, 1
    %s89 = scalar_select %p86, %s87, %s88
    %p92 = pneg %p86
    %p93 = scmp.eq.s32.totalorder %s9, 1
    %p94 = por %p92, %p93
    %p95 = scmp.ne.s32.totalorder %s87, %s90
    %p96 = scmp.eq.s32.totalorder %s9, 0
    %p97 = por %p95, %p96
    %p98 = scmp.ne.s32.totalorder %s87, %s90
    %p99 = scmp.eq.s32.totalorder %s14, 1
    %p100 = por %p98, %p99
    %p101 = scmp.ne.s32.totalorder %s90, %s91
    %p102 = scmp.eq.s32.totalorder %s14, 0
    %p103 = por %p101, %p102
    %p104 = scmp.ne.s32.totalorder %s90, %s91
    %p105 = scmp.eq.s32.totalorder %s15, 1
    %p106 = por %p104, %p105
    %p108 = scmp.ne.s32.totalorder %s91, %s107
    %p109 = scmp.eq.s32.totalorder %s15, 0
    %p110 = por %p108, %p109
    %p111 = scmp.le.s32.totalorder 1, %s9
    %p112 = scmp.lt.s32.totalorder %s9, 3
    %p113 = pnand %p111, %p112
    %p114 = pneg %p113
    // Predicated region
    $region9: #{forward.4} parent=5 // pred_check
      _
    $region10: #{forward.4} parent=5 // pred_check_branch
      %116 = sbr.rel (%p113) target = $region12
    $region11: #{forward.4} parent=5 // pred_region
      %s117 = ssub.s32 %s9, 1
      // Predicated region
      $region13: #{forward.4} parent=11 // pred_check
        %p118 = pneg %p56
      $region14: #{forward.4} parent=11 // pred_check_branch
        %120 = sbr.rel (%p118) target = $region16
      $region15: #{forward.4} parent=11 // pred_region
        _
      $region16: #{forward.4} parent=11 // pred_fallthru
        _
      // Predicated region
      $region17: #{forward.4} parent=11 // pred_check
        %p121 = pneg %p77
      $region18: #{forward.4} parent=11 // pred_check_branch
        %123 = sbr.rel (%p121) target = $region20
      $region19: #{forward.4} parent=11 // pred_region
        _
      $region20: #{forward.4} parent=11 // pred_fallthru
        _
    $region12: #{forward.4} parent=5 // pred_fallthru
      _
    %p124 = scmp.lt.s32.totalorder %s9, 2
    // Predicated region
    $region21: #{forward.4} parent=5 // pred_check
      %p125 = pneg %p124
    $region22: #{forward.4} parent=5 // pred_check_branch
      %127 = sbr.rel (%p125) target = $region24
    $region23: #{forward.4} parent=5 // pred_region
      // Predicated region
      $region25: #{forward.4} parent=23 // pred_check
        %p128 = pneg %p29
      $region26: #{forward.4} parent=23 // pred_check_branch
        %130 = sbr.rel (%p128) target = $region28
      $region27: #{forward.4} parent=23 // pred_region
        %p131 = scmp.lt.s32.totalorder %s9, 1
        %s132 = scalar_select %p131, %s9, 1
        %s133 = smul.addr %s132, 32
        %s134 = smul.addr %s133, 4
        %s135 = scalar_lea.vmem %s0, %s134
      $region28: #{forward.4} parent=23 // pred_fallthru
        _
    $region24: #{forward.4} parent=5 // pred_fallthru
      _
    %p136 = scmp.le.s32.totalorder 1, %s9
    %p137 = scmp.lt.s32.totalorder %s9, 3
    %p138 = pnand %p136, %p137
    %p139 = pneg %p138
    // Predicated region
    $region29: #{forward.4} parent=5 // pred_check
      _
    $region30: #{forward.4} parent=5 // pred_check_branch
      %141 = sbr.rel (%p138) target = $region32
    $region31: #{forward.4} parent=5 // pred_region
      %s142 = ssub.s32 %s9, 1
      %p143 = scmp.lt.s32.totalorder %s14, 1
      %s144 = scalar_select %p143, %s14, 1
      %s145 = smul.addr %s144, 32
      %s146 = smul.addr %s145, 4
      %s147 = scalar_lea.vmem %s0, %s146
      %p148 = pneg %p35
      %p149 = pneg %p32
      %p150 = pneg %p56
      %p151 = pneg %p53
      %p152 = pneg %p77
      %p153 = pneg %p74
      %p154 = pneg %p103
      %p155 = pneg %p100
      %p156 = scmp.lt.s32.totalorder %s14, 1
      %s157 = scalar_select %p156, %s14, 1
      %s158 = smul.addr %s157, 32
      %s159 = smul.addr %s158, 4
      %s160 = scalar_lea.vmem %s3, %s159
      %p161 = scmp.lt.s32.totalorder %s14, 1
      %s162 = scalar_select %p161, %s14, 1
      %s163 = smul.addr %s162, 32
      %s164 = smul.addr %s163, 4
      %s165 = scalar_lea.vmem %s0, %s164
      %p166 = scmp.lt.s32.totalorder %s14, 1
      %s167 = scalar_select %p166, %s14, 1
      %s168 = smul.addr %s167, 32
      %s169 = smul.addr %s168, 4
      %s170 = scalar_lea.vmem %s3, %s169
      %v172 = vld [vmem:[%s165] sm:$0xf]
      %v173 = vld [vmem:[%s165 + $0x4] sm:$0xf]
      %v174 = vld [vmem:[%s165 + $0x8] sm:$0xf]
      %v175 = vld [vmem:[%s165 + $0xc] sm:$0xf]
      %v176 = vld [vmem:[%s165 + $0x10] sm:$0xf]
      %v177 = vld [vmem:[%s165 + $0x14] sm:$0xf]
      %v178 = vld [vmem:[%s165 + $0x18] sm:$0xf]
      %v179 = vld [vmem:[%s165 + $0x1c] sm:$0xf]
      %v180 = vld [vmem:[%s165 + $0x20] sm:$0xf]
      %v181 = vld [vmem:[%s165 + $0x24] sm:$0xf]
      %v182 = vld [vmem:[%s165 + $0x28] sm:$0xf]
      %v183 = vld [vmem:[%s165 + $0x2c] sm:$0xf]
      %v184 = vld [vmem:[%s165 + $0x30] sm:$0xf]
      %v185 = vld [vmem:[%s165 + $0x34] sm:$0xf]
      %v186 = vld [vmem:[%s165 + $0x38] sm:$0xf]
      %v187 = vld [vmem:[%s165 + $0x3c] sm:$0xf]
      %v188 = vld [vmem:[%s165 + $0x40] sm:$0xf]
      %v189 = vld [vmem:[%s165 + $0x44] sm:$0xf]
      %v190 = vld [vmem:[%s165 + $0x48] sm:$0xf]
      %v191 = vld [vmem:[%s165 + $0x4c] sm:$0xf]
      %v192 = vld [vmem:[%s165 + $0x50] sm:$0xf]
      %v193 = vld [vmem:[%s165 + $0x54] sm:$0xf]
      %v194 = vld [vmem:[%s165 + $0x58] sm:$0xf]
      %v195 = vld [vmem:[%s165 + $0x5c] sm:$0xf]
      %v196 = vld [vmem:[%s165 + $0x60] sm:$0xf]
      %v197 = vld [vmem:[%s165 + $0x64] sm:$0xf]
      %v198 = vld [vmem:[%s165 + $0x68] sm:$0xf]
      %v199 = vld [vmem:[%s165 + $0x6c] sm:$0xf]
      %v200 = vld [vmem:[%s165 + $0x70] sm:$0xf]
      %v201 = vld [vmem:[%s165 + $0x74] sm:$0xf]
      %v202 = vld [vmem:[%s165 + $0x78] sm:$0xf]
      %v203 = vld [vmem:[%s165 + $0x7c] sm:$0xf]
      %v204 = vld [vmem:[%s1] sm:$0xf]
      %v205 = vld [vmem:[%s1 + $0x4] sm:$0xf]
      %v206 = vld [vmem:[%s1 + $0x8] sm:$0xf]
      %v207 = vld [vmem:[%s1 + $0xc] sm:$0xf]
      %v208 = vld [vmem:[%s1 + $0x10] sm:$0xf]
      %v209 = vld [vmem:[%s1 + $0x14] sm:$0xf]
      %v210 = vld [vmem:[%s1 + $0x18] sm:$0xf]
      %v211 = vld [vmem:[%s1 + $0x1c] sm:$0xf]
      %v212 = vld [vmem:[%s1 + $0x20] sm:$0xf]
      %v213 = vld [vmem:[%s1 + $0x24] sm:$0xf]
      %v214 = vld [vmem:[%s1 + $0x28] sm:$0xf]
      %v215 = vld [vmem:[%s1 + $0x2c] sm:$0xf]
      %v216 = vld [vmem:[%s1 + $0x30] sm:$0xf]
      %v217 = vld [vmem:[%s1 + $0x34] sm:$0x3]
      %v250 = vunpack.c.l.b16 %v172
      %v251 = vunpack.c.l.b16 %v173
      %v252 = vunpack.c.l.b16 %v174
      %v253 = vunpack.c.l.b16 %v175
      %v254 = vunpack.c.l.b16 %v176
      %v255 = vunpack.c.l.b16 %v177
      %v256 = vunpack.c.l.b16 %v178
      %v257 = vunpack.c.l.b16 %v179
      %v258 = vunpack.c.l.b16 %v180
      %v259 = vunpack.c.l.b16 %v181
      %v260 = vunpack.c.l.b16 %v182
      %v261 = vunpack.c.l.b16 %v183
      %v262 = vunpack.c.l.b16 %v184
      %v263 = vunpack.c.l.b16 %v185
      %v264 = vunpack.c.l.b16 %v186
      %v265 = vunpack.c.l.b16 %v187
      %v266 = vunpack.c.l.b16 %v188
      %v267 = vunpack.c.l.b16 %v189
      %v268 = vunpack.c.l.b16 %v190
      %v269 = vunpack.c.l.b16 %v191
      %v270 = vunpack.c.l.b16 %v192
      %v271 = vunpack.c.l.b16 %v193
      %v272 = vunpack.c.l.b16 %v194
      %v273 = vunpack.c.l.b16 %v195
      %v274 = vunpack.c.l.b16 %v196
      %v275 = vunpack.c.l.b16 %v197
      %v276 = vunpack.c.l.b16 %v198
      %v277 = vunpack.c.l.b16 %v199
      %v278 = vunpack.c.l.b16 %v200
      %v279 = vunpack.c.l.b16 %v201
      %v280 = vunpack.c.l.b16 %v202
      %v281 = vunpack.c.l.b16 %v203
      %v282 = vpack.c.b16 %v251, %v250
      %v283 = vpack.c.b16 %v253, %v252
      %v284 = vpack.c.b16 %v255, %v254
      %v285 = vpack.c.b16 %v257, %v256
      %v286 = vpack.c.b16 %v259, %v258
      %v287 = vpack.c.b16 %v261, %v260
      %v288 = vpack.c.b16 %v263, %v262
      %v289 = vpack.c.b16 %v265, %v264
      %v290 = vpack.c.b16 %v267, %v266
      %v291 = vpack.c.b16 %v269, %v268
      %v292 = vpack.c.b16 %v271, %v270
      %v293 = vpack.c.b16 %v273, %v272
      %v294 = vpack.c.b16 %v275, %v274
      %v295 = vpack.c.b16 %v277, %v276
      %v296 = vpack.c.b16 %v279, %v278
      %v297 = vpack.c.b16 %v281, %v280
      %v312 = vunpack.c.l.b16 %v204
      %v313 = vunpack.c.l.b16 %v205
      %v314 = vunpack.c.l.b16 %v206
      %v315 = vunpack.c.l.b16 %v207
      %v316 = vunpack.c.l.b16 %v208
      %v317 = vunpack.c.l.b16 %v209
      %v318 = vunpack.c.l.b16 %v210
      %v319 = vunpack.c.l.b16 %v211
      %v320 = vunpack.c.l.b16 %v212
      %v321 = vunpack.c.l.b16 %v213
      %v322 = vunpack.c.l.b16 %v214
      %v323 = vunpack.c.l.b16 %v215
      %v324 = vunpack.c.l.b16 %v216
      %v325 = vunpack.c.l.b16 %v217
      %v326 = vpack.c.b16 %v313, %v312
      %v327 = vpack.c.b16 %v315, %v314
      %v328 = vpack.c.b16 %v317, %v316
      %v329 = vpack.c.b16 %v319, %v318
      %v330 = vpack.c.b16 %v321, %v320
      %v331 = vpack.c.b16 %v323, %v322
      %v332 = vpack.c.b16 %v325, %v324
      %vm339 = vcmask 883712
      %v341 = vsel %vm339, %v282, 0
      %v344 = vsel %vm339, %v283, 0
      %v347 = vsel %vm339, %v284, 0
      %v350 = vsel %vm339, %v285, 0
      %v353 = vsel %vm339, %v286, 0
      %v356 = vsel %vm339, %v287, 0
      %v359 = vsel %vm339, %v288, 0
      %v362 = vsel %vm339, %v289, 0
      %v365 = vsel %vm339, %v290, 0
      %v368 = vsel %vm339, %v291, 0
      %v371 = vsel %vm339, %v292, 0
      %v374 = vsel %vm339, %v293, 0
      %v377 = vsel %vm339, %v294, 0
      %v380 = vsel %vm339, %v295, 0
      %v383 = vsel %vm339, %v296, 0
      %v386 = vsel %vm339, %v297, 0
      %vm388 = vcmask 1045504
      %v390 = vsel %vm388, %v332, 0
      %392 = vmatprep.subr.bf16.mxu0 0
      %393 = vmatpush1.bf16.msra.mxu0 %v326
      %394 = vmatprep.subr.bf16.mxu0 0
      %395 = vmatpush1.bf16.msra.mxu0 %v327
      %396 = vmatprep.subr.bf16.mxu0 0
      %397 = vmatpush1.bf16.msra.mxu0 %v328
      %398 = vmatprep.subr.bf16.mxu0 0
      %399 = vmatpush1.bf16.msra.mxu0 %v329
      %400 = vmatprep.subr.bf16.mxu0 0
      %401 = vmatpush1.bf16.msra.mxu0 %v330
      %402 = vmatprep.subr.bf16.mxu0 0
      %403 = vmatpush1.bf16.msra.mxu0 %v331
      %404 = vmatprep.subr.bf16.mxu0 0
      %405 = vmatpush1.bf16.msra.mxu0 %v390
      %406 = vmatprep.subr.bf16.mxu0 0
      %407 = vmatpush1.bf16.msra.mxu0 0
      %408 = vmatprep.subr.bf16.mxu0 0
      %409 = vmatpush1.bf16.msra.mxu0 0
      %410 = vmatprep.subr.bf16.mxu0 0
      %411 = vmatpush1.bf16.msra.mxu0 0
      %412 = vmatprep.subr.bf16.mxu0 0
      %413 = vmatpush1.bf16.msra.mxu0 0
      %414 = vmatprep.subr.bf16.mxu0 0
      %415 = vmatpush1.bf16.msra.mxu0 0
      %416 = vmatprep.subr.bf16.mxu0 0
      %417 = vmatpush1.bf16.msra.mxu0 0
      %418 = vmatprep.subr.bf16.mxu0 0
      %419 = vmatpush1.bf16.msra.mxu0 0
      %420 = vmatprep.subr.bf16.mxu0 0
      %421 = vmatpush1.bf16.msra.mxu0 0
      %422 = vmatprep.subr.bf16.mxu0 0
      %423 = vmatpush1.bf16.msra.mxu0 0
      %424 = vmatprep.mubr.bf16.mxu0 0
      %425 = vmatmul.mubr.bf16.gmra.mrb[0].mxu0 %v341
      %v426 = vpop.f32.mrb[0].mxu0
      %v427 = vadd.f32 0.0, %v426
      %v428 = vpop.f32.mrb[0].mxu0
      %v429 = vpop.f32.mrb[0].mxu0
      %v430 = vadd.f32 0.0, %v429
      %v431 = vpop.f32.mrb[0].mxu0
      %432 = vmatprep.mubr.bf16.mxu0 0
      %433 = vmatmul.mubr.bf16.gmra.mrb[0].mxu0 %v344
      %v434 = vpop.f32.mrb[0].mxu0
      %v435 = vadd.f32 0.0, %v434
      %v436 = vpop.f32.mrb[0].mxu0
      %v437 = vpop.f32.mrb[0].mxu0
      %v438 = vadd.f32 0.0, %v437
      %v439 = vpop.f32.mrb[0].mxu0
      %440 = vmatprep.mubr.bf16.mxu0 0
      %441 = vmatmul.mubr.bf16.gmra.mrb[0].mxu0 %v347
      %v442 = vpop.f32.mrb[0].mxu0
      %v443 = vadd.f32 0.0, %v442
      %v444 = vpop.f32.mrb[0].mxu0
      %v445 = vpop.f32.mrb[0].mxu0
      %v446 = vadd.f32 0.0, %v445
      %v447 = vpop.f32.mrb[0].mxu0
      %448 = vmatprep.mubr.bf16.mxu0 0
      %449 = vmatmul.mubr.bf16.gmra.mrb[0].mxu0 %v350
      %v450 = vpop.f32.mrb[0].mxu0
      %v451 = vadd.f32 0.0, %v450
      %v452 = vpop.f32.mrb[0].mxu0
      %v453 = vpop.f32.mrb[0].mxu0
      %v454 = vadd.f32 0.0, %v453
      %v455 = vpop.f32.mrb[0].mxu0
      %456 = vmatprep.mubr.bf16.mxu0 0
      %457 = vmatmul.mubr.bf16.gmra.mrb[0].mxu0 %v353
      %v458 = vpop.f32.mrb[0].mxu0
      %v459 = vadd.f32 0.0, %v458
      %v460 = vpop.f32.mrb[0].mxu0
      %v461 = vpop.f32.mrb[0].mxu0
      %v462 = vadd.f32 0.0, %v461
      %v463 = vpop.f32.mrb[0].mxu0
      %464 = vmatprep.mubr.bf16.mxu0 0
      %465 = vmatmul.mubr.bf16.gmra.mrb[0].mxu0 %v356
      %v466 = vpop.f32.mrb[0].mxu0
      %v467 = vadd.f32 0.0, %v466
      %v468 = vpop.f32.mrb[0].mxu0
      %v469 = vpop.f32.mrb[0].mxu0
      %v470 = vadd.f32 0.0, %v469
      %v471 = vpop.f32.mrb[0].mxu0
      %472 = vmatprep.mubr.bf16.mxu0 0
      %473 = vmatmul.mubr.bf16.gmra.mrb[0].mxu0 %v359
      %v474 = vpop.f32.mrb[0].mxu0
      %v475 = vadd.f32 0.0, %v474
      %v476 = vpop.f32.mrb[0].mxu0
      %v477 = vpop.f32.mrb[0].mxu0
      %v478 = vadd.f32 0.0, %v477
      %v479 = vpop.f32.mrb[0].mxu0
      %480 = vmatprep.mubr.bf16.mxu0 0
      %481 = vmatmul.mubr.bf16.gmra.mrb[0].mxu0 %v362
      %v482 = vpop.f32.mrb[0].mxu0
      %v483 = vadd.f32 0.0, %v482
      %v484 = vpop.f32.mrb[0].mxu0
      %v485 = vpop.f32.mrb[0].mxu0
      %v486 = vadd.f32 0.0, %v485
      %v487 = vpop.f32.mrb[0].mxu0
      %488 = vmatprep.mubr.bf16.mxu0 0
      %489 = vmatmul.mubr.bf16.gmra.mrb[0].mxu0 %v365
      %v490 = vpop.f32.mrb[0].mxu0
      %v491 = vadd.f32 0.0, %v490
      %v492 = vpop.f32.mrb[0].mxu0
      %v493 = vpop.f32.mrb[0].mxu0
      %v494 = vadd.f32 0.0, %v493
      %v495 = vpop.f32.mrb[0].mxu0
      %496 = vmatprep.mubr.bf16.mxu0 0
      %497 = vmatmul.mubr.bf16.gmra.mrb[0].mxu0 %v368
      %v498 = vpop.f32.mrb[0].mxu0
      %v499 = vadd.f32 0.0, %v498
      %v500 = vpop.f32.mrb[0].mxu0
      %v501 = vpop.f32.mrb[0].mxu0
      %v502 = vadd.f32 0.0, %v501
      %v503 = vpop.f32.mrb[0].mxu0
      %504 = vmatprep.mubr.bf16.mxu0 0
      %505 = vmatmul.mubr.bf16.gmra.mrb[0].mxu0 %v371
      %v506 = vpop.f32.mrb[0].mxu0
      %v507 = vadd.f32 0.0, %v506
      %v508 = vpop.f32.mrb[0].mxu0
      %v509 = vpop.f32.mrb[0].mxu0
      %v510 = vadd.f32 0.0, %v509
      %v511 = vpop.f32.mrb[0].mxu0
      %512 = vmatprep.mubr.bf16.mxu0 0
      %513 = vmatmul.mubr.bf16.gmra.mrb[0].mxu0 %v374
      %v514 = vpop.f32.mrb[0].mxu0
      %v515 = vadd.f32 0.0, %v514
      %v516 = vpop.f32.mrb[0].mxu0
      %v517 = vpop.f32.mrb[0].mxu0
      %v518 = vadd.f32 0.0, %v517
      %v519 = vpop.f32.mrb[0].mxu0
      %520 = vmatprep.mubr.bf16.mxu0 0
      %521 = vmatmul.mubr.bf16.gmra.mrb[0].mxu0 %v377
      %v522 = vpop.f32.mrb[0].mxu0
      %v523 = vadd.f32 0.0, %v522
      %v524 = vpop.f32.mrb[0].mxu0
      %v525 = vpop.f32.mrb[0].mxu0
      %v526 = vadd.f32 0.0, %v525
      %v527 = vpop.f32.mrb[0].mxu0
      %528 = vmatprep.mubr.bf16.mxu0 0
      %529 = vmatmul.mubr.bf16.gmra.mrb[0].mxu0 %v380
      %v530 = vpop.f32.mrb[0].mxu0
      %v531 = vadd.f32 0.0, %v530
      %v532 = vpop.f32.mrb[0].mxu0
      %v533 = vpop.f32.mrb[0].mxu0
      %v534 = vadd.f32 0.0, %v533
      %v535 = vpop.f32.mrb[0].mxu0
      %536 = vmatprep.mubr.bf16.mxu0 0
      %537 = vmatmul.mubr.bf16.gmra.mrb[0].mxu0 %v383
      %v538 = vpop.f32.mrb[0].mxu0
      %v539 = vadd.f32 0.0, %v538
      %v540 = vpop.f32.mrb[0].mxu0
      %v541 = vpop.f32.mrb[0].mxu0
      %v542 = vadd.f32 0.0, %v541
      %v543 = vpop.f32.mrb[0].mxu0
      %544 = vmatprep.mubr.bf16.mxu0 0
      %545 = vmatmul.mubr.bf16.gmra.mrb[0].mxu0 %v386
      %v546 = vpop.f32.mrb[0].mxu0
      %v547 = vadd.f32 0.0, %v546
      %v548 = vpop.f32.mrb[0].mxu0
      %v549 = vpop.f32.mrb[0].mxu0
      %v550 = vadd.f32 0.0, %v549
      %v551 = vpop.f32.mrb[0].mxu0
      %552 = vdwg.mxu0
      %585 = vrot.lane.b32.xlu0 %v427, 96
      %v586 = vpop.permute.xlu0 %585
      %587 = vrot.lane.b32.xlu0 %v430, 96
      %v588 = vpop.permute.xlu0 %587
      %589 = vrot.lane.b32.xlu0 %v435, 96
      %v590 = vpop.permute.xlu0 %589
      %591 = vrot.lane.b32.xlu0 %v438, 96
      %v592 = vpop.permute.xlu0 %591
      %593 = vrot.lane.b32.xlu0 %v443, 96
      %v594 = vpop.permute.xlu0 %593
      %595 = vrot.lane.b32.xlu0 %v446, 96
      %v596 = vpop.permute.xlu0 %595
      %597 = vrot.lane.b32.xlu0 %v451, 96
      %v598 = vpop.permute.xlu0 %597
      %599 = vrot.lane.b32.xlu0 %v454, 96
      %v600 = vpop.permute.xlu0 %599
      %601 = vrot.lane.b32.xlu0 %v459, 96
      %v602 = vpop.permute.xlu0 %601
      %603 = vrot.lane.b32.xlu0 %v462, 96
      %v604 = vpop.permute.xlu0 %603
      %605 = vrot.lane.b32.xlu0 %v467, 96
      %v606 = vpop.permute.xlu0 %605
      %607 = vrot.lane.b32.xlu0 %v470, 96
      %v608 = vpop.permute.xlu0 %607
      %609 = vrot.lane.b32.xlu0 %v475, 96
      %v610 = vpop.permute.xlu0 %609
      %611 = vrot.lane.b32.xlu0 %v478, 96
      %v612 = vpop.permute.xlu0 %611
      %613 = vrot.lane.b32.xlu0 %v483, 96
      %v614 = vpop.permute.xlu0 %613
      %615 = vrot.lane.b32.xlu0 %v486, 96
      %v616 = vpop.permute.xlu0 %615
      %617 = vrot.lane.b32.xlu0 %v491, 96
      %v618 = vpop.permute.xlu0 %617
      %619 = vrot.lane.b32.xlu0 %v494, 96
      %v620 = vpop.permute.xlu0 %619
      %621 = vrot.lane.b32.xlu0 %v499, 96
      %v622 = vpop.permute.xlu0 %621
      %623 = vrot.lane.b32.xlu0 %v502, 96
      %v624 = vpop.permute.xlu0 %623
      %625 = vrot.lane.b32.xlu0 %v507, 96
      %v626 = vpop.permute.xlu0 %625
      %627 = vrot.lane.b32.xlu0 %v510, 96
      %v628 = vpop.permute.xlu0 %627
      %629 = vrot.lane.b32.xlu0 %v515, 96
      %v630 = vpop.permute.xlu0 %629
      %631 = vrot.lane.b32.xlu0 %v518, 96
      %v632 = vpop.permute.xlu0 %631
      %633 = vrot.lane.b32.xlu0 %v523, 96
      %v634 = vpop.permute.xlu0 %633
      %635 = vrot.lane.b32.xlu0 %v526, 96
      %v636 = vpop.permute.xlu0 %635
      %637 = vrot.lane.b32.xlu0 %v531, 96
      %v638 = vpop.permute.xlu0 %637
      %639 = vrot.lane.b32.xlu0 %v534, 96
      %v640 = vpop.permute.xlu0 %639
      %641 = vrot.lane.b32.xlu0 %v539, 96
      %v642 = vpop.permute.xlu0 %641
      %643 = vrot.lane.b32.xlu0 %v542, 96
      %v644 = vpop.permute.xlu0 %643
      %645 = vrot.lane.b32.xlu0 %v547, 96
      %v646 = vpop.permute.xlu0 %645
      %647 = vrot.lane.b32.xlu0 %v550, 96
      %v648 = vpop.permute.xlu0 %647
      %v681 = vmax.f32 %v427, %v586
      %v682 = vmax.f32 %v430, %v588
      %v683 = vmax.f32 %v435, %v590
      %v684 = vmax.f32 %v438, %v592
      %v685 = vmax.f32 %v443, %v594
      %v686 = vmax.f32 %v446, %v596
      %v687 = vmax.f32 %v451, %v598
      %v688 = vmax.f32 %v454, %v600
      %v689 = vmax.f32 %v459, %v602
      %v690 = vmax.f32 %v462, %v604
      %v691 = vmax.f32 %v467, %v606
      %v692 = vmax.f32 %v470, %v608
      %v693 = vmax.f32 %v475, %v610
      %v694 = vmax.f32 %v478, %v612
      %v695 = vmax.f32 %v483, %v614
      %v696 = vmax.f32 %v486, %v616
      %v697 = vmax.f32 %v491, %v618
      %v698 = vmax.f32 %v494, %v620
      %v699 = vmax.f32 %v499, %v622
      %v700 = vmax.f32 %v502, %v624
      %v701 = vmax.f32 %v507, %v626
      %v702 = vmax.f32 %v510, %v628
      %v703 = vmax.f32 %v515, %v630
      %v704 = vmax.f32 %v518, %v632
      %v705 = vmax.f32 %v523, %v634
      %v706 = vmax.f32 %v526, %v636
      %v707 = vmax.f32 %v531, %v638
      %v708 = vmax.f32 %v534, %v640
      %v709 = vmax.f32 %v539, %v642
      %v710 = vmax.f32 %v542, %v644
      %v711 = vmax.f32 %v547, %v646
      %v712 = vmax.f32 %v550, %v648
      %745 = vrot.lane.b32.xlu0 %v681, 64
      %v746 = vpop.permute.xlu0 %745
      %747 = vrot.lane.b32.xlu0 %v682, 64
      %v748 = vpop.permute.xlu0 %747
      %749 = vrot.lane.b32.xlu0 %v683, 64
      %v750 = vpop.permute.xlu0 %749
      %751 = vrot.lane.b32.xlu0 %v684, 64
      %v752 = vpop.permute.xlu0 %751
      %753 = vrot.lane.b32.xlu0 %v685, 64
      %v754 = vpop.permute.xlu0 %753
      %755 = vrot.lane.b32.xlu0 %v686, 64
      %v756 = vpop.permute.xlu0 %755
      %757 = vrot.lane.b32.xlu0 %v687, 64
      %v758 = vpop.permute.xlu0 %757
      %759 = vrot.lane.b32.xlu0 %v688, 64
      %v760 = vpop.permute.xlu0 %759
      %761 = vrot.lane.b32.xlu0 %v689, 64
      %v762 = vpop.permute.xlu0 %761
      %763 = vrot.lane.b32.xlu0 %v690, 64
      %v764 = vpop.permute.xlu0 %763
      %765 = vrot.lane.b32.xlu0 %v691, 64
      %v766 = vpop.permute.xlu0 %765
      %767 = vrot.lane.b32.xlu0 %v692, 64
      %v768 = vpop.permute.xlu0 %767
      %769 = vrot.lane.b32.xlu0 %v693, 64
      %v770 = vpop.permute.xlu0 %769
      %771 = vrot.lane.b32.xlu0 %v694, 64
      %v772 = vpop.permute.xlu0 %771
      %773 = vrot.lane.b32.xlu0 %v695, 64
      %v774 = vpop.permute.xlu0 %773
      %775 = vrot.lane.b32.xlu0 %v696, 64
      %v776 = vpop.permute.xlu0 %775
      %777 = vrot.lane.b32.xlu0 %v697, 64
      %v778 = vpop.permute.xlu0 %777
      %779 = vrot.lane.b32.xlu0 %v698, 64
      %v780 = vpop.permute.xlu0 %779
      %781 = vrot.lane.b32.xlu0 %v699, 64
      %v782 = vpop.permute.xlu0 %781
      %783 = vrot.lane.b32.xlu0 %v700, 64
      %v784 = vpop.permute.xlu0 %783
      %785 = vrot.lane.b32.xlu0 %v701, 64
      %v786 = vpop.permute.xlu0 %785
      %787 = vrot.lane.b32.xlu0 %v702, 64
      %v788 = vpop.permute.xlu0 %787
      %789 = vrot.lane.b32.xlu0 %v703, 64
      %v790 = vpop.permute.xlu0 %789
      %791 = vrot.lane.b32.xlu0 %v704, 64
      %v792 = vpop.permute.xlu0 %791
      %793 = vrot.lane.b32.xlu0 %v705, 64
      %v794 = vpop.permute.xlu0 %793
      %795 = vrot.lane.b32.xlu0 %v706, 64
      %v796 = vpop.permute.xlu0 %795
      %797 = vrot.lane.b32.xlu0 %v707, 64
      %v798 = vpop.permute.xlu0 %797
      %799 = vrot.lane.b32.xlu0 %v708, 64
      %v800 = vpop.permute.xlu0 %799
      %801 = vrot.lane.b32.xlu0 %v709, 64
      %v802 = vpop.permute.xlu0 %801
      %803 = vrot.lane.b32.xlu0 %v710, 64
      %v804 = vpop.permute.xlu0 %803
      %805 = vrot.lane.b32.xlu0 %v711, 64
      %v806 = vpop.permute.xlu0 %805
      %807 = vrot.lane.b32.xlu0 %v712, 64
      %v808 = vpop.permute.xlu0 %807
      %v841 = vmax.f32 %v681, %v746
      %v842 = vmax.f32 %v682, %v748
      %v843 = vmax.f32 %v683, %v750
      %v844 = vmax.f32 %v684, %v752
      %v845 = vmax.f32 %v685, %v754
      %v846 = vmax.f32 %v686, %v756
      %v847 = vmax.f32 %v687, %v758
      %v848 = vmax.f32 %v688, %v760
      %v849 = vmax.f32 %v689, %v762
      %v850 = vmax.f32 %v690, %v764
      %v851 = vmax.f32 %v691, %v766
      %v852 = vmax.f32 %v692, %v768
      %v853 = vmax.f32 %v693, %v770
      %v854 = vmax.f32 %v694, %v772
      %v855 = vmax.f32 %v695, %v774
      %v856 = vmax.f32 %v696, %v776
      %v857 = vmax.f32 %v697, %v778
      %v858 = vmax.f32 %v698, %v780
      %v859 = vmax.f32 %v699, %v782
      %v860 = vmax.f32 %v700, %v784
      %v861 = vmax.f32 %v701, %v786
      %v862 = vmax.f32 %v702, %v788
      %v863 = vmax.f32 %v703, %v790
      %v864 = vmax.f32 %v704, %v792
      %v865 = vmax.f32 %v705, %v794
      %v866 = vmax.f32 %v706, %v796
      %v867 = vmax.f32 %v707, %v798
      %v868 = vmax.f32 %v708, %v800
      %v869 = vmax.f32 %v709, %v802
      %v870 = vmax.f32 %v710, %v804
      %v871 = vmax.f32 %v711, %v806
      %v872 = vmax.f32 %v712, %v808
      %v873 = vld [vmem:[%s2] sm:$0x1]
      %v875 = vlaneseq
      %v876 = vshrl.u32 %v875, 7
      %v877 = vsub.s32 0, %v876
      %v878 = vrot.slane %v873, %v877
      %v880 = vadd.f32 %v841, %v878
      %v881 = vadd.f32 %v842, %v878
      %v882 = vadd.f32 %v843, %v878
      %v883 = vadd.f32 %v844, %v878
      %v884 = vadd.f32 %v845, %v878
      %v885 = vadd.f32 %v846, %v878
      %v886 = vadd.f32 %v847, %v878
      %v887 = vadd.f32 %v848, %v878
      %v888 = vadd.f32 %v849, %v878
      %v889 = vadd.f32 %v850, %v878
      %v890 = vadd.f32 %v851, %v878
      %v891 = vadd.f32 %v852, %v878
      %v892 = vadd.f32 %v853, %v878
      %v893 = vadd.f32 %v854, %v878
      %v894 = vadd.f32 %v855, %v878
      %v895 = vadd.f32 %v856, %v878
      %v896 = vadd.f32 %v857, %v878
      %v897 = vadd.f32 %v858, %v878
      %v898 = vadd.f32 %v859, %v878
      %v899 = vadd.f32 %v860, %v878
      %v900 = vadd.f32 %v861, %v878
      %v901 = vadd.f32 %v862, %v878
      %v902 = vadd.f32 %v863, %v878
      %v903 = vadd.f32 %v864, %v878
      %v904 = vadd.f32 %v865, %v878
      %v905 = vadd.f32 %v866, %v878
      %v906 = vadd.f32 %v867, %v878
      %v907 = vadd.f32 %v868, %v878
      %v908 = vadd.f32 %v869, %v878
      %v909 = vadd.f32 %v870, %v878
      %v910 = vadd.f32 %v871, %v878
      %v911 = vadd.f32 %v872, %v878
      %v912 = vpack.c.bf16 %v881, %v880
      %v913 = vpack.c.bf16 %v883, %v882
      %v914 = vpack.c.bf16 %v885, %v884
      %v915 = vpack.c.bf16 %v887, %v886
      %v916 = vpack.c.bf16 %v889, %v888
      %v917 = vpack.c.bf16 %v891, %v890
      %v918 = vpack.c.bf16 %v893, %v892
      %v919 = vpack.c.bf16 %v895, %v894
      %v920 = vpack.c.bf16 %v897, %v896
      %v921 = vpack.c.bf16 %v899, %v898
      %v922 = vpack.c.bf16 %v901, %v900
      %v923 = vpack.c.bf16 %v903, %v902
      %v924 = vpack.c.bf16 %v905, %v904
      %v925 = vpack.c.bf16 %v907, %v906
      %v926 = vpack.c.bf16 %v909, %v908
      %v927 = vpack.c.bf16 %v911, %v910
      %v944 = vunpack.c.l.b16 %v912
      %v945 = vunpack.c.h.b16 %v912
      %v946 = vunpack.c.l.b16 %v913
      %v947 = vunpack.c.h.b16 %v913
      %v948 = vunpack.c.l.b16 %v914
      %v949 = vunpack.c.h.b16 %v914
      %v950 = vunpack.c.l.b16 %v915
      %v951 = vunpack.c.h.b16 %v915
      %v952 = vunpack.c.l.b16 %v916
      %v953 = vunpack.c.h.b16 %v916
      %v954 = vunpack.c.l.b16 %v917
      %v955 = vunpack.c.h.b16 %v917
      %v956 = vunpack.c.l.b16 %v918
      %v957 = vunpack.c.h.b16 %v918
      %v958 = vunpack.c.l.b16 %v919
      %v959 = vunpack.c.h.b16 %v919
      %v960 = vunpack.c.l.b16 %v920
      %v961 = vunpack.c.h.b16 %v920
      %v962 = vunpack.c.l.b16 %v921
      %v963 = vunpack.c.h.b16 %v921
      %v964 = vunpack.c.l.b16 %v922
      %v965 = vunpack.c.h.b16 %v922
      %v966 = vunpack.c.l.b16 %v923
      %v967 = vunpack.c.h.b16 %v923
      %v968 = vunpack.c.l.b16 %v924
      %v969 = vunpack.c.h.b16 %v924
      %v970 = vunpack.c.l.b16 %v925
      %v971 = vunpack.c.h.b16 %v925
      %v972 = vunpack.c.l.b16 %v926
      %v973 = vunpack.c.h.b16 %v926
      %v974 = vunpack.c.l.b16 %v927
      %v975 = vunpack.c.h.b16 %v927
      %v976 = vpack.c.b16 %v944, %v944
      %v977 = vpack.c.b16 %v945, %v945
      %v978 = vpack.c.b16 %v946, %v946
      %v979 = vpack.c.b16 %v947, %v947
      %v980 = vpack.c.b16 %v948, %v948
      %v981 = vpack.c.b16 %v949, %v949
      %v982 = vpack.c.b16 %v950, %v950
      %v983 = vpack.c.b16 %v951, %v951
      %v984 = vpack.c.b16 %v952, %v952
      %v985 = vpack.c.b16 %v953, %v953
      %v986 = vpack.c.b16 %v954, %v954
      %v987 = vpack.c.b16 %v955, %v955
      %v988 = vpack.c.b16 %v956, %v956
      %v989 = vpack.c.b16 %v957, %v957
      %v990 = vpack.c.b16 %v958, %v958
      %v991 = vpack.c.b16 %v959, %v959
      %v992 = vpack.c.b16 %v960, %v960
      %v993 = vpack.c.b16 %v961, %v961
      %v994 = vpack.c.b16 %v962, %v962
      %v995 = vpack.c.b16 %v963, %v963
      %v996 = vpack.c.b16 %v964, %v964
      %v997 = vpack.c.b16 %v965, %v965
      %v998 = vpack.c.b16 %v966, %v966
      %v999 = vpack.c.b16 %v967, %v967
      %v1000 = vpack.c.b16 %v968, %v968
      %v1001 = vpack.c.b16 %v969, %v969
      %v1002 = vpack.c.b16 %v970, %v970
      %v1003 = vpack.c.b16 %v971, %v971
      %v1004 = vpack.c.b16 %v972, %v972
      %v1005 = vpack.c.b16 %v973, %v973
      %v1006 = vpack.c.b16 %v974, %v974
      %v1007 = vpack.c.b16 %v975, %v975
      %vm1040 = vcmask 257024
      %1041 = vst.msk [vmem:[%s170] sm:$0xf] %vm1040, %v976
      %1042 = vst.msk [vmem:[%s170 + $0x4] sm:$0xf] %vm1040, %v977
      %1043 = vst.msk [vmem:[%s170 + $0x8] sm:$0xf] %vm1040, %v978
      %1044 = vst.msk [vmem:[%s170 + $0xc] sm:$0xf] %vm1040, %v979
      %1045 = vst.msk [vmem:[%s170 + $0x10] sm:$0xf] %vm1040, %v980
      %1046 = vst.msk [vmem:[%s170 + $0x14] sm:$0xf] %vm1040, %v981
      %1047 = vst.msk [vmem:[%s170 + $0x18] sm:$0xf] %vm1040, %v982
      %1048 = vst.msk [vmem:[%s170 + $0x1c] sm:$0xf] %vm1040, %v983
      %1049 = vst.msk [vmem:[%s170 + $0x20] sm:$0xf] %vm1040, %v984
      %1050 = vst.msk [vmem:[%s170 + $0x24] sm:$0xf] %vm1040, %v985
      %1051 = vst.msk [vmem:[%s170 + $0x28] sm:$0xf] %vm1040, %v986
      %1052 = vst.msk [vmem:[%s170 + $0x2c] sm:$0xf] %vm1040, %v987
      %1053 = vst.msk [vmem:[%s170 + $0x30] sm:$0xf] %vm1040, %v988
      %1054 = vst.msk [vmem:[%s170 + $0x34] sm:$0xf] %vm1040, %v989
      %1055 = vst.msk [vmem:[%s170 + $0x38] sm:$0xf] %vm1040, %v990
      %1056 = vst.msk [vmem:[%s170 + $0x3c] sm:$0xf] %vm1040, %v991
      %1057 = vst.msk [vmem:[%s170 + $0x40] sm:$0xf] %vm1040, %v992
      %1058 = vst.msk [vmem:[%s170 + $0x44] sm:$0xf] %vm1040, %v993
      %1059 = vst.msk [vmem:[%s170 + $0x48] sm:$0xf] %vm1040, %v994
      %1060 = vst.msk [vmem:[%s170 + $0x4c] sm:$0xf] %vm1040, %v995
      %1061 = vst.msk [vmem:[%s170 + $0x50] sm:$0xf] %vm1040, %v996
      %1062 = vst.msk [vmem:[%s170 + $0x54] sm:$0xf] %vm1040, %v997
      %1063 = vst.msk [vmem:[%s170 + $0x58] sm:$0xf] %vm1040, %v998
      %1064 = vst.msk [vmem:[%s170 + $0x5c] sm:$0xf] %vm1040, %v999
      %1065 = vst.msk [vmem:[%s170 + $0x60] sm:$0xf] %vm1040, %v1000
      %1066 = vst.msk [vmem:[%s170 + $0x64] sm:$0xf] %vm1040, %v1001
      %1067 = vst.msk [vmem:[%s170 + $0x68] sm:$0xf] %vm1040, %v1002
      %1068 = vst.msk [vmem:[%s170 + $0x6c] sm:$0xf] %vm1040, %v1003
      %1069 = vst.msk [vmem:[%s170 + $0x70] sm:$0xf] %vm1040, %v1004
      %1070 = vst.msk [vmem:[%s170 + $0x74] sm:$0xf] %vm1040, %v1005
      %1071 = vst.msk [vmem:[%s170 + $0x78] sm:$0xf] %vm1040, %v1006
      %1072 = vst.msk [vmem:[%s170 + $0x7c] sm:$0xf] %vm1040, %v1007
      %p1073 = scmp.lt.s32.totalorder %s14, 1
      %s1074 = scalar_select %p1073, %s14, 1
      %s1075 = smul.addr %s1074, 32
      %s1076 = smul.addr %s1075, 4
      %s1077 = scalar_lea.vmem %s3, %s1076
      // Predicated region
      $region33: #{forward.4} parent=31 // pred_check
        %p1078 = pneg %p100
      $region34: #{forward.4} parent=31 // pred_check_branch
        %1080 = sbr.rel (%p1078) target = $region36
      $region35: #{forward.4} parent=31 // pred_region
        _
      $region36: #{forward.4} parent=31 // pred_fallthru
        _
    $region32: #{forward.4} parent=5 // pred_fallthru
      _
    %p1081 = scmp.le.s32.totalorder 2, %s9
    // Predicated region
    $region37: #{forward.4} parent=5 // pred_check
      %p1082 = pneg %p1081
    $region38: #{forward.4} parent=5 // pred_check_branch
      %1084 = sbr.rel (%p1082) target = $region40
    $region39: #{forward.4} parent=5 // pred_region
      %s1085 = ssub.s32 %s9, 2
      // Predicated region
      $region41: #{forward.4} parent=39 // pred_check
        %p1086 = pneg %p106
      $region42: #{forward.4} parent=39 // pred_check_branch
        %1088 = sbr.rel (%p1086) target = $region44
      $region43: #{forward.4} parent=39 // pred_region
        %p1089 = scmp.lt.s32.totalorder %s15, 1
        %s1090 = scalar_select %p1089, %s15, 1
        %s1091 = smul.addr %s1090, 32
        %s1092 = smul.addr %s1091, 4
        %s1093 = scalar_lea.vmem %s3, %s1092
      $region44: #{forward.4} parent=39 // pred_fallthru
        _
    $region40: #{forward.4} parent=5 // pred_fallthru
      _
  $region6: #{forward.4} parent=0 // loop_footer
    %s13 = sadd.s32 1, %s9
  $region7: #{forward.4} parent=0 // loop_footer_branch
    %8 = sbr.rel target = $region3
  $region8: #{forward.4} parent=0 // loop_exit
    _

// kernel: forward.5
$region0: #{forward.5}
  #allocation0 [shape = 'u32[]', space=smem, size = 0x4, offset = 0x4, fixed_abs, tag = 'smem constant byte address 0x4 - core index']
  #allocation1 [shape = 'u32[144,128]{1,0:T(1,128)}', space=vmem, size = 0x12000, scoped, tag = 'internal scratch']
  %s0 = inlined_call_operand.vmem [shape: bf16[2,64,1152], index: 0, kind: input, shape index: {}]
  %s1 = inlined_call_operand.vmem [shape: bf16[1152,128], index: 1, kind: input, shape index: {}]
  %s2 = inlined_call_operand.vmem [shape: f32[1,32], index: 2, kind: input, shape index: {}]
  %s3 = inlined_call_operand.vmem [shape: bf16[2,64,32], index: 3, kind: output, shape index: {}]
  %s4 = sld [smem:[#allocation0]]
  $region45: #{forward.5} parent=0
    _
  %s6 = ssub.s32 1, %s4
  %s7 = scalar_select 0, %s6, %s4
  loop: start=0, step=1, limit=4
  $region2: #{forward.5} parent=0 // loop_pre_header
    _
  $region3: #{forward.5} parent=0 // loop_header
    %s9 = sphi 0, %s13
    %p10 = scmp.ge.s32.totalorder %s9, 4
    %s19 = sphi 0, %s21
    %s22 = sphi 0, %s19
    %s23 = sphi 0, %s22
    %s39 = sphi 0, %s23
    %s43 = sphi 0, %s43
    %s45 = sphi 0, %s43
    %s46 = sphi 0, %s45
    %s60 = sphi 0, %s46
    %s64 = sphi 0, %s64
    %s66 = sphi 0, %s64
    %s67 = sphi 0, %s66
    %s81 = sphi 0, %s67
    %s87 = sphi 0, %s89
    %s90 = sphi 0, %s87
    %s91 = sphi 0, %s90
    %s107 = sphi 0, %s91
  $region4: #{forward.5} parent=0 // loop_header_branch
    %12 = sbr.rel (%p10) target = $region8
  $region5: #{forward.5} parent=0 // loop_body
    %s14 = ssub.s32 %s9, 1
    %s15 = ssub.s32 %s9, 2
    %s16 = sadd.s32 %s9, 1
    %s17 = ssub.s32 %s9, %s16
    %p18 = scmp.eq.s32.totalorder %s17, 0
    %s20 = sadd.s32 %s19, 1
    %s21 = scalar_select %p18, %s19, %s20
    %p24 = pneg %p18
    %p25 = scmp.eq.s32.totalorder %s9, 1
    %p26 = por %p24, %p25
    %p27 = scmp.ne.s32.totalorder %s19, %s22
    %p28 = scmp.eq.s32.totalorder %s9, 0
    %p29 = por %p27, %p28
    %p30 = scmp.ne.s32.totalorder %s19, %s22
    %p31 = scmp.eq.s32.totalorder %s14, 1
    %p32 = por %p30, %p31
    %p33 = scmp.ne.s32.totalorder %s22, %s23
    %p34 = scmp.eq.s32.totalorder %s14, 0
    %p35 = por %p33, %p34
    %p36 = scmp.ne.s32.totalorder %s22, %s23
    %p37 = scmp.eq.s32.totalorder %s15, 1
    %p38 = por %p36, %p37
    %p40 = scmp.ne.s32.totalorder %s23, %s39
    %p41 = scmp.eq.s32.totalorder %s15, 0
    %p42 = por %p40, %p41
    %s44 = sadd.s32 %s43, 1
    %p47 = scmp.eq.s32.totalorder %s9, 1
    %p48 = scmp.ne.s32.totalorder %s43, %s45
    %p49 = scmp.eq.s32.totalorder %s9, 0
    %p50 = por %p48, %p49
    %p51 = scmp.ne.s32.totalorder %s43, %s45
    %p52 = scmp.eq.s32.totalorder %s14, 1
    %p53 = por %p51, %p52
    %p54 = scmp.ne.s32.totalorder %s45, %s46
    %p55 = scmp.eq.s32.totalorder %s14, 0
    %p56 = por %p54, %p55
    %p57 = scmp.ne.s32.totalorder %s45, %s46
    %p58 = scmp.eq.s32.totalorder %s15, 1
    %p59 = por %p57, %p58
    %p61 = scmp.ne.s32.totalorder %s46, %s60
    %p62 = scmp.eq.s32.totalorder %s15, 0
    %p63 = por %p61, %p62
    %s65 = sadd.s32 %s64, 1
    %p68 = scmp.eq.s32.totalorder %s9, 1
    %p69 = scmp.ne.s32.totalorder %s64, %s66
    %p70 = scmp.eq.s32.totalorder %s9, 0
    %p71 = por %p69, %p70
    %p72 = scmp.ne.s32.totalorder %s64, %s66
    %p73 = scmp.eq.s32.totalorder %s14, 1
    %p74 = por %p72, %p73
    %p75 = scmp.ne.s32.totalorder %s66, %s67
    %p76 = scmp.eq.s32.totalorder %s14, 0
    %p77 = por %p75, %p76
    %p78 = scmp.ne.s32.totalorder %s66, %s67
    %p79 = scmp.eq.s32.totalorder %s15, 1
    %p80 = por %p78, %p79
    %p82 = scmp.ne.s32.totalorder %s67, %s81
    %p83 = scmp.eq.s32.totalorder %s15, 0
    %p84 = por %p82, %p83
    %s85 = ssub.s32 %s9, %s16
    %p86 = scmp.eq.s32.totalorder %s85, 0
    %s88 = sadd.s32 %s87, 1
    %s89 = scalar_select %p86, %s87, %s88
    %p92 = pneg %p86
    %p93 = scmp.eq.s32.totalorder %s9, 1
    %p94 = por %p92, %p93
    %p95 = scmp.ne.s32.totalorder %s87, %s90
    %p96 = scmp.eq.s32.totalorder %s9, 0
    %p97 = por %p95, %p96
    %p98 = scmp.ne.s32.totalorder %s87, %s90
    %p99 = scmp.eq.s32.totalorder %s14, 1
    %p100 = por %p98, %p99
    %p101 = scmp.ne.s32.totalorder %s90, %s91
    %p102 = scmp.eq.s32.totalorder %s14, 0
    %p103 = por %p101, %p102
    %p104 = scmp.ne.s32.totalorder %s90, %s91
    %p105 = scmp.eq.s32.totalorder %s15, 1
    %p106 = por %p104, %p105
    %p108 = scmp.ne.s32.totalorder %s91, %s107
    %p109 = scmp.eq.s32.totalorder %s15, 0
    %p110 = por %p108, %p109
    %p111 = scmp.le.s32.totalorder 1, %s9
    %p112 = scmp.lt.s32.totalorder %s9, 3
    %p113 = pnand %p111, %p112
    %p114 = pneg %p113
    // Predicated region
    $region9: #{forward.5} parent=5 // pred_check
      _
    $region10: #{forward.5} parent=5 // pred_check_branch
      %116 = sbr.rel (%p113) target = $region12
    $region11: #{forward.5} parent=5 // pred_region
      %s117 = ssub.s32 %s9, 1
      // Predicated region
      $region13: #{forward.5} parent=11 // pred_check
        %p118 = pneg %p56
      $region14: #{forward.5} parent=11 // pred_check_branch
        %120 = sbr.rel (%p118) target = $region16
      $region15: #{forward.5} parent=11 // pred_region
        _
      $region16: #{forward.5} parent=11 // pred_fallthru
        _
      // Predicated region
      $region17: #{forward.5} parent=11 // pred_check
        %p121 = pneg %p77
      $region18: #{forward.5} parent=11 // pred_check_branch
        %123 = sbr.rel (%p121) target = $region20
      $region19: #{forward.5} parent=11 // pred_region
        _
      $region20: #{forward.5} parent=11 // pred_fallthru
        _
    $region12: #{forward.5} parent=5 // pred_fallthru
      _
    %p124 = scmp.lt.s32.totalorder %s9, 2
    // Predicated region
    $region21: #{forward.5} parent=5 // pred_check
      %p125 = pneg %p124
    $region22: #{forward.5} parent=5 // pred_check_branch
      %127 = sbr.rel (%p125) target = $region24
    $region23: #{forward.5} parent=5 // pred_region
      // Predicated region
      $region25: #{forward.5} parent=23 // pred_check
        %p128 = pneg %p29
      $region26: #{forward.5} parent=23 // pred_check_branch
        %130 = sbr.rel (%p128) target = $region28
      $region27: #{forward.5} parent=23 // pred_region
        %p131 = scmp.lt.s32.totalorder %s9, 1
        %s132 = scalar_select %p131, %s9, 1
        %s133 = smul.addr %s132, 72
        %s134 = smul.addr %s133, 4
        %s135 = scalar_lea.vmem %s0, %s134
      $region28: #{forward.5} parent=23 // pred_fallthru
        _
    $region24: #{forward.5} parent=5 // pred_fallthru
      _
    %p136 = scmp.le.s32.totalorder 1, %s9
    %p137 = scmp.lt.s32.totalorder %s9, 3
    %p138 = pnand %p136, %p137
    %p139 = pneg %p138
    // Predicated region
    $region29: #{forward.5} parent=5 // pred_check
      _
    $region30: #{forward.5} parent=5 // pred_check_branch
      %141 = sbr.rel (%p138) target = $region32
    $region31: #{forward.5} parent=5 // pred_region
      %s142 = ssub.s32 %s9, 1
      %p143 = scmp.lt.s32.totalorder %s14, 1
      %s144 = scalar_select %p143, %s14, 1
      %s145 = smul.addr %s144, 72
      %s146 = smul.addr %s145, 4
      %s147 = scalar_lea.vmem %s0, %s146
      %p148 = pneg %p35
      %p149 = pneg %p32
      %p150 = pneg %p56
      %p151 = pneg %p53
      %p152 = pneg %p77
      %p153 = pneg %p74
      %p154 = pneg %p103
      %p155 = pneg %p100
      %p156 = scmp.lt.s32.totalorder %s14, 1
      %s157 = scalar_select %p156, %s14, 1
      %s158 = smul.addr %s157, 8
      %s159 = smul.addr %s158, 4
      %s160 = scalar_lea.vmem %s3, %s159
      %p161 = scmp.lt.s32.totalorder %s14, 1
      %s162 = scalar_select %p161, %s14, 1
      %s163 = smul.addr %s162, 72
      %s164 = smul.addr %s163, 4
      %s165 = scalar_lea.vmem %s0, %s164
      %p166 = scmp.lt.s32.totalorder %s14, 1
      %s167 = scalar_select %p166, %s14, 1
      %s168 = smul.addr %s167, 8
      %s169 = smul.addr %s168, 4
      %s170 = scalar_lea.vmem %s3, %s169
      %v172 = vld [vmem:[%s165] sm:$0xff]
      %v173 = vld [vmem:[%s165 + $0x8] sm:$0xff]
      %v174 = vld [vmem:[%s165 + $0x10] sm:$0xff]
      %v175 = vld [vmem:[%s165 + $0x18] sm:$0xff]
      %v176 = vld [vmem:[%s165 + $0x20] sm:$0xf]
      %v177 = vld [vmem:[%s165 + $0x24] sm:$0xff]
      %v178 = vld [vmem:[%s165 + $0x2c] sm:$0xff]
      %v179 = vld [vmem:[%s165 + $0x34] sm:$0xff]
      %v180 = vld [vmem:[%s165 + $0x3c] sm:$0xff]
      %v181 = vld [vmem:[%s165 + $0x44] sm:$0xf]
      %v182 = vld [vmem:[%s165 + $0x48] sm:$0xff]
      %v183 = vld [vmem:[%s165 + $0x50] sm:$0xff]
      %v184 = vld [vmem:[%s165 + $0x58] sm:$0xff]
      %v185 = vld [vmem:[%s165 + $0x60] sm:$0xff]
      %v186 = vld [vmem:[%s165 + $0x68] sm:$0xf]
      %v187 = vld [vmem:[%s165 + $0x6c] sm:$0xff]
      %v188 = vld [vmem:[%s165 + $0x74] sm:$0xff]
      %v189 = vld [vmem:[%s165 + $0x7c] sm:$0xff]
      %v190 = vld [vmem:[%s165 + $0x84] sm:$0xff]
      %v191 = vld [vmem:[%s165 + $0x8c] sm:$0xf]
      %v192 = vld [vmem:[%s165 + $0x90] sm:$0xff]
      %v193 = vld [vmem:[%s165 + $0x98] sm:$0xff]
      %v194 = vld [vmem:[%s165 + $0xa0] sm:$0xff]
      %v195 = vld [vmem:[%s165 + $0xa8] sm:$0xff]
      %v196 = vld [vmem:[%s165 + $0xb0] sm:$0xf]
      %v197 = vld [vmem:[%s165 + $0xb4] sm:$0xff]
      %v198 = vld [vmem:[%s165 + $0xbc] sm:$0xff]
      %v199 = vld [vmem:[%s165 + $0xc4] sm:$0xff]
      %v200 = vld [vmem:[%s165 + $0xcc] sm:$0xff]
      %v201 = vld [vmem:[%s165 + $0xd4] sm:$0xf]
      %v202 = vld [vmem:[%s165 + $0xd8] sm:$0xff]
      %v203 = vld [vmem:[%s165 + $0xe0] sm:$0xff]
      %v204 = vld [vmem:[%s165 + $0xe8] sm:$0xff]
      %v205 = vld [vmem:[%s165 + $0xf0] sm:$0xff]
      %v206 = vld [vmem:[%s165 + $0xf8] sm:$0xf]
      %v207 = vld [vmem:[%s165 + $0xfc] sm:$0xff]
      %v208 = vld [vmem:[%s165 + $0x104] sm:$0xff]
      %v209 = vld [vmem:[%s165 + $0x10c] sm:$0xff]
      %v210 = vld [vmem:[%s165 + $0x114] sm:$0xff]
      %v211 = vld [vmem:[%s165 + $0x11c] sm:$0xf]
      %v212 = vld [vmem:[%s1] sm:$0xf]
      %v213 = vld [vmem:[%s1 + $0x4] sm:$0xf]
      %v214 = vld [vmem:[%s1 + $0x8] sm:$0xf]
      %v215 = vld [vmem:[%s1 + $0xc] sm:$0xf]
      %v216 = vld [vmem:[%s1 + $0x10] sm:$0xf]
      %v217 = vld [vmem:[%s1 + $0x14] sm:$0xf]
      %v218 = vld [vmem:[%s1 + $0x18] sm:$0xf]
      %v219 = vld [vmem:[%s1 + $0x1c] sm:$0xf]
      %v220 = vld [vmem:[%s1 + $0x20] sm:$0xf]
      %v221 = vld [vmem:[%s1 + $0x24] sm:$0xf]
      %v222 = vld [vmem:[%s1 + $0x28] sm:$0xf]
      %v223 = vld [vmem:[%s1 + $0x2c] sm:$0xf]
      %v224 = vld [vmem:[%s1 + $0x30] sm:$0xf]
      %v225 = vld [vmem:[%s1 + $0x34] sm:$0xf]
      %v226 = vld [vmem:[%s1 + $0x38] sm:$0xf]
      %v227 = vld [vmem:[%s1 + $0x3c] sm:$0xf]
      %v228 = vld [vmem:[%s1 + $0x40] sm:$0xf]
      %v229 = vld [vmem:[%s1 + $0x44] sm:$0xf]
      %v230 = vld [vmem:[%s1 + $0x48] sm:$0xf]
      %v231 = vld [vmem:[%s1 + $0x4c] sm:$0xf]
      %v232 = vld [vmem:[%s1 + $0x50] sm:$0xf]
      %v233 = vld [vmem:[%s1 + $0x54] sm:$0xf]
      %v234 = vld [vmem:[%s1 + $0x58] sm:$0xf]
      %v235 = vld [vmem:[%s1 + $0x5c] sm:$0xf]
      %v236 = vld [vmem:[%s1 + $0x60] sm:$0xf]
      %v237 = vld [vmem:[%s1 + $0x64] sm:$0xf]
      %v238 = vld [vmem:[%s1 + $0x68] sm:$0xf]
      %v239 = vld [vmem:[%s1 + $0x6c] sm:$0xf]
      %v240 = vld [vmem:[%s1 + $0x70] sm:$0xf]
      %v241 = vld [vmem:[%s1 + $0x74] sm:$0xf]
      %v242 = vld [vmem:[%s1 + $0x78] sm:$0xf]
      %v243 = vld [vmem:[%s1 + $0x7c] sm:$0xf]
      %v244 = vld [vmem:[%s1 + $0x80] sm:$0xf]
      %v245 = vld [vmem:[%s1 + $0x84] sm:$0xf]
      %v246 = vld [vmem:[%s1 + $0x88] sm:$0xf]
      %v247 = vld [vmem:[%s1 + $0x8c] sm:$0xf]
      %v248 = vld [vmem:[%s1 + $0x90] sm:$0xf]
      %v249 = vld [vmem:[%s1 + $0x94] sm:$0xf]
      %v250 = vld [vmem:[%s1 + $0x98] sm:$0xf]
      %v251 = vld [vmem:[%s1 + $0x9c] sm:$0xf]
      %v252 = vld [vmem:[%s1 + $0xa0] sm:$0xf]
      %v253 = vld [vmem:[%s1 + $0xa4] sm:$0xf]
      %v254 = vld [vmem:[%s1 + $0xa8] sm:$0xf]
      %v255 = vld [vmem:[%s1 + $0xac] sm:$0xf]
      %v256 = vld [vmem:[%s1 + $0xb0] sm:$0xf]
      %v257 = vld [vmem:[%s1 + $0xb4] sm:$0xf]
      %v258 = vld [vmem:[%s1 + $0xb8] sm:$0xf]
      %v259 = vld [vmem:[%s1 + $0xbc] sm:$0xf]
      %v260 = vld [vmem:[%s1 + $0xc0] sm:$0xf]
      %v261 = vld [vmem:[%s1 + $0xc4] sm:$0xf]
      %v262 = vld [vmem:[%s1 + $0xc8] sm:$0xf]
      %v263 = vld [vmem:[%s1 + $0xcc] sm:$0xf]
      %v264 = vld [vmem:[%s1 + $0xd0] sm:$0xf]
      %v265 = vld [vmem:[%s1 + $0xd4] sm:$0xf]
      %v266 = vld [vmem:[%s1 + $0xd8] sm:$0xf]
      %v267 = vld [vmem:[%s1 + $0xdc] sm:$0xf]
      %v268 = vld [vmem:[%s1 + $0xe0] sm:$0xf]
      %v269 = vld [vmem:[%s1 + $0xe4] sm:$0xf]
      %v270 = vld [vmem:[%s1 + $0xe8] sm:$0xf]
      %v271 = vld [vmem:[%s1 + $0xec] sm:$0xf]
      %v272 = vld [vmem:[%s1 + $0xf0] sm:$0xf]
      %v273 = vld [vmem:[%s1 + $0xf4] sm:$0xf]
      %v274 = vld [vmem:[%s1 + $0xf8] sm:$0xf]
      %v275 = vld [vmem:[%s1 + $0xfc] sm:$0xf]
      %v276 = vld [vmem:[%s1 + $0x100] sm:$0xf]
      %v277 = vld [vmem:[%s1 + $0x104] sm:$0xf]
      %v278 = vld [vmem:[%s1 + $0x108] sm:$0xf]
      %v279 = vld [vmem:[%s1 + $0x10c] sm:$0xf]
      %v280 = vld [vmem:[%s1 + $0x110] sm:$0xf]
      %v281 = vld [vmem:[%s1 + $0x114] sm:$0xf]
      %v282 = vld [vmem:[%s1 + $0x118] sm:$0xf]
      %v283 = vld [vmem:[%s1 + $0x11c] sm:$0xf]
      %v284 = vld [vmem:[%s1 + $0x120] sm:$0xf]
      %v285 = vld [vmem:[%s1 + $0x124] sm:$0xf]
      %v286 = vld [vmem:[%s1 + $0x128] sm:$0xf]
      %v287 = vld [vmem:[%s1 + $0x12c] sm:$0xf]
      %v288 = vld [vmem:[%s1 + $0x130] sm:$0xf]
      %v289 = vld [vmem:[%s1 + $0x134] sm:$0xf]
      %v290 = vld [vmem:[%s1 + $0x138] sm:$0xf]
      %v291 = vld [vmem:[%s1 + $0x13c] sm:$0xf]
      %v292 = vld [vmem:[%s1 + $0x140] sm:$0xf]
      %v293 = vld [vmem:[%s1 + $0x144] sm:$0xf]
      %v294 = vld [vmem:[%s1 + $0x148] sm:$0xf]
      %v295 = vld [vmem:[%s1 + $0x14c] sm:$0xf]
      %v296 = vld [vmem:[%s1 + $0x150] sm:$0xf]
      %v297 = vld [vmem:[%s1 + $0x154] sm:$0xf]
      %v298 = vld [vmem:[%s1 + $0x158] sm:$0xf]
      %v299 = vld [vmem:[%s1 + $0x15c] sm:$0xf]
      %v300 = vld [vmem:[%s1 + $0x160] sm:$0xf]
      %v301 = vld [vmem:[%s1 + $0x164] sm:$0xf]
      %v302 = vld [vmem:[%s1 + $0x168] sm:$0xf]
      %v303 = vld [vmem:[%s1 + $0x16c] sm:$0xf]
      %v304 = vld [vmem:[%s1 + $0x170] sm:$0xf]
      %v305 = vld [vmem:[%s1 + $0x174] sm:$0xf]
      %v306 = vld [vmem:[%s1 + $0x178] sm:$0xf]
      %v307 = vld [vmem:[%s1 + $0x17c] sm:$0xf]
      %v308 = vld [vmem:[%s1 + $0x180] sm:$0xf]
      %v309 = vld [vmem:[%s1 + $0x184] sm:$0xf]
      %v310 = vld [vmem:[%s1 + $0x188] sm:$0xf]
      %v311 = vld [vmem:[%s1 + $0x18c] sm:$0xf]
      %v312 = vld [vmem:[%s1 + $0x190] sm:$0xf]
      %v313 = vld [vmem:[%s1 + $0x194] sm:$0xf]
      %v314 = vld [vmem:[%s1 + $0x198] sm:$0xf]
      %v315 = vld [vmem:[%s1 + $0x19c] sm:$0xf]
      %v316 = vld [vmem:[%s1 + $0x1a0] sm:$0xf]
      %v317 = vld [vmem:[%s1 + $0x1a4] sm:$0xf]
      %v318 = vld [vmem:[%s1 + $0x1a8] sm:$0xf]
      %v319 = vld [vmem:[%s1 + $0x1ac] sm:$0xf]
      %v320 = vld [vmem:[%s1 + $0x1b0] sm:$0xf]
      %v321 = vld [vmem:[%s1 + $0x1b4] sm:$0xf]
      %v322 = vld [vmem:[%s1 + $0x1b8] sm:$0xf]
      %v323 = vld [vmem:[%s1 + $0x1bc] sm:$0xf]
      %v324 = vld [vmem:[%s1 + $0x1c0] sm:$0xf]
      %v325 = vld [vmem:[%s1 + $0x1c4] sm:$0xf]
      %v326 = vld [vmem:[%s1 + $0x1c8] sm:$0xf]
      %v327 = vld [vmem:[%s1 + $0x1cc] sm:$0xf]
      %v328 = vld [vmem:[%s1 + $0x1d0] sm:$0xf]
      %v329 = vld [vmem:[%s1 + $0x1d4] sm:$0xf]
      %v330 = vld [vmem:[%s1 + $0x1d8] sm:$0xf]
      %v331 = vld [vmem:[%s1 + $0x1dc] sm:$0xf]
      %v332 = vld [vmem:[%s1 + $0x1e0] sm:$0xf]
      %v333 = vld [vmem:[%s1 + $0x1e4] sm:$0xf]
      %v334 = vld [vmem:[%s1 + $0x1e8] sm:$0xf]
      %v335 = vld [vmem:[%s1 + $0x1ec] sm:$0xf]
      %v336 = vld [vmem:[%s1 + $0x1f0] sm:$0xf]
      %v337 = vld [vmem:[%s1 + $0x1f4] sm:$0xf]
      %v338 = vld [vmem:[%s1 + $0x1f8] sm:$0xf]
      %v339 = vld [vmem:[%s1 + $0x1fc] sm:$0xf]
      %v340 = vld [vmem:[%s1 + $0x200] sm:$0xf]
      %v341 = vld [vmem:[%s1 + $0x204] sm:$0xf]
      %v342 = vld [vmem:[%s1 + $0x208] sm:$0xf]
      %v343 = vld [vmem:[%s1 + $0x20c] sm:$0xf]
      %v344 = vld [vmem:[%s1 + $0x210] sm:$0xf]
      %v345 = vld [vmem:[%s1 + $0x214] sm:$0xf]
      %v346 = vld [vmem:[%s1 + $0x218] sm:$0xf]
      %v347 = vld [vmem:[%s1 + $0x21c] sm:$0xf]
      %v348 = vld [vmem:[%s1 + $0x220] sm:$0xf]
      %v349 = vld [vmem:[%s1 + $0x224] sm:$0xf]
      %v350 = vld [vmem:[%s1 + $0x228] sm:$0xf]
      %v351 = vld [vmem:[%s1 + $0x22c] sm:$0xf]
      %v352 = vld [vmem:[%s1 + $0x230] sm:$0xf]
      %v353 = vld [vmem:[%s1 + $0x234] sm:$0xf]
      %v354 = vld [vmem:[%s1 + $0x238] sm:$0xf]
      %v355 = vld [vmem:[%s1 + $0x23c] sm:$0xf]
      %v396 = vunpack.c.l.b16 %v172
      %v397 = vunpack.c.h.b16 %v172
      %v398 = vunpack.c.l.b16 %v173
      %v399 = vunpack.c.h.b16 %v173
      %v400 = vunpack.c.l.b16 %v174
      %v401 = vunpack.c.h.b16 %v174
      %v402 = vunpack.c.l.b16 %v175
      %v403 = vunpack.c.h.b16 %v175
      %v404 = vunpack.c.l.b16 %v176
      %v405 = vunpack.c.l.b16 %v177
      %v406 = vunpack.c.h.b16 %v177
      %v407 = vunpack.c.l.b16 %v178
      %v408 = vunpack.c.h.b16 %v178
      %v409 = vunpack.c.l.b16 %v179
      %v410 = vunpack.c.h.b16 %v179
      %v411 = vunpack.c.l.b16 %v180
      %v412 = vunpack.c.h.b16 %v180
      %v413 = vunpack.c.l.b16 %v181
      %v414 = vunpack.c.l.b16 %v182
      %v415 = vunpack.c.h.b16 %v182
      %v416 = vunpack.c.l.b16 %v183
      %v417 = vunpack.c.h.b16 %v183
      %v418 = vunpack.c.l.b16 %v184
      %v419 = vunpack.c.h.b16 %v184
      %v420 = vunpack.c.l.b16 %v185
      %v421 = vunpack.c.h.b16 %v185
      %v422 = vunpack.c.l.b16 %v186
      %v423 = vunpack.c.l.b16 %v187
      %v424 = vunpack.c.h.b16 %v187
      %v425 = vunpack.c.l.b16 %v188
      %v426 = vunpack.c.h.b16 %v188
      %v427 = vunpack.c.l.b16 %v189
      %v428 = vunpack.c.h.b16 %v189
      %v429 = vunpack.c.l.b16 %v190
      %v430 = vunpack.c.h.b16 %v190
      %v431 = vunpack.c.l.b16 %v191
      %v432 = vunpack.c.l.b16 %v192
      %v433 = vunpack.c.h.b16 %v192
      %v434 = vunpack.c.l.b16 %v193
      %v435 = vunpack.c.h.b16 %v193
      %v436 = vunpack.c.l.b16 %v194
      %v437 = vunpack.c.h.b16 %v194
      %v438 = vunpack.c.l.b16 %v195
      %v439 = vunpack.c.h.b16 %v195
      %v440 = vunpack.c.l.b16 %v196
      %v441 = vunpack.c.l.b16 %v197
      %v442 = vunpack.c.h.b16 %v197
      %v443 = vunpack.c.l.b16 %v198
      %v444 = vunpack.c.h.b16 %v198
      %v445 = vunpack.c.l.b16 %v199
      %v446 = vunpack.c.h.b16 %v199
      %v447 = vunpack.c.l.b16 %v200
      %v448 = vunpack.c.h.b16 %v200
      %v449 = vunpack.c.l.b16 %v201
      %v450 = vunpack.c.l.b16 %v202
      %v451 = vunpack.c.h.b16 %v202
      %v452 = vunpack.c.l.b16 %v203
      %v453 = vunpack.c.h.b16 %v203
      %v454 = vunpack.c.l.b16 %v204
      %v455 = vunpack.c.h.b16 %v204
      %v456 = vunpack.c.l.b16 %v205
      %v457 = vunpack.c.h.b16 %v205
      %v458 = vunpack.c.l.b16 %v206
      %v459 = vunpack.c.l.b16 %v207
      %v460 = vunpack.c.h.b16 %v207
      %v461 = vunpack.c.l.b16 %v208
      %v462 = vunpack.c.h.b16 %v208
      %v463 = vunpack.c.l.b16 %v209
      %v464 = vunpack.c.h.b16 %v209
      %v465 = vunpack.c.l.b16 %v210
      %v466 = vunpack.c.h.b16 %v210
      %v467 = vunpack.c.l.b16 %v211
      %v468 = vpack.c.b16 %v405, %v396
      %v469 = vpack.c.b16 %v406, %v397
      %v470 = vpack.c.b16 %v407, %v398
      %v471 = vpack.c.b16 %v408, %v399
      %v472 = vpack.c.b16 %v409, %v400
      %v473 = vpack.c.b16 %v410, %v401
      %v474 = vpack.c.b16 %v411, %v402
      %v475 = vpack.c.b16 %v412, %v403
      %v476 = vpack.c.b16 %v413, %v404
      %v477 = vpack.c.b16 %v423, %v414
      %v478 = vpack.c.b16 %v424, %v415
      %v479 = vpack.c.b16 %v425, %v416
      %v480 = vpack.c.b16 %v426, %v417
      %v481 = vpack.c.b16 %v427, %v418
      %v482 = vpack.c.b16 %v428, %v419
      %v483 = vpack.c.b16 %v429, %v420
      %v484 = vpack.c.b16 %v430, %v421
      %v485 = vpack.c.b16 %v431, %v422
      %v486 = vpack.c.b16 %v441, %v432
      %v487 = vpack.c.b16 %v442, %v433
      %v488 = vpack.c.b16 %v443, %v434
      %v489 = vpack.c.b16 %v444, %v435
      %v490 = vpack.c.b16 %v445, %v436
      %v491 = vpack.c.b16 %v446, %v437
      %v492 = vpack.c.b16 %v447, %v438
      %v493 = vpack.c.b16 %v448, %v439
      %v494 = vpack.c.b16 %v449, %v440
      %v495 = vpack.c.b16 %v459, %v450
      %v496 = vpack.c.b16 %v460, %v451
      %v497 = vpack.c.b16 %v461, %v452
      %v498 = vpack.c.b16 %v462, %v453
      %v499 = vpack.c.b16 %v463, %v454
      %v500 = vpack.c.b16 %v464, %v455
      %v501 = vpack.c.b16 %v465, %v456
      %v502 = vpack.c.b16 %v466, %v457
      %v503 = vpack.c.b16 %v467, %v458
      %v684 = vunpack.c.l.b16 %v212
      %v685 = vunpack.c.l.b16 %v213
      %v686 = vunpack.c.l.b16 %v214
      %v687 = vunpack.c.l.b16 %v215
      %v688 = vunpack.c.l.b16 %v216
      %v689 = vunpack.c.l.b16 %v217
      %v690 = vunpack.c.l.b16 %v218
      %v691 = vunpack.c.l.b16 %v219
      %v692 = vunpack.c.l.b16 %v220
      %v693 = vunpack.c.l.b16 %v221
      %v694 = vunpack.c.l.b16 %v222
      %v695 = vunpack.c.l.b16 %v223
      %v696 = vunpack.c.l.b16 %v224
      %v697 = vunpack.c.l.b16 %v225
      %v698 = vunpack.c.l.b16 %v226
      %v699 = vunpack.c.l.b16 %v227
      %v700 = vunpack.c.l.b16 %v228
      %v701 = vunpack.c.l.b16 %v229
      %v702 = vunpack.c.l.b16 %v230
      %v703 = vunpack.c.l.b16 %v231
      %v704 = vunpack.c.l.b16 %v232
      %v705 = vunpack.c.l.b16 %v233
      %v706 = vunpack.c.l.b16 %v234
      %v707 = vunpack.c.l.b16 %v235
      %v708 = vunpack.c.l.b16 %v236
      %v709 = vunpack.c.l.b16 %v237
      %v710 = vunpack.c.l.b16 %v238
      %v711 = vunpack.c.l.b16 %v239
      %v712 = vunpack.c.l.b16 %v240
      %v713 = vunpack.c.l.b16 %v241
      %v714 = vunpack.c.l.b16 %v242
      %v715 = vunpack.c.l.b16 %v243
      %v716 = vunpack.c.l.b16 %v244
      %v717 = vunpack.c.l.b16 %v245
      %v718 = vunpack.c.l.b16 %v246
      %v719 = vunpack.c.l.b16 %v247
      %v720 = vunpack.c.l.b16 %v248
      %v721 = vunpack.c.l.b16 %v249
      %v722 = vunpack.c.l.b16 %v250
      %v723 = vunpack.c.l.b16 %v251
      %v724 = vunpack.c.l.b16 %v252
      %v725 = vunpack.c.l.b16 %v253
      %v726 = vunpack.c.l.b16 %v254
      %v727 = vunpack.c.l.b16 %v255
      %v728 = vunpack.c.l.b16 %v256
      %v729 = vunpack.c.l.b16 %v257
      %v730 = vunpack.c.l.b16 %v258
      %v731 = vunpack.c.l.b16 %v259
      %v732 = vunpack.c.l.b16 %v260
      %v733 = vunpack.c.l.b16 %v261
      %v734 = vunpack.c.l.b16 %v262
      %v735 = vunpack.c.l.b16 %v263
      %v736 = vunpack.c.l.b16 %v264
      %v737 = vunpack.c.l.b16 %v265
      %v738 = vunpack.c.l.b16 %v266
      %v739 = vunpack.c.l.b16 %v267
      %v740 = vunpack.c.l.b16 %v268
      %v741 = vunpack.c.l.b16 %v269
      %v742 = vunpack.c.l.b16 %v270
      %v743 = vunpack.c.l.b16 %v271
      %v744 = vunpack.c.l.b16 %v272
      %v745 = vunpack.c.l.b16 %v273
      %v746 = vunpack.c.l.b16 %v274
      %v747 = vunpack.c.l.b16 %v275
      %v748 = vunpack.c.l.b16 %v276
      %v749 = vunpack.c.l.b16 %v277
      %v750 = vunpack.c.l.b16 %v278
      %v751 = vunpack.c.l.b16 %v279
      %v752 = vunpack.c.l.b16 %v280
      %v753 = vunpack.c.l.b16 %v281
      %v754 = vunpack.c.l.b16 %v282
      %v755 = vunpack.c.l.b16 %v283
      %v756 = vunpack.c.l.b16 %v284
      %v757 = vunpack.c.l.b16 %v285
      %v758 = vunpack.c.l.b16 %v286
      %v759 = vunpack.c.l.b16 %v287
      %v760 = vunpack.c.l.b16 %v288
      %v761 = vunpack.c.l.b16 %v289
      %v762 = vunpack.c.l.b16 %v290
      %v763 = vunpack.c.l.b16 %v291
      %v764 = vunpack.c.l.b16 %v292
      %v765 = vunpack.c.l.b16 %v293
      %v766 = vunpack.c.l.b16 %v294
      %v767 = vunpack.c.l.b16 %v295
      %v768 = vunpack.c.l.b16 %v296
      %v769 = vunpack.c.l.b16 %v297
      %v770 = vunpack.c.l.b16 %v298
      %v771 = vunpack.c.l.b16 %v299
      %v772 = vunpack.c.l.b16 %v300
      %v773 = vunpack.c.l.b16 %v301
      %v774 = vunpack.c.l.b16 %v302
      %v775 = vunpack.c.l.b16 %v303
      %v776 = vunpack.c.l.b16 %v304
      %v777 = vunpack.c.l.b16 %v305
      %v778 = vunpack.c.l.b16 %v306
      %v779 = vunpack.c.l.b16 %v307
      %v780 = vunpack.c.l.b16 %v308
      %v781 = vunpack.c.l.b16 %v309
      %v782 = vunpack.c.l.b16 %v310
      %v783 = vunpack.c.l.b16 %v311
      %v784 = vunpack.c.l.b16 %v312
      %v785 = vunpack.c.l.b16 %v313
      %v786 = vunpack.c.l.b16 %v314
      %v787 = vunpack.c.l.b16 %v315
      %v788 = vunpack.c.l.b16 %v316
      %v789 = vunpack.c.l.b16 %v317
      %v790 = vunpack.c.l.b16 %v318
      %v791 = vunpack.c.l.b16 %v319
      %v792 = vunpack.c.l.b16 %v320
      %v793 = vunpack.c.l.b16 %v321
      %v794 = vunpack.c.l.b16 %v322
      %v795 = vunpack.c.l.b16 %v323
      %v796 = vunpack.c.l.b16 %v324
      %v797 = vunpack.c.l.b16 %v325
      %v798 = vunpack.c.l.b16 %v326
      %v799 = vunpack.c.l.b16 %v327
      %v800 = vunpack.c.l.b16 %v328
      %v801 = vunpack.c.l.b16 %v329
      %v802 = vunpack.c.l.b16 %v330
      %v803 = vunpack.c.l.b16 %v331
      %v804 = vunpack.c.l.b16 %v332
      %v805 = vunpack.c.l.b16 %v333
      %v806 = vunpack.c.l.b16 %v334
      %v807 = vunpack.c.l.b16 %v335
      %v808 = vunpack.c.l.b16 %v336
      %v809 = vunpack.c.l.b16 %v337
      %v810 = vunpack.c.l.b16 %v338
      %v811 = vunpack.c.l.b16 %v339
      %v812 = vunpack.c.l.b16 %v340
      %v813 = vunpack.c.l.b16 %v341
      %v814 = vunpack.c.l.b16 %v342
      %v815 = vunpack.c.l.b16 %v343
      %v816 = vunpack.c.l.b16 %v344
      %v817 = vunpack.c.l.b16 %v345
      %v818 = vunpack.c.l.b16 %v346
      %v819 = vunpack.c.l.b16 %v347
      %v820 = vunpack.c.l.b16 %v348
      %v821 = vunpack.c.l.b16 %v349
      %v822 = vunpack.c.l.b16 %v350
      %v823 = vunpack.c.l.b16 %v351
      %v824 = vunpack.c.l.b16 %v352
      %v825 = vunpack.c.l.b16 %v353
      %v826 = vunpack.c.l.b16 %v354
      %v827 = vunpack.c.l.b16 %v355
      %v828 = vpack.c.b16 %v685, %v684
      %v829 = vpack.c.b16 %v687, %v686
      %v830 = vpack.c.b16 %v689, %v688
      %v831 = vpack.c.b16 %v691, %v690
      %v832 = vpack.c.b16 %v693, %v692
      %v833 = vpack.c.b16 %v695, %v694
      %v834 = vpack.c.b16 %v697, %v696
      %v835 = vpack.c.b16 %v699, %v698
      %v836 = vpack.c.b16 %v701, %v700
      %v837 = vpack.c.b16 %v703, %v702
      %v838 = vpack.c.b16 %v705, %v704
      %v839 = vpack.c.b16 %v707, %v706
      %v840 = vpack.c.b16 %v709, %v708
      %v841 = vpack.c.b16 %v711, %v710
      %v842 = vpack.c.b16 %v713, %v712
      %v843 = vpack.c.b16 %v715, %v714
      %v844 = vpack.c.b16 %v717, %v716
      %v845 = vpack.c.b16 %v719, %v718
      %v846 = vpack.c.b16 %v721, %v720
      %v847 = vpack.c.b16 %v723, %v722
      %v848 = vpack.c.b16 %v725, %v724
      %v849 = vpack.c.b16 %v727, %v726
      %v850 = vpack.c.b16 %v729, %v728
      %v851 = vpack.c.b16 %v731, %v730
      %v852 = vpack.c.b16 %v733, %v732
      %v853 = vpack.c.b16 %v735, %v734
      %v854 = vpack.c.b16 %v737, %v736
      %v855 = vpack.c.b16 %v739, %v738
      %v856 = vpack.c.b16 %v741, %v740
      %v857 = vpack.c.b16 %v743, %v742
      %v858 = vpack.c.b16 %v745, %v744
      %v859 = vpack.c.b16 %v747, %v746
      %v860 = vpack.c.b16 %v749, %v748
      %v861 = vpack.c.b16 %v751, %v750
      %v862 = vpack.c.b16 %v753, %v752
      %v863 = vpack.c.b16 %v755, %v754
      %v864 = vpack.c.b16 %v757, %v756
      %v865 = vpack.c.b16 %v759, %v758
      %v866 = vpack.c.b16 %v761, %v760
      %v867 = vpack.c.b16 %v763, %v762
      %v868 = vpack.c.b16 %v765, %v764
      %v869 = vpack.c.b16 %v767, %v766
      %v870 = vpack.c.b16 %v769, %v768
      %v871 = vpack.c.b16 %v771, %v770
      %v872 = vpack.c.b16 %v773, %v772
      %v873 = vpack.c.b16 %v775, %v774
      %v874 = vpack.c.b16 %v777, %v776
      %v875 = vpack.c.b16 %v779, %v778
      %v876 = vpack.c.b16 %v781, %v780
      %v877 = vpack.c.b16 %v783, %v782
      %v878 = vpack.c.b16 %v785, %v784
      %v879 = vpack.c.b16 %v787, %v786
      %v880 = vpack.c.b16 %v789, %v788
      %v881 = vpack.c.b16 %v791, %v790
      %v882 = vpack.c.b16 %v793, %v792
      %v883 = vpack.c.b16 %v795, %v794
      %v884 = vpack.c.b16 %v797, %v796
      %v885 = vpack.c.b16 %v799, %v798
      %v886 = vpack.c.b16 %v801, %v800
      %v887 = vpack.c.b16 %v803, %v802
      %v888 = vpack.c.b16 %v805, %v804
      %v889 = vpack.c.b16 %v807, %v806
      %v890 = vpack.c.b16 %v809, %v808
      %v891 = vpack.c.b16 %v811, %v810
      %v892 = vpack.c.b16 %v813, %v812
      %v893 = vpack.c.b16 %v815, %v814
      %v894 = vpack.c.b16 %v817, %v816
      %v895 = vpack.c.b16 %v819, %v818
      %v896 = vpack.c.b16 %v821, %v820
      %v897 = vpack.c.b16 %v823, %v822
      %v898 = vpack.c.b16 %v825, %v824
      %v899 = vpack.c.b16 %v827, %v826
      %972 = vmatprep.subr.bf16.mxu0 0
      %973 = vmatpush1.bf16.msra.mxu0 %v828
      %974 = vmatprep.subr.bf16.mxu0 0
      %975 = vmatpush1.bf16.msra.mxu0 %v829
      %976 = vmatprep.subr.bf16.mxu0 0
      %977 = vmatpush1.bf16.msra.mxu0 %v830
      %978 = vmatprep.subr.bf16.mxu0 0
      %979 = vmatpush1.bf16.msra.mxu0 %v831
      %980 = vmatprep.subr.bf16.mxu0 0
      %981 = vmatpush1.bf16.msra.mxu0 %v832
      %982 = vmatprep.subr.bf16.mxu0 0
      %983 = vmatpush1.bf16.msra.mxu0 %v833
      %984 = vmatprep.subr.bf16.mxu0 0
      %985 = vmatpush1.bf16.msra.mxu0 %v834
      %986 = vmatprep.subr.bf16.mxu0 0
      %987 = vmatpush1.bf16.msra.mxu0 %v835
      %988 = vmatprep.subr.bf16.mxu0 0
      %989 = vmatpush1.bf16.msra.mxu0 %v836
      %990 = vmatprep.subr.bf16.mxu0 0
      %991 = vmatpush1.bf16.msra.mxu0 %v837
      %992 = vmatprep.subr.bf16.mxu0 0
      %993 = vmatpush1.bf16.msra.mxu0 %v838
      %994 = vmatprep.subr.bf16.mxu0 0
      %995 = vmatpush1.bf16.msra.mxu0 %v839
      %996 = vmatprep.subr.bf16.mxu0 0
      %997 = vmatpush1.bf16.msra.mxu0 %v840
      %998 = vmatprep.subr.bf16.mxu0 0
      %999 = vmatpush1.bf16.msra.mxu0 %v841
      %1000 = vmatprep.subr.bf16.mxu0 0
      %1001 = vmatpush1.bf16.msra.mxu0 %v842
      %1002 = vmatprep.subr.bf16.mxu0 0
      %1003 = vmatpush1.bf16.msra.mxu0 %v843
      %1004 = vmatprep.mubr.bf16.mxu0 %v469
      %1005 = vmatmul.mubr.bf16.gmra.mrb[0].mxu0 %v468
      %v1006 = vpop.f32.mrb[0].mxu0
      %v1007 = vadd.f32 0.0, %v1006
      %v1008 = vpop.f32.mrb[0].mxu0
      %v1009 = vpop.f32.mrb[0].mxu0
      %v1010 = vadd.f32 0.0, %v1009
      %v1011 = vpop.f32.mrb[0].mxu0
      %1012 = vmatprep.mubr.bf16.mxu0 %v478
      %1013 = vmatmul.mubr.bf16.gmra.mrb[0].mxu0 %v477
      %v1014 = vpop.f32.mrb[0].mxu0
      %v1015 = vadd.f32 0.0, %v1014
      %v1016 = vpop.f32.mrb[0].mxu0
      %v1017 = vpop.f32.mrb[0].mxu0
      %v1018 = vadd.f32 0.0, %v1017
      %v1019 = vpop.f32.mrb[0].mxu0
      %1020 = vmatprep.mubr.bf16.mxu0 %v487
      %1021 = vmatmul.mubr.bf16.gmra.mrb[0].mxu0 %v486
      %v1022 = vpop.f32.mrb[0].mxu0
      %v1023 = vadd.f32 0.0, %v1022
      %v1024 = vpop.f32.mrb[0].mxu0
      %v1025 = vpop.f32.mrb[0].mxu0
      %v1026 = vadd.f32 0.0, %v1025
      %v1027 = vpop.f32.mrb[0].mxu0
      %1028 = vmatprep.mubr.bf16.mxu0 %v496
      %1029 = vmatmul.mubr.bf16.gmra.mrb[0].mxu0 %v495
      %v1030 = vpop.f32.mrb[0].mxu0
      %v1031 = vadd.f32 0.0, %v1030
      %v1032 = vpop.f32.mrb[0].mxu0
      %v1033 = vpop.f32.mrb[0].mxu0
      %v1034 = vadd.f32 0.0, %v1033
      %v1035 = vpop.f32.mrb[0].mxu0
      %1036 = vdwg.mxu0
      %1037 = vmatprep.subr.bf16.mxu0 0
      %1038 = vmatpush1.bf16.msra.mxu0 %v844
      %1039 = vmatprep.subr.bf16.mxu0 0
      %1040 = vmatpush1.bf16.msra.mxu0 %v845
      %1041 = vmatprep.subr.bf16.mxu0 0
      %1042 = vmatpush1.bf16.msra.mxu0 %v846
      %1043 = vmatprep.subr.bf16.mxu0 0
      %1044 = vmatpush1.bf16.msra.mxu0 %v847
      %1045 = vmatprep.subr.bf16.mxu0 0
      %1046 = vmatpush1.bf16.msra.mxu0 %v848
      %1047 = vmatprep.subr.bf16.mxu0 0
      %1048 = vmatpush1.bf16.msra.mxu0 %v849
      %1049 = vmatprep.subr.bf16.mxu0 0
      %1050 = vmatpush1.bf16.msra.mxu0 %v850
      %1051 = vmatprep.subr.bf16.mxu0 0
      %1052 = vmatpush1.bf16.msra.mxu0 %v851
      %1053 = vmatprep.subr.bf16.mxu0 0
      %1054 = vmatpush1.bf16.msra.mxu0 %v852
      %1055 = vmatprep.subr.bf16.mxu0 0
      %1056 = vmatpush1.bf16.msra.mxu0 %v853
      %1057 = vmatprep.subr.bf16.mxu0 0
      %1058 = vmatpush1.bf16.msra.mxu0 %v854
      %1059 = vmatprep.subr.bf16.mxu0 0
      %1060 = vmatpush1.bf16.msra.mxu0 %v855
      %1061 = vmatprep.subr.bf16.mxu0 0
      %1062 = vmatpush1.bf16.msra.mxu0 %v856
      %1063 = vmatprep.subr.bf16.mxu0 0
      %1064 = vmatpush1.bf16.msra.mxu0 %v857
      %1065 = vmatprep.subr.bf16.mxu0 0
      %1066 = vmatpush1.bf16.msra.mxu0 %v858
      %1067 = vmatprep.subr.bf16.mxu0 0
      %1068 = vmatpush1.bf16.msra.mxu0 %v859
      %1069 = vmatprep.mubr.bf16.mxu0 %v471
      %1070 = vmatmul.mubr.bf16.gmra.mrb[0].mxu0 %v470
      %v1071 = vpop.f32.mrb[0].mxu0
      %v1072 = vadd.f32 %v1007, %v1071
      %v1073 = vpop.f32.mrb[0].mxu0
      %v1074 = vpop.f32.mrb[0].mxu0
      %v1075 = vadd.f32 %v1010, %v1074
      %v1076 = vpop.f32.mrb[0].mxu0
      %1077 = vmatprep.mubr.bf16.mxu0 %v480
      %1078 = vmatmul.mubr.bf16.gmra.mrb[0].mxu0 %v479
      %v1079 = vpop.f32.mrb[0].mxu0
      %v1080 = vadd.f32 %v1015, %v1079
      %v1081 = vpop.f32.mrb[0].mxu0
      %v1082 = vpop.f32.mrb[0].mxu0
      %v1083 = vadd.f32 %v1018, %v1082
      %v1084 = vpop.f32.mrb[0].mxu0
      %1085 = vmatprep.mubr.bf16.mxu0 %v489
      %1086 = vmatmul.mubr.bf16.gmra.mrb[0].mxu0 %v488
      %v1087 = vpop.f32.mrb[0].mxu0
      %v1088 = vadd.f32 %v1023, %v1087
      %v1089 = vpop.f32.mrb[0].mxu0
      %v1090 = vpop.f32.mrb[0].mxu0
      %v1091 = vadd.f32 %v1026, %v1090
      %v1092 = vpop.f32.mrb[0].mxu0
      %1093 = vmatprep.mubr.bf16.mxu0 %v498
      %1094 = vmatmul.mubr.bf16.gmra.mrb[0].mxu0 %v497
      %v1095 = vpop.f32.mrb[0].mxu0
      %v1096 = vadd.f32 %v1031, %v1095
      %v1097 = vpop.f32.mrb[0].mxu0
      %v1098 = vpop.f32.mrb[0].mxu0
      %v1099 = vadd.f32 %v1034, %v1098
      %v1100 = vpop.f32.mrb[0].mxu0
      %1101 = vdwg.mxu0
      %1102 = vmatprep.subr.bf16.mxu0 0
      %1103 = vmatpush1.bf16.msra.mxu0 %v860
      %1104 = vmatprep.subr.bf16.mxu0 0
      %1105 = vmatpush1.bf16.msra.mxu0 %v861
      %1106 = vmatprep.subr.bf16.mxu0 0
      %1107 = vmatpush1.bf16.msra.mxu0 %v862
      %1108 = vmatprep.subr.bf16.mxu0 0
      %1109 = vmatpush1.bf16.msra.mxu0 %v863
      %1110 = vmatprep.subr.bf16.mxu0 0
      %1111 = vmatpush1.bf16.msra.mxu0 %v864
      %1112 = vmatprep.subr.bf16.mxu0 0
      %1113 = vmatpush1.bf16.msra.mxu0 %v865
      %1114 = vmatprep.subr.bf16.mxu0 0
      %1115 = vmatpush1.bf16.msra.mxu0 %v866
      %1116 = vmatprep.subr.bf16.mxu0 0
      %1117 = vmatpush1.bf16.msra.mxu0 %v867
      %1118 = vmatprep.subr.bf16.mxu0 0
      %1119 = vmatpush1.bf16.msra.mxu0 %v868
      %1120 = vmatprep.subr.bf16.mxu0 0
      %1121 = vmatpush1.bf16.msra.mxu0 %v869
      %1122 = vmatprep.subr.bf16.mxu0 0
      %1123 = vmatpush1.bf16.msra.mxu0 %v870
      %1124 = vmatprep.subr.bf16.mxu0 0
      %1125 = vmatpush1.bf16.msra.mxu0 %v871
      %1126 = vmatprep.subr.bf16.mxu0 0
      %1127 = vmatpush1.bf16.msra.mxu0 %v872
      %1128 = vmatprep.subr.bf16.mxu0 0
      %1129 = vmatpush1.bf16.msra.mxu0 %v873
      %1130 = vmatprep.subr.bf16.mxu0 0
      %1131 = vmatpush1.bf16.msra.mxu0 %v874
      %1132 = vmatprep.subr.bf16.mxu0 0
      %1133 = vmatpush1.bf16.msra.mxu0 %v875
      %1134 = vmatprep.mubr.bf16.mxu0 %v473
      %1135 = vmatmul.mubr.bf16.gmra.mrb[0].mxu0 %v472
      %v1136 = vpop.f32.mrb[0].mxu0
      %v1137 = vadd.f32 %v1072, %v1136
      %v1138 = vpop.f32.mrb[0].mxu0
      %v1139 = vpop.f32.mrb[0].mxu0
      %v1140 = vadd.f32 %v1075, %v1139
      %v1141 = vpop.f32.mrb[0].mxu0
      %1142 = vmatprep.mubr.bf16.mxu0 %v482
      %1143 = vmatmul.mubr.bf16.gmra.mrb[0].mxu0 %v481
      %v1144 = vpop.f32.mrb[0].mxu0
      %v1145 = vadd.f32 %v1080, %v1144
      %v1146 = vpop.f32.mrb[0].mxu0
      %v1147 = vpop.f32.mrb[0].mxu0
      %v1148 = vadd.f32 %v1083, %v1147
      %v1149 = vpop.f32.mrb[0].mxu0
      %1150 = vmatprep.mubr.bf16.mxu0 %v491
      %1151 = vmatmul.mubr.bf16.gmra.mrb[0].mxu0 %v490
      %v1152 = vpop.f32.mrb[0].mxu0
      %v1153 = vadd.f32 %v1088, %v1152
      %v1154 = vpop.f32.mrb[0].mxu0
      %v1155 = vpop.f32.mrb[0].mxu0
      %v1156 = vadd.f32 %v1091, %v1155
      %v1157 = vpop.f32.mrb[0].mxu0
      %1158 = vmatprep.mubr.bf16.mxu0 %v500
      %1159 = vmatmul.mubr.bf16.gmra.mrb[0].mxu0 %v499
      %v1160 = vpop.f32.mrb[0].mxu0
      %v1161 = vadd.f32 %v1096, %v1160
      %v1162 = vpop.f32.mrb[0].mxu0
      %v1163 = vpop.f32.mrb[0].mxu0
      %v1164 = vadd.f32 %v1099, %v1163
      %v1165 = vpop.f32.mrb[0].mxu0
      %1166 = vdwg.mxu0
      %1167 = vmatprep.subr.bf16.mxu0 0
      %1168 = vmatpush1.bf16.msra.mxu0 %v876
      %1169 = vmatprep.subr.bf16.mxu0 0
      %1170 = vmatpush1.bf16.msra.mxu0 %v877
      %1171 = vmatprep.subr.bf16.mxu0 0
      %1172 = vmatpush1.bf16.msra.mxu0 %v878
      %1173 = vmatprep.subr.bf16.mxu0 0
      %1174 = vmatpush1.bf16.msra.mxu0 %v879
      %1175 = vmatprep.subr.bf16.mxu0 0
      %1176 = vmatpush1.bf16.msra.mxu0 %v880
      %1177 = vmatprep.subr.bf16.mxu0 0
      %1178 = vmatpush1.bf16.msra.mxu0 %v881
      %1179 = vmatprep.subr.bf16.mxu0 0
      %1180 = vmatpush1.bf16.msra.mxu0 %v882
      %1181 = vmatprep.subr.bf16.mxu0 0
      %1182 = vmatpush1.bf16.msra.mxu0 %v883
      %1183 = vmatprep.subr.bf16.mxu0 0
      %1184 = vmatpush1.bf16.msra.mxu0 %v884
      %1185 = vmatprep.subr.bf16.mxu0 0
      %1186 = vmatpush1.bf16.msra.mxu0 %v885
      %1187 = vmatprep.subr.bf16.mxu0 0
      %1188 = vmatpush1.bf16.msra.mxu0 %v886
      %1189 = vmatprep.subr.bf16.mxu0 0
      %1190 = vmatpush1.bf16.msra.mxu0 %v887
      %1191 = vmatprep.subr.bf16.mxu0 0
      %1192 = vmatpush1.bf16.msra.mxu0 %v888
      %1193 = vmatprep.subr.bf16.mxu0 0
      %1194 = vmatpush1.bf16.msra.mxu0 %v889
      %1195 = vmatprep.subr.bf16.mxu0 0
      %1196 = vmatpush1.bf16.msra.mxu0 %v890
      %1197 = vmatprep.subr.bf16.mxu0 0
      %1198 = vmatpush1.bf16.msra.mxu0 %v891
      %1199 = vmatprep.mubr.bf16.mxu0 %v475
      %1200 = vmatmul.mubr.bf16.gmra.mrb[0].mxu0 %v474
      %v1201 = vpop.f32.mrb[0].mxu0
      %v1202 = vadd.f32 %v1137, %v1201
      %v1203 = vpop.f32.mrb[0].mxu0
      %v1204 = vpop.f32.mrb[0].mxu0
      %v1205 = vadd.f32 %v1140, %v1204
      %v1206 = vpop.f32.mrb[0].mxu0
      %1207 = vmatprep.mubr.bf16.mxu0 %v484
      %1208 = vmatmul.mubr.bf16.gmra.mrb[0].mxu0 %v483
      %v1209 = vpop.f32.mrb[0].mxu0
      %v1210 = vadd.f32 %v1145, %v1209
      %v1211 = vpop.f32.mrb[0].mxu0
      %v1212 = vpop.f32.mrb[0].mxu0
      %v1213 = vadd.f32 %v1148, %v1212
      %v1214 = vpop.f32.mrb[0].mxu0
      %1215 = vmatprep.mubr.bf16.mxu0 %v493
      %1216 = vmatmul.mubr.bf16.gmra.mrb[0].mxu0 %v492
      %v1217 = vpop.f32.mrb[0].mxu0
      %v1218 = vadd.f32 %v1153, %v1217
      %v1219 = vpop.f32.mrb[0].mxu0
      %v1220 = vpop.f32.mrb[0].mxu0
      %v1221 = vadd.f32 %v1156, %v1220
      %v1222 = vpop.f32.mrb[0].mxu0
      %1223 = vmatprep.mubr.bf16.mxu0 %v502
      %1224 = vmatmul.mubr.bf16.gmra.mrb[0].mxu0 %v501
      %v1225 = vpop.f32.mrb[0].mxu0
      %v1226 = vadd.f32 %v1161, %v1225
      %v1227 = vpop.f32.mrb[0].mxu0
      %v1228 = vpop.f32.mrb[0].mxu0
      %v1229 = vadd.f32 %v1164, %v1228
      %v1230 = vpop.f32.mrb[0].mxu0
      %1231 = vdwg.mxu0
      %1232 = vmatprep.subr.bf16.mxu0 0
      %1233 = vmatpush1.bf16.msra.mxu0 %v892
      %1234 = vmatprep.subr.bf16.mxu0 0
      %1235 = vmatpush1.bf16.msra.mxu0 %v893
      %1236 = vmatprep.subr.bf16.mxu0 0
      %1237 = vmatpush1.bf16.msra.mxu0 %v894
      %1238 = vmatprep.subr.bf16.mxu0 0
      %1239 = vmatpush1.bf16.msra.mxu0 %v895
      %1240 = vmatprep.subr.bf16.mxu0 0
      %1241 = vmatpush1.bf16.msra.mxu0 %v896
      %1242 = vmatprep.subr.bf16.mxu0 0
      %1243 = vmatpush1.bf16.msra.mxu0 %v897
      %1244 = vmatprep.subr.bf16.mxu0 0
      %1245 = vmatpush1.bf16.msra.mxu0 %v898
      %1246 = vmatprep.subr.bf16.mxu0 0
      %1247 = vmatpush1.bf16.msra.mxu0 %v899
      %1248 = vmatprep.subr.bf16.mxu0 0
      %1249 = vmatpush1.bf16.msra.mxu0 0
      %1250 = vmatprep.subr.bf16.mxu0 0
      %1251 = vmatpush1.bf16.msra.mxu0 0
      %1252 = vmatprep.subr.bf16.mxu0 0
      %1253 = vmatpush1.bf16.msra.mxu0 0
      %1254 = vmatprep.subr.bf16.mxu0 0
      %1255 = vmatpush1.bf16.msra.mxu0 0
      %1256 = vmatprep.subr.bf16.mxu0 0
      %1257 = vmatpush1.bf16.msra.mxu0 0
      %1258 = vmatprep.subr.bf16.mxu0 0
      %1259 = vmatpush1.bf16.msra.mxu0 0
      %1260 = vmatprep.subr.bf16.mxu0 0
      %1261 = vmatpush1.bf16.msra.mxu0 0
      %1262 = vmatprep.subr.bf16.mxu0 0
      %1263 = vmatpush1.bf16.msra.mxu0 0
      %1264 = vmatprep.mubr.bf16.mxu0 0
      %1265 = vmatmul.mubr.bf16.gmra.mrb[0].mxu0 %v476
      %v1266 = vpop.f32.mrb[0].mxu0
      %v1267 = vadd.f32 %v1202, %v1266
      %v1268 = vpop.f32.mrb[0].mxu0
      %v1269 = vpop.f32.mrb[0].mxu0
      %v1270 = vadd.f32 %v1205, %v1269
      %v1271 = vpop.f32.mrb[0].mxu0
      %1272 = vmatprep.mubr.bf16.mxu0 0
      %1273 = vmatmul.mubr.bf16.gmra.mrb[0].mxu0 %v485
      %v1274 = vpop.f32.mrb[0].mxu0
      %v1275 = vadd.f32 %v1210, %v1274
      %v1276 = vpop.f32.mrb[0].mxu0
      %v1277 = vpop.f32.mrb[0].mxu0
      %v1278 = vadd.f32 %v1213, %v1277
      %v1279 = vpop.f32.mrb[0].mxu0
      %1280 = vmatprep.mubr.bf16.mxu0 0
      %1281 = vmatmul.mubr.bf16.gmra.mrb[0].mxu0 %v494
      %v1282 = vpop.f32.mrb[0].mxu0
      %v1283 = vadd.f32 %v1218, %v1282
      %v1284 = vpop.f32.mrb[0].mxu0
      %v1285 = vpop.f32.mrb[0].mxu0
      %v1286 = vadd.f32 %v1221, %v1285
      %v1287 = vpop.f32.mrb[0].mxu0
      %1288 = vmatprep.mubr.bf16.mxu0 0
      %1289 = vmatmul.mubr.bf16.gmra.mrb[0].mxu0 %v503
      %v1290 = vpop.f32.mrb[0].mxu0
      %v1291 = vadd.f32 %v1226, %v1290
      %v1292 = vpop.f32.mrb[0].mxu0
      %v1293 = vpop.f32.mrb[0].mxu0
      %v1294 = vadd.f32 %v1229, %v1293
      %v1295 = vpop.f32.mrb[0].mxu0
      %1296 = vdwg.mxu0
      %1305 = vrot.lane.b32.xlu0 %v1267, 96
      %v1306 = vpop.permute.xlu0 %1305
      %1307 = vrot.lane.b32.xlu0 %v1270, 96
      %v1308 = vpop.permute.xlu0 %1307
      %1309 = vrot.lane.b32.xlu0 %v1275, 96
      %v1310 = vpop.permute.xlu0 %1309
      %1311 = vrot.lane.b32.xlu0 %v1278, 96
      %v1312 = vpop.permute.xlu0 %1311
      %1313 = vrot.lane.b32.xlu0 %v1283, 96
      %v1314 = vpop.permute.xlu0 %1313
      %1315 = vrot.lane.b32.xlu0 %v1286, 96
      %v1316 = vpop.permute.xlu0 %1315
      %1317 = vrot.lane.b32.xlu0 %v1291, 96
      %v1318 = vpop.permute.xlu0 %1317
      %1319 = vrot.lane.b32.xlu0 %v1294, 96
      %v1320 = vpop.permute.xlu0 %1319
      %v1329 = vmax.f32 %v1267, %v1306
      %v1330 = vmax.f32 %v1270, %v1308
      %v1331 = vmax.f32 %v1275, %v1310
      %v1332 = vmax.f32 %v1278, %v1312
      %v1333 = vmax.f32 %v1283, %v1314
      %v1334 = vmax.f32 %v1286, %v1316
      %v1335 = vmax.f32 %v1291, %v1318
      %v1336 = vmax.f32 %v1294, %v1320
      %1345 = vrot.lane.b32.xlu0 %v1329, 64
      %v1346 = vpop.permute.xlu0 %1345
      %1347 = vrot.lane.b32.xlu0 %v1330, 64
      %v1348 = vpop.permute.xlu0 %1347
      %1349 = vrot.lane.b32.xlu0 %v1331, 64
      %v1350 = vpop.permute.xlu0 %1349
      %1351 = vrot.lane.b32.xlu0 %v1332, 64
      %v1352 = vpop.permute.xlu0 %1351
      %1353 = vrot.lane.b32.xlu0 %v1333, 64
      %v1354 = vpop.permute.xlu0 %1353
      %1355 = vrot.lane.b32.xlu0 %v1334, 64
      %v1356 = vpop.permute.xlu0 %1355
      %1357 = vrot.lane.b32.xlu0 %v1335, 64
      %v1358 = vpop.permute.xlu0 %1357
      %1359 = vrot.lane.b32.xlu0 %v1336, 64
      %v1360 = vpop.permute.xlu0 %1359
      %v1369 = vmax.f32 %v1329, %v1346
      %v1370 = vmax.f32 %v1330, %v1348
      %v1371 = vmax.f32 %v1331, %v1350
      %v1372 = vmax.f32 %v1332, %v1352
      %v1373 = vmax.f32 %v1333, %v1354
      %v1374 = vmax.f32 %v1334, %v1356
      %v1375 = vmax.f32 %v1335, %v1358
      %v1376 = vmax.f32 %v1336, %v1360
      %v1377 = vld [vmem:[%s2] sm:$0x1]
      %v1379 = vlaneseq
      %v1380 = vshrl.u32 %v1379, 7
      %v1381 = vsub.s32 0, %v1380
      %v1382 = vrot.slane %v1377, %v1381
      %v1384 = vadd.f32 %v1369, %v1382
      %v1385 = vadd.f32 %v1370, %v1382
      %v1386 = vadd.f32 %v1371, %v1382
      %v1387 = vadd.f32 %v1372, %v1382
      %v1388 = vadd.f32 %v1373, %v1382
      %v1389 = vadd.f32 %v1374, %v1382
      %v1390 = vadd.f32 %v1375, %v1382
      %v1391 = vadd.f32 %v1376, %v1382
      %v1392 = vpack.c.bf16 %v1385, %v1384
      %v1393 = vpack.c.bf16 %v1387, %v1386
      %v1394 = vpack.c.bf16 %v1389, %v1388
      %v1395 = vpack.c.bf16 %v1391, %v1390
      %v1400 = vunpack.c.l.b16 %v1392
      %v1401 = vunpack.c.h.b16 %v1392
      %v1402 = vunpack.c.l.b16 %v1393
      %v1403 = vunpack.c.h.b16 %v1393
      %v1404 = vunpack.c.l.b16 %v1394
      %v1405 = vunpack.c.h.b16 %v1394
      %v1406 = vunpack.c.l.b16 %v1395
      %v1407 = vunpack.c.h.b16 %v1395
      %v1408 = vpack.c.b16 %v1400, %v1400
      %v1409 = vpack.c.b16 %v1401, %v1401
      %v1410 = vpack.c.b16 %v1402, %v1402
      %v1411 = vpack.c.b16 %v1403, %v1403
      %v1412 = vpack.c.b16 %v1404, %v1404
      %v1413 = vpack.c.b16 %v1405, %v1405
      %v1414 = vpack.c.b16 %v1406, %v1406
      %v1415 = vpack.c.b16 %v1407, %v1407
      %vm1424 = vcmask 257024
      %1425 = vst.msk [vmem:[%s170] sm:$0xf] %vm1424, %v1408
      %1426 = vst.msk [vmem:[%s170 + $0x4] sm:$0xf] %vm1424, %v1409
      %1427 = vst.msk [vmem:[%s170 + $0x8] sm:$0xf] %vm1424, %v1410
      %1428 = vst.msk [vmem:[%s170 + $0xc] sm:$0xf] %vm1424, %v1411
      %1429 = vst.msk [vmem:[%s170 + $0x10] sm:$0xf] %vm1424, %v1412
      %1430 = vst.msk [vmem:[%s170 + $0x14] sm:$0xf] %vm1424, %v1413
      %1431 = vst.msk [vmem:[%s170 + $0x18] sm:$0xf] %vm1424, %v1414
      %1432 = vst.msk [vmem:[%s170 + $0x1c] sm:$0xf] %vm1424, %v1415
      %p1433 = scmp.lt.s32.totalorder %s14, 1
      %s1434 = scalar_select %p1433, %s14, 1
      %s1435 = smul.addr %s1434, 8
      %s1436 = smul.addr %s1435, 4
      %s1437 = scalar_lea.vmem %s3, %s1436
      // Predicated region
      $region33: #{forward.5} parent=31 // pred_check
        %p1438 = pneg %p100
      $region34: #{forward.5} parent=31 // pred_check_branch
        %1440 = sbr.rel (%p1438) target = $region36
      $region35: #{forward.5} parent=31 // pred_region
        _
      $region36: #{forward.5} parent=31 // pred_fallthru
        _
    $region32: #{forward.5} parent=5 // pred_fallthru
      _
    %p1441 = scmp.le.s32.totalorder 2, %s9
    // Predicated region
    $region37: #{forward.5} parent=5 // pred_check
      %p1442 = pneg %p1441
    $region38: #{forward.5} parent=5 // pred_check_branch
      %1444 = sbr.rel (%p1442) target = $region40
    $region39: #{forward.5} parent=5 // pred_region
      %s1445 = ssub.s32 %s9, 2
      // Predicated region
      $region41: #{forward.5} parent=39 // pred_check
        %p1446 = pneg %p106
      $region42: #{forward.5} parent=39 // pred_check_branch
        %1448 = sbr.rel (%p1446) target = $region44
      $region43: #{forward.5} parent=39 // pred_region
        %p1449 = scmp.lt.s32.totalorder %s15, 1
        %s1450 = scalar_select %p1449, %s15, 1
        %s1451 = smul.addr %s1450, 8
        %s1452 = smul.addr %s1451, 4
        %s1453 = scalar_lea.vmem %s3, %s1452
      $region44: #{forward.5} parent=39 // pred_fallthru
        _
    $region40: #{forward.5} parent=5 // pred_fallthru
      _
  $region6: #{forward.5} parent=0 // loop_footer
    %s13 = sadd.s32 1, %s9
  $region7: #{forward.5} parent=0 // loop_footer_branch
    %8 = sbr.rel target = $region3
  $region8: #{forward.5} parent=0 // loop_exit
    _

// kernel: forward.6
$region0: #{forward.6}
  #allocation0 [shape = 'u32[]', space=smem, size = 0x4, offset = 0x4, fixed_abs, tag = 'smem constant byte address 0x4 - core index']
  #allocation1 [shape = 'u32[144,128]{1,0:T(1,128)}', space=vmem, size = 0x12000, scoped, tag = 'internal scratch']
  %s0 = inlined_call_operand.vmem [shape: bf16[2,16,1152], index: 0, kind: input, shape index: {}]
  %s1 = inlined_call_operand.vmem [shape: bf16[1152,256], index: 1, kind: input, shape index: {}]
  %s2 = inlined_call_operand.vmem [shape: f32[1,64], index: 2, kind: input, shape index: {}]
  %s3 = inlined_call_operand.vmem [shape: bf16[2,16,64], index: 3, kind: output, shape index: {}]
  %s4 = sld [smem:[#allocation0]]
  $region45: #{forward.6} parent=0
    _
  %s6 = ssub.s32 1, %s4
  %s7 = scalar_select 0, %s6, %s4
  loop: start=0, step=1, limit=4
  $region2: #{forward.6} parent=0 // loop_pre_header
    _
  $region3: #{forward.6} parent=0 // loop_header
    %s9 = sphi 0, %s13
    %p10 = scmp.ge.s32.totalorder %s9, 4
    %s19 = sphi 0, %s21
    %s22 = sphi 0, %s19
    %s23 = sphi 0, %s22
    %s39 = sphi 0, %s23
    %s43 = sphi 0, %s43
    %s45 = sphi 0, %s43
    %s46 = sphi 0, %s45
    %s60 = sphi 0, %s46
    %s64 = sphi 0, %s64
    %s66 = sphi 0, %s64
    %s67 = sphi 0, %s66
    %s81 = sphi 0, %s67
    %s87 = sphi 0, %s89
    %s90 = sphi 0, %s87
    %s91 = sphi 0, %s90
    %s107 = sphi 0, %s91
  $region4: #{forward.6} parent=0 // loop_header_branch
    %12 = sbr.rel (%p10) target = $region8
  $region5: #{forward.6} parent=0 // loop_body
    %s14 = ssub.s32 %s9, 1
    %s15 = ssub.s32 %s9, 2
    %s16 = sadd.s32 %s9, 1
    %s17 = ssub.s32 %s9, %s16
    %p18 = scmp.eq.s32.totalorder %s17, 0
    %s20 = sadd.s32 %s19, 1
    %s21 = scalar_select %p18, %s19, %s20
    %p24 = pneg %p18
    %p25 = scmp.eq.s32.totalorder %s9, 1
    %p26 = por %p24, %p25
    %p27 = scmp.ne.s32.totalorder %s19, %s22
    %p28 = scmp.eq.s32.totalorder %s9, 0
    %p29 = por %p27, %p28
    %p30 = scmp.ne.s32.totalorder %s19, %s22
    %p31 = scmp.eq.s32.totalorder %s14, 1
    %p32 = por %p30, %p31
    %p33 = scmp.ne.s32.totalorder %s22, %s23
    %p34 = scmp.eq.s32.totalorder %s14, 0
    %p35 = por %p33, %p34
    %p36 = scmp.ne.s32.totalorder %s22, %s23
    %p37 = scmp.eq.s32.totalorder %s15, 1
    %p38 = por %p36, %p37
    %p40 = scmp.ne.s32.totalorder %s23, %s39
    %p41 = scmp.eq.s32.totalorder %s15, 0
    %p42 = por %p40, %p41
    %s44 = sadd.s32 %s43, 1
    %p47 = scmp.eq.s32.totalorder %s9, 1
    %p48 = scmp.ne.s32.totalorder %s43, %s45
    %p49 = scmp.eq.s32.totalorder %s9, 0
    %p50 = por %p48, %p49
    %p51 = scmp.ne.s32.totalorder %s43, %s45
    %p52 = scmp.eq.s32.totalorder %s14, 1
    %p53 = por %p51, %p52
    %p54 = scmp.ne.s32.totalorder %s45, %s46
    %p55 = scmp.eq.s32.totalorder %s14, 0
    %p56 = por %p54, %p55
    %p57 = scmp.ne.s32.totalorder %s45, %s46
    %p58 = scmp.eq.s32.totalorder %s15, 1
    %p59 = por %p57, %p58
    %p61 = scmp.ne.s32.totalorder %s46, %s60
    %p62 = scmp.eq.s32.totalorder %s15, 0
    %p63 = por %p61, %p62
    %s65 = sadd.s32 %s64, 1
    %p68 = scmp.eq.s32.totalorder %s9, 1
    %p69 = scmp.ne.s32.totalorder %s64, %s66
    %p70 = scmp.eq.s32.totalorder %s9, 0
    %p71 = por %p69, %p70
    %p72 = scmp.ne.s32.totalorder %s64, %s66
    %p73 = scmp.eq.s32.totalorder %s14, 1
    %p74 = por %p72, %p73
    %p75 = scmp.ne.s32.totalorder %s66, %s67
    %p76 = scmp.eq.s32.totalorder %s14, 0
    %p77 = por %p75, %p76
    %p78 = scmp.ne.s32.totalorder %s66, %s67
    %p79 = scmp.eq.s32.totalorder %s15, 1
    %p80 = por %p78, %p79
    %p82 = scmp.ne.s32.totalorder %s67, %s81
    %p83 = scmp.eq.s32.totalorder %s15, 0
    %p84 = por %p82, %p83
    %s85 = ssub.s32 %s9, %s16
    %p86 = scmp.eq.s32.totalorder %s85, 0
    %s88 = sadd.s32 %s87, 1
    %s89 = scalar_select %p86, %s87, %s88
    %p92 = pneg %p86
    %p93 = scmp.eq.s32.totalorder %s9, 1
    %p94 = por %p92, %p93
    %p95 = scmp.ne.s32.totalorder %s87, %s90
    %p96 = scmp.eq.s32.totalorder %s9, 0
    %p97 = por %p95, %p96
    %p98 = scmp.ne.s32.totalorder %s87, %s90
    %p99 = scmp.eq.s32.totalorder %s14, 1
    %p100 = por %p98, %p99
    %p101 = scmp.ne.s32.totalorder %s90, %s91
    %p102 = scmp.eq.s32.totalorder %s14, 0
    %p103 = por %p101, %p102
    %p104 = scmp.ne.s32.totalorder %s90, %s91
    %p105 = scmp.eq.s32.totalorder %s15, 1
    %p106 = por %p104, %p105
    %p108 = scmp.ne.s32.totalorder %s91, %s107
    %p109 = scmp.eq.s32.totalorder %s15, 0
    %p110 = por %p108, %p109
    %p111 = scmp.le.s32.totalorder 1, %s9
    %p112 = scmp.lt.s32.totalorder %s9, 3
    %p113 = pnand %p111, %p112
    %p114 = pneg %p113
    // Predicated region
    $region9: #{forward.6} parent=5 // pred_check
      _
    $region10: #{forward.6} parent=5 // pred_check_branch
      %116 = sbr.rel (%p113) target = $region12
    $region11: #{forward.6} parent=5 // pred_region
      %s117 = ssub.s32 %s9, 1
      // Predicated region
      $region13: #{forward.6} parent=11 // pred_check
        %p118 = pneg %p56
      $region14: #{forward.6} parent=11 // pred_check_branch
        %120 = sbr.rel (%p118) target = $region16
      $region15: #{forward.6} parent=11 // pred_region
        _
      $region16: #{forward.6} parent=11 // pred_fallthru
        _
      // Predicated region
      $region17: #{forward.6} parent=11 // pred_check
        %p121 = pneg %p77
      $region18: #{forward.6} parent=11 // pred_check_branch
        %123 = sbr.rel (%p121) target = $region20
      $region19: #{forward.6} parent=11 // pred_region
        _
      $region20: #{forward.6} parent=11 // pred_fallthru
        _
    $region12: #{forward.6} parent=5 // pred_fallthru
      _
    %p124 = scmp.lt.s32.totalorder %s9, 2
    // Predicated region
    $region21: #{forward.6} parent=5 // pred_check
      %p125 = pneg %p124
    $region22: #{forward.6} parent=5 // pred_check_branch
      %127 = sbr.rel (%p125) target = $region24
    $region23: #{forward.6} parent=5 // pred_region
      // Predicated region
      $region25: #{forward.6} parent=23 // pred_check
        %p128 = pneg %p29
      $region26: #{forward.6} parent=23 // pred_check_branch
        %130 = sbr.rel (%p128) target = $region28
      $region27: #{forward.6} parent=23 // pred_region
        %p131 = scmp.lt.s32.totalorder %s9, 1
        %s132 = scalar_select %p131, %s9, 1
        %s133 = smul.addr %s132, 18
        %s134 = smul.addr %s133, 4
        %s135 = scalar_lea.vmem %s0, %s134
      $region28: #{forward.6} parent=23 // pred_fallthru
        _
    $region24: #{forward.6} parent=5 // pred_fallthru
      _
    %p136 = scmp.le.s32.totalorder 1, %s9
    %p137 = scmp.lt.s32.totalorder %s9, 3
    %p138 = pnand %p136, %p137
    %p139 = pneg %p138
    // Predicated region
    $region29: #{forward.6} parent=5 // pred_check
      _
    $region30: #{forward.6} parent=5 // pred_check_branch
      %141 = sbr.rel (%p138) target = $region32
    $region31: #{forward.6} parent=5 // pred_region
      %s142 = ssub.s32 %s9, 1
      %p143 = scmp.lt.s32.totalorder %s14, 1
      %s144 = scalar_select %p143, %s14, 1
      %s145 = smul.addr %s144, 18
      %s146 = smul.addr %s145, 4
      %s147 = scalar_lea.vmem %s0, %s146
      %p148 = pneg %p35
      %p149 = pneg %p32
      %p150 = pneg %p56
      %p151 = pneg %p53
      %p152 = pneg %p77
      %p153 = pneg %p74
      %p154 = pneg %p103
      %p155 = pneg %p100
      %p156 = scmp.lt.s32.totalorder %s14, 1
      %s157 = scalar_select %p156, %s14, 1
      %s158 = smul.addr %s157, 2
      %s159 = smul.addr %s158, 4
      %s160 = scalar_lea.vmem %s3, %s159
      %p161 = scmp.lt.s32.totalorder %s14, 1
      %s162 = scalar_select %p161, %s14, 1
      %s163 = smul.addr %s162, 18
      %s164 = smul.addr %s163, 4
      %s165 = scalar_lea.vmem %s0, %s164
      %p166 = scmp.lt.s32.totalorder %s14, 1
      %s167 = scalar_select %p166, %s14, 1
      %s168 = smul.addr %s167, 2
      %s169 = smul.addr %s168, 4
      %s170 = scalar_lea.vmem %s3, %s169
      %v172 = vld [vmem:[%s165] sm:$0xff]
      %v173 = vld [vmem:[%s165 + $0x8] sm:$0xff]
      %v174 = vld [vmem:[%s165 + $0x10] sm:$0xff]
      %v175 = vld [vmem:[%s165 + $0x18] sm:$0xff]
      %v176 = vld [vmem:[%s165 + $0x20] sm:$0xf]
      %v177 = vld [vmem:[%s165 + $0x24] sm:$0xff]
      %v178 = vld [vmem:[%s165 + $0x2c] sm:$0xff]
      %v179 = vld [vmem:[%s165 + $0x34] sm:$0xff]
      %v180 = vld [vmem:[%s165 + $0x3c] sm:$0xff]
      %v181 = vld [vmem:[%s165 + $0x44] sm:$0xf]
      %v182 = vld [vmem:[%s1] sm:$0xff]
      %v183 = vld [vmem:[%s1 + $0x8] sm:$0xff]
      %v184 = vld [vmem:[%s1 + $0x10] sm:$0xff]
      %v185 = vld [vmem:[%s1 + $0x18] sm:$0xff]
      %v186 = vld [vmem:[%s1 + $0x20] sm:$0xff]
      %v187 = vld [vmem:[%s1 + $0x28] sm:$0xff]
      %v188 = vld [vmem:[%s1 + $0x30] sm:$0xff]
      %v189 = vld [vmem:[%s1 + $0x38] sm:$0xff]
      %v190 = vld [vmem:[%s1 + $0x40] sm:$0xff]
      %v191 = vld [vmem:[%s1 + $0x48] sm:$0xff]
      %v192 = vld [vmem:[%s1 + $0x50] sm:$0xff]
      %v193 = vld [vmem:[%s1 + $0x58] sm:$0xff]
      %v194 = vld [vmem:[%s1 + $0x60] sm:$0xff]
      %v195 = vld [vmem:[%s1 + $0x68] sm:$0xff]
      %v196 = vld [vmem:[%s1 + $0x70] sm:$0xff]
      %v197 = vld [vmem:[%s1 + $0x78] sm:$0xff]
      %v198 = vld [vmem:[%s1 + $0x80] sm:$0xff]
      %v199 = vld [vmem:[%s1 + $0x88] sm:$0xff]
      %v200 = vld [vmem:[%s1 + $0x90] sm:$0xff]
      %v201 = vld [vmem:[%s1 + $0x98] sm:$0xff]
      %v202 = vld [vmem:[%s1 + $0xa0] sm:$0xff]
      %v203 = vld [vmem:[%s1 + $0xa8] sm:$0xff]
      %v204 = vld [vmem:[%s1 + $0xb0] sm:$0xff]
      %v205 = vld [vmem:[%s1 + $0xb8] sm:$0xff]
      %v206 = vld [vmem:[%s1 + $0xc0] sm:$0xff]
      %v207 = vld [vmem:[%s1 + $0xc8] sm:$0xff]
      %v208 = vld [vmem:[%s1 + $0xd0] sm:$0xff]
      %v209 = vld [vmem:[%s1 + $0xd8] sm:$0xff]
      %v210 = vld [vmem:[%s1 + $0xe0] sm:$0xff]
      %v211 = vld [vmem:[%s1 + $0xe8] sm:$0xff]
      %v212 = vld [vmem:[%s1 + $0xf0] sm:$0xff]
      %v213 = vld [vmem:[%s1 + $0xf8] sm:$0xff]
      %v214 = vld [vmem:[%s1 + $0x100] sm:$0xff]
      %v215 = vld [vmem:[%s1 + $0x108] sm:$0xff]
      %v216 = vld [vmem:[%s1 + $0x110] sm:$0xff]
      %v217 = vld [vmem:[%s1 + $0x118] sm:$0xff]
      %v218 = vld [vmem:[%s1 + $0x120] sm:$0xff]
      %v219 = vld [vmem:[%s1 + $0x128] sm:$0xff]
      %v220 = vld [vmem:[%s1 + $0x130] sm:$0xff]
      %v221 = vld [vmem:[%s1 + $0x138] sm:$0xff]
      %v222 = vld [vmem:[%s1 + $0x140] sm:$0xff]
      %v223 = vld [vmem:[%s1 + $0x148] sm:$0xff]
      %v224 = vld [vmem:[%s1 + $0x150] sm:$0xff]
      %v225 = vld [vmem:[%s1 + $0x158] sm:$0xff]
      %v226 = vld [vmem:[%s1 + $0x160] sm:$0xff]
      %v227 = vld [vmem:[%s1 + $0x168] sm:$0xff]
      %v228 = vld [vmem:[%s1 + $0x170] sm:$0xff]
      %v229 = vld [vmem:[%s1 + $0x178] sm:$0xff]
      %v230 = vld [vmem:[%s1 + $0x180] sm:$0xff]
      %v231 = vld [vmem:[%s1 + $0x188] sm:$0xff]
      %v232 = vld [vmem:[%s1 + $0x190] sm:$0xff]
      %v233 = vld [vmem:[%s1 + $0x198] sm:$0xff]
      %v234 = vld [vmem:[%s1 + $0x1a0] sm:$0xff]
      %v235 = vld [vmem:[%s1 + $0x1a8] sm:$0xff]
      %v236 = vld [vmem:[%s1 + $0x1b0] sm:$0xff]
      %v237 = vld [vmem:[%s1 + $0x1b8] sm:$0xff]
      %v238 = vld [vmem:[%s1 + $0x1c0] sm:$0xff]
      %v239 = vld [vmem:[%s1 + $0x1c8] sm:$0xff]
      %v240 = vld [vmem:[%s1 + $0x1d0] sm:$0xff]
      %v241 = vld [vmem:[%s1 + $0x1d8] sm:$0xff]
      %v242 = vld [vmem:[%s1 + $0x1e0] sm:$0xff]
      %v243 = vld [vmem:[%s1 + $0x1e8] sm:$0xff]
      %v244 = vld [vmem:[%s1 + $0x1f0] sm:$0xff]
      %v245 = vld [vmem:[%s1 + $0x1f8] sm:$0xff]
      %v246 = vld [vmem:[%s1 + $0x200] sm:$0xff]
      %v247 = vld [vmem:[%s1 + $0x208] sm:$0xff]
      %v248 = vld [vmem:[%s1 + $0x210] sm:$0xff]
      %v249 = vld [vmem:[%s1 + $0x218] sm:$0xff]
      %v250 = vld [vmem:[%s1 + $0x220] sm:$0xff]
      %v251 = vld [vmem:[%s1 + $0x228] sm:$0xff]
      %v252 = vld [vmem:[%s1 + $0x230] sm:$0xff]
      %v253 = vld [vmem:[%s1 + $0x238] sm:$0xff]
      %v254 = vld [vmem:[%s1 + $0x240] sm:$0xff]
      %v255 = vld [vmem:[%s1 + $0x248] sm:$0xff]
      %v256 = vld [vmem:[%s1 + $0x250] sm:$0xff]
      %v257 = vld [vmem:[%s1 + $0x258] sm:$0xff]
      %v258 = vld [vmem:[%s1 + $0x260] sm:$0xff]
      %v259 = vld [vmem:[%s1 + $0x268] sm:$0xff]
      %v260 = vld [vmem:[%s1 + $0x270] sm:$0xff]
      %v261 = vld [vmem:[%s1 + $0x278] sm:$0xff]
      %v262 = vld [vmem:[%s1 + $0x280] sm:$0xff]
      %v263 = vld [vmem:[%s1 + $0x288] sm:$0xff]
      %v264 = vld [vmem:[%s1 + $0x290] sm:$0xff]
      %v265 = vld [vmem:[%s1 + $0x298] sm:$0xff]
      %v266 = vld [vmem:[%s1 + $0x2a0] sm:$0xff]
      %v267 = vld [vmem:[%s1 + $0x2a8] sm:$0xff]
      %v268 = vld [vmem:[%s1 + $0x2b0] sm:$0xff]
      %v269 = vld [vmem:[%s1 + $0x2b8] sm:$0xff]
      %v270 = vld [vmem:[%s1 + $0x2c0] sm:$0xff]
      %v271 = vld [vmem:[%s1 + $0x2c8] sm:$0xff]
      %v272 = vld [vmem:[%s1 + $0x2d0] sm:$0xff]
      %v273 = vld [vmem:[%s1 + $0x2d8] sm:$0xff]
      %v274 = vld [vmem:[%s1 + $0x2e0] sm:$0xff]
      %v275 = vld [vmem:[%s1 + $0x2e8] sm:$0xff]
      %v276 = vld [vmem:[%s1 + $0x2f0] sm:$0xff]
      %v277 = vld [vmem:[%s1 + $0x2f8] sm:$0xff]
      %v278 = vld [vmem:[%s1 + $0x300] sm:$0xff]
      %v279 = vld [vmem:[%s1 + $0x308] sm:$0xff]
      %v280 = vld [vmem:[%s1 + $0x310] sm:$0xff]
      %v281 = vld [vmem:[%s1 + $0x318] sm:$0xff]
      %v282 = vld [vmem:[%s1 + $0x320] sm:$0xff]
      %v283 = vld [vmem:[%s1 + $0x328] sm:$0xff]
      %v284 = vld [vmem:[%s1 + $0x330] sm:$0xff]
      %v285 = vld [vmem:[%s1 + $0x338] sm:$0xff]
      %v286 = vld [vmem:[%s1 + $0x340] sm:$0xff]
      %v287 = vld [vmem:[%s1 + $0x348] sm:$0xff]
      %v288 = vld [vmem:[%s1 + $0x350] sm:$0xff]
      %v289 = vld [vmem:[%s1 + $0x358] sm:$0xff]
      %v290 = vld [vmem:[%s1 + $0x360] sm:$0xff]
      %v291 = vld [vmem:[%s1 + $0x368] sm:$0xff]
      %v292 = vld [vmem:[%s1 + $0x370] sm:$0xff]
      %v293 = vld [vmem:[%s1 + $0x378] sm:$0xff]
      %v294 = vld [vmem:[%s1 + $0x380] sm:$0xff]
      %v295 = vld [vmem:[%s1 + $0x388] sm:$0xff]
      %v296 = vld [vmem:[%s1 + $0x390] sm:$0xff]
      %v297 = vld [vmem:[%s1 + $0x398] sm:$0xff]
      %v298 = vld [vmem:[%s1 + $0x3a0] sm:$0xff]
      %v299 = vld [vmem:[%s1 + $0x3a8] sm:$0xff]
      %v300 = vld [vmem:[%s1 + $0x3b0] sm:$0xff]
      %v301 = vld [vmem:[%s1 + $0x3b8] sm:$0xff]
      %v302 = vld [vmem:[%s1 + $0x3c0] sm:$0xff]
      %v303 = vld [vmem:[%s1 + $0x3c8] sm:$0xff]
      %v304 = vld [vmem:[%s1 + $0x3d0] sm:$0xff]
      %v305 = vld [vmem:[%s1 + $0x3d8] sm:$0xff]
      %v306 = vld [vmem:[%s1 + $0x3e0] sm:$0xff]
      %v307 = vld [vmem:[%s1 + $0x3e8] sm:$0xff]
      %v308 = vld [vmem:[%s1 + $0x3f0] sm:$0xff]
      %v309 = vld [vmem:[%s1 + $0x3f8] sm:$0xff]
      %v310 = vld [vmem:[%s1 + $0x400] sm:$0xff]
      %v311 = vld [vmem:[%s1 + $0x408] sm:$0xff]
      %v312 = vld [vmem:[%s1 + $0x410] sm:$0xff]
      %v313 = vld [vmem:[%s1 + $0x418] sm:$0xff]
      %v314 = vld [vmem:[%s1 + $0x420] sm:$0xff]
      %v315 = vld [vmem:[%s1 + $0x428] sm:$0xff]
      %v316 = vld [vmem:[%s1 + $0x430] sm:$0xff]
      %v317 = vld [vmem:[%s1 + $0x438] sm:$0xff]
      %v318 = vld [vmem:[%s1 + $0x440] sm:$0xff]
      %v319 = vld [vmem:[%s1 + $0x448] sm:$0xff]
      %v320 = vld [vmem:[%s1 + $0x450] sm:$0xff]
      %v321 = vld [vmem:[%s1 + $0x458] sm:$0xff]
      %v322 = vld [vmem:[%s1 + $0x460] sm:$0xff]
      %v323 = vld [vmem:[%s1 + $0x468] sm:$0xff]
      %v324 = vld [vmem:[%s1 + $0x470] sm:$0xff]
      %v325 = vld [vmem:[%s1 + $0x478] sm:$0xff]
      %v336 = vunpack.c.l.b16 %v172
      %v337 = vunpack.c.h.b16 %v172
      %v338 = vunpack.c.l.b16 %v173
      %v339 = vunpack.c.h.b16 %v173
      %v340 = vunpack.c.l.b16 %v174
      %v341 = vunpack.c.h.b16 %v174
      %v342 = vunpack.c.l.b16 %v175
      %v343 = vunpack.c.h.b16 %v175
      %v344 = vunpack.c.l.b16 %v176
      %v345 = vunpack.c.l.b16 %v177
      %v346 = vunpack.c.h.b16 %v177
      %v347 = vunpack.c.l.b16 %v178
      %v348 = vunpack.c.h.b16 %v178
      %v349 = vunpack.c.l.b16 %v179
      %v350 = vunpack.c.h.b16 %v179
      %v351 = vunpack.c.l.b16 %v180
      %v352 = vunpack.c.h.b16 %v180
      %v353 = vunpack.c.l.b16 %v181
      %v354 = vpack.c.b16 %v345, %v336
      %v355 = vpack.c.b16 %v346, %v337
      %v356 = vpack.c.b16 %v347, %v338
      %v357 = vpack.c.b16 %v348, %v339
      %v358 = vpack.c.b16 %v349, %v340
      %v359 = vpack.c.b16 %v350, %v341
      %v360 = vpack.c.b16 %v351, %v342
      %v361 = vpack.c.b16 %v352, %v343
      %v362 = vpack.c.b16 %v353, %v344
      %v516 = vunpack.c.l.b16 %v182
      %v517 = vunpack.c.h.b16 %v182
      %v518 = vunpack.c.l.b16 %v183
      %v519 = vunpack.c.h.b16 %v183
      %v520 = vunpack.c.l.b16 %v184
      %v521 = vunpack.c.h.b16 %v184
      %v522 = vunpack.c.l.b16 %v185
      %v523 = vunpack.c.h.b16 %v185
      %v524 = vunpack.c.l.b16 %v186
      %v525 = vunpack.c.h.b16 %v186
      %v526 = vunpack.c.l.b16 %v187
      %v527 = vunpack.c.h.b16 %v187
      %v528 = vunpack.c.l.b16 %v188
      %v529 = vunpack.c.h.b16 %v188
      %v530 = vunpack.c.l.b16 %v189
      %v531 = vunpack.c.h.b16 %v189
      %v532 = vunpack.c.l.b16 %v190
      %v533 = vunpack.c.h.b16 %v190
      %v534 = vunpack.c.l.b16 %v191
      %v535 = vunpack.c.h.b16 %v191
      %v536 = vunpack.c.l.b16 %v192
      %v537 = vunpack.c.h.b16 %v192
      %v538 = vunpack.c.l.b16 %v193
      %v539 = vunpack.c.h.b16 %v193
      %v540 = vunpack.c.l.b16 %v194
      %v541 = vunpack.c.h.b16 %v194
      %v542 = vunpack.c.l.b16 %v195
      %v543 = vunpack.c.h.b16 %v195
      %v544 = vunpack.c.l.b16 %v196
      %v545 = vunpack.c.h.b16 %v196
      %v546 = vunpack.c.l.b16 %v197
      %v547 = vunpack.c.h.b16 %v197
      %v548 = vunpack.c.l.b16 %v198
      %v549 = vunpack.c.h.b16 %v198
      %v550 = vunpack.c.l.b16 %v199
      %v551 = vunpack.c.h.b16 %v199
      %v552 = vunpack.c.l.b16 %v200
      %v553 = vunpack.c.h.b16 %v200
      %v554 = vunpack.c.l.b16 %v201
      %v555 = vunpack.c.h.b16 %v201
      %v556 = vunpack.c.l.b16 %v202
      %v557 = vunpack.c.h.b16 %v202
      %v558 = vunpack.c.l.b16 %v203
      %v559 = vunpack.c.h.b16 %v203
      %v560 = vunpack.c.l.b16 %v204
      %v561 = vunpack.c.h.b16 %v204
      %v562 = vunpack.c.l.b16 %v205
      %v563 = vunpack.c.h.b16 %v205
      %v564 = vunpack.c.l.b16 %v206
      %v565 = vunpack.c.h.b16 %v206
      %v566 = vunpack.c.l.b16 %v207
      %v567 = vunpack.c.h.b16 %v207
      %v568 = vunpack.c.l.b16 %v208
      %v569 = vunpack.c.h.b16 %v208
      %v570 = vunpack.c.l.b16 %v209
      %v571 = vunpack.c.h.b16 %v209
      %v572 = vunpack.c.l.b16 %v210
      %v573 = vunpack.c.h.b16 %v210
      %v574 = vunpack.c.l.b16 %v211
      %v575 = vunpack.c.h.b16 %v211
      %v576 = vunpack.c.l.b16 %v212
      %v577 = vunpack.c.h.b16 %v212
      %v578 = vunpack.c.l.b16 %v213
      %v579 = vunpack.c.h.b16 %v213
      %v580 = vunpack.c.l.b16 %v214
      %v581 = vunpack.c.h.b16 %v214
      %v582 = vunpack.c.l.b16 %v215
      %v583 = vunpack.c.h.b16 %v215
      %v584 = vunpack.c.l.b16 %v216
      %v585 = vunpack.c.h.b16 %v216
      %v586 = vunpack.c.l.b16 %v217
      %v587 = vunpack.c.h.b16 %v217
      %v588 = vunpack.c.l.b16 %v218
      %v589 = vunpack.c.h.b16 %v218
      %v590 = vunpack.c.l.b16 %v219
      %v591 = vunpack.c.h.b16 %v219
      %v592 = vunpack.c.l.b16 %v220
      %v593 = vunpack.c.h.b16 %v220
      %v594 = vunpack.c.l.b16 %v221
      %v595 = vunpack.c.h.b16 %v221
      %v596 = vunpack.c.l.b16 %v222
      %v597 = vunpack.c.h.b16 %v222
      %v598 = vunpack.c.l.b16 %v223
      %v599 = vunpack.c.h.b16 %v223
      %v600 = vunpack.c.l.b16 %v224
      %v601 = vunpack.c.h.b16 %v224
      %v602 = vunpack.c.l.b16 %v225
      %v603 = vunpack.c.h.b16 %v225
      %v604 = vunpack.c.l.b16 %v226
      %v605 = vunpack.c.h.b16 %v226
      %v606 = vunpack.c.l.b16 %v227
      %v607 = vunpack.c.h.b16 %v227
      %v608 = vunpack.c.l.b16 %v228
      %v609 = vunpack.c.h.b16 %v228
      %v610 = vunpack.c.l.b16 %v229
      %v611 = vunpack.c.h.b16 %v229
      %v612 = vunpack.c.l.b16 %v230
      %v613 = vunpack.c.h.b16 %v230
      %v614 = vunpack.c.l.b16 %v231
      %v615 = vunpack.c.h.b16 %v231
      %v616 = vunpack.c.l.b16 %v232
      %v617 = vunpack.c.h.b16 %v232
      %v618 = vunpack.c.l.b16 %v233
      %v619 = vunpack.c.h.b16 %v233
      %v620 = vunpack.c.l.b16 %v234
      %v621 = vunpack.c.h.b16 %v234
      %v622 = vunpack.c.l.b16 %v235
      %v623 = vunpack.c.h.b16 %v235
      %v624 = vunpack.c.l.b16 %v236
      %v625 = vunpack.c.h.b16 %v236
      %v626 = vunpack.c.l.b16 %v237
      %v627 = vunpack.c.h.b16 %v237
      %v628 = vunpack.c.l.b16 %v238
      %v629 = vunpack.c.h.b16 %v238
      %v630 = vunpack.c.l.b16 %v239
      %v631 = vunpack.c.h.b16 %v239
      %v632 = vunpack.c.l.b16 %v240
      %v633 = vunpack.c.h.b16 %v240
      %v634 = vunpack.c.l.b16 %v241
      %v635 = vunpack.c.h.b16 %v241
      %v636 = vunpack.c.l.b16 %v242
      %v637 = vunpack.c.h.b16 %v242
      %v638 = vunpack.c.l.b16 %v243
      %v639 = vunpack.c.h.b16 %v243
      %v640 = vunpack.c.l.b16 %v244
      %v641 = vunpack.c.h.b16 %v244
      %v642 = vunpack.c.l.b16 %v245
      %v643 = vunpack.c.h.b16 %v245
      %v644 = vunpack.c.l.b16 %v246
      %v645 = vunpack.c.h.b16 %v246
      %v646 = vunpack.c.l.b16 %v247
      %v647 = vunpack.c.h.b16 %v247
      %v648 = vunpack.c.l.b16 %v248
      %v649 = vunpack.c.h.b16 %v248
      %v650 = vunpack.c.l.b16 %v249
      %v651 = vunpack.c.h.b16 %v249
      %v652 = vunpack.c.l.b16 %v250
      %v653 = vunpack.c.h.b16 %v250
      %v654 = vunpack.c.l.b16 %v251
      %v655 = vunpack.c.h.b16 %v251
      %v656 = vunpack.c.l.b16 %v252
      %v657 = vunpack.c.h.b16 %v252
      %v658 = vunpack.c.l.b16 %v253
      %v659 = vunpack.c.h.b16 %v253
      %v660 = vunpack.c.l.b16 %v254
      %v661 = vunpack.c.h.b16 %v254
      %v662 = vunpack.c.l.b16 %v255
      %v663 = vunpack.c.h.b16 %v255
      %v664 = vunpack.c.l.b16 %v256
      %v665 = vunpack.c.h.b16 %v256
      %v666 = vunpack.c.l.b16 %v257
      %v667 = vunpack.c.h.b16 %v257
      %v668 = vunpack.c.l.b16 %v258
      %v669 = vunpack.c.h.b16 %v258
      %v670 = vunpack.c.l.b16 %v259
      %v671 = vunpack.c.h.b16 %v259
      %v672 = vunpack.c.l.b16 %v260
      %v673 = vunpack.c.h.b16 %v260
      %v674 = vunpack.c.l.b16 %v261
      %v675 = vunpack.c.h.b16 %v261
      %v676 = vunpack.c.l.b16 %v262
      %v677 = vunpack.c.h.b16 %v262
      %v678 = vunpack.c.l.b16 %v263
      %v679 = vunpack.c.h.b16 %v263
      %v680 = vunpack.c.l.b16 %v264
      %v681 = vunpack.c.h.b16 %v264
      %v682 = vunpack.c.l.b16 %v265
      %v683 = vunpack.c.h.b16 %v265
      %v684 = vunpack.c.l.b16 %v266
      %v685 = vunpack.c.h.b16 %v266
      %v686 = vunpack.c.l.b16 %v267
      %v687 = vunpack.c.h.b16 %v267
      %v688 = vunpack.c.l.b16 %v268
      %v689 = vunpack.c.h.b16 %v268
      %v690 = vunpack.c.l.b16 %v269
      %v691 = vunpack.c.h.b16 %v269
      %v692 = vunpack.c.l.b16 %v270
      %v693 = vunpack.c.h.b16 %v270
      %v694 = vunpack.c.l.b16 %v271
      %v695 = vunpack.c.h.b16 %v271
      %v696 = vunpack.c.l.b16 %v272
      %v697 = vunpack.c.h.b16 %v272
      %v698 = vunpack.c.l.b16 %v273
      %v699 = vunpack.c.h.b16 %v273
      %v700 = vunpack.c.l.b16 %v274
      %v701 = vunpack.c.h.b16 %v274
      %v702 = vunpack.c.l.b16 %v275
      %v703 = vunpack.c.h.b16 %v275
      %v704 = vunpack.c.l.b16 %v276
      %v705 = vunpack.c.h.b16 %v276
      %v706 = vunpack.c.l.b16 %v277
      %v707 = vunpack.c.h.b16 %v277
      %v708 = vunpack.c.l.b16 %v278
      %v709 = vunpack.c.h.b16 %v278
      %v710 = vunpack.c.l.b16 %v279
      %v711 = vunpack.c.h.b16 %v279
      %v712 = vunpack.c.l.b16 %v280
      %v713 = vunpack.c.h.b16 %v280
      %v714 = vunpack.c.l.b16 %v281
      %v715 = vunpack.c.h.b16 %v281
      %v716 = vunpack.c.l.b16 %v282
      %v717 = vunpack.c.h.b16 %v282
      %v718 = vunpack.c.l.b16 %v283
      %v719 = vunpack.c.h.b16 %v283
      %v720 = vunpack.c.l.b16 %v284
      %v721 = vunpack.c.h.b16 %v284
      %v722 = vunpack.c.l.b16 %v285
      %v723 = vunpack.c.h.b16 %v285
      %v724 = vunpack.c.l.b16 %v286
      %v725 = vunpack.c.h.b16 %v286
      %v726 = vunpack.c.l.b16 %v287
      %v727 = vunpack.c.h.b16 %v287
      %v728 = vunpack.c.l.b16 %v288
      %v729 = vunpack.c.h.b16 %v288
      %v730 = vunpack.c.l.b16 %v289
      %v731 = vunpack.c.h.b16 %v289
      %v732 = vunpack.c.l.b16 %v290
      %v733 = vunpack.c.h.b16 %v290
      %v734 = vunpack.c.l.b16 %v291
      %v735 = vunpack.c.h.b16 %v291
      %v736 = vunpack.c.l.b16 %v292
      %v737 = vunpack.c.h.b16 %v292
      %v738 = vunpack.c.l.b16 %v293
      %v739 = vunpack.c.h.b16 %v293
      %v740 = vunpack.c.l.b16 %v294
      %v741 = vunpack.c.h.b16 %v294
      %v742 = vunpack.c.l.b16 %v295
      %v743 = vunpack.c.h.b16 %v295
      %v744 = vunpack.c.l.b16 %v296
      %v745 = vunpack.c.h.b16 %v296
      %v746 = vunpack.c.l.b16 %v297
      %v747 = vunpack.c.h.b16 %v297
      %v748 = vunpack.c.l.b16 %v298
      %v749 = vunpack.c.h.b16 %v298
      %v750 = vunpack.c.l.b16 %v299
      %v751 = vunpack.c.h.b16 %v299
      %v752 = vunpack.c.l.b16 %v300
      %v753 = vunpack.c.h.b16 %v300
      %v754 = vunpack.c.l.b16 %v301
      %v755 = vunpack.c.h.b16 %v301
      %v756 = vunpack.c.l.b16 %v302
      %v757 = vunpack.c.h.b16 %v302
      %v758 = vunpack.c.l.b16 %v303
      %v759 = vunpack.c.h.b16 %v303
      %v760 = vunpack.c.l.b16 %v304
      %v761 = vunpack.c.h.b16 %v304
      %v762 = vunpack.c.l.b16 %v305
      %v763 = vunpack.c.h.b16 %v305
      %v764 = vunpack.c.l.b16 %v306
      %v765 = vunpack.c.h.b16 %v306
      %v766 = vunpack.c.l.b16 %v307
      %v767 = vunpack.c.h.b16 %v307
      %v768 = vunpack.c.l.b16 %v308
      %v769 = vunpack.c.h.b16 %v308
      %v770 = vunpack.c.l.b16 %v309
      %v771 = vunpack.c.h.b16 %v309
      %v772 = vunpack.c.l.b16 %v310
      %v773 = vunpack.c.h.b16 %v310
      %v774 = vunpack.c.l.b16 %v311
      %v775 = vunpack.c.h.b16 %v311
      %v776 = vunpack.c.l.b16 %v312
      %v777 = vunpack.c.h.b16 %v312
      %v778 = vunpack.c.l.b16 %v313
      %v779 = vunpack.c.h.b16 %v313
      %v780 = vunpack.c.l.b16 %v314
      %v781 = vunpack.c.h.b16 %v314
      %v782 = vunpack.c.l.b16 %v315
      %v783 = vunpack.c.h.b16 %v315
      %v784 = vunpack.c.l.b16 %v316
      %v785 = vunpack.c.h.b16 %v316
      %v786 = vunpack.c.l.b16 %v317
      %v787 = vunpack.c.h.b16 %v317
      %v788 = vunpack.c.l.b16 %v318
      %v789 = vunpack.c.h.b16 %v318
      %v790 = vunpack.c.l.b16 %v319
      %v791 = vunpack.c.h.b16 %v319
      %v792 = vunpack.c.l.b16 %v320
      %v793 = vunpack.c.h.b16 %v320
      %v794 = vunpack.c.l.b16 %v321
      %v795 = vunpack.c.h.b16 %v321
      %v796 = vunpack.c.l.b16 %v322
      %v797 = vunpack.c.h.b16 %v322
      %v798 = vunpack.c.l.b16 %v323
      %v799 = vunpack.c.h.b16 %v323
      %v800 = vunpack.c.l.b16 %v324
      %v801 = vunpack.c.h.b16 %v324
      %v802 = vunpack.c.l.b16 %v325
      %v803 = vunpack.c.h.b16 %v325
      %v804 = vpack.c.b16 %v518, %v516
      %v805 = vpack.c.b16 %v519, %v517
      %v806 = vpack.c.b16 %v522, %v520
      %v807 = vpack.c.b16 %v523, %v521
      %v808 = vpack.c.b16 %v526, %v524
      %v809 = vpack.c.b16 %v527, %v525
      %v810 = vpack.c.b16 %v530, %v528
      %v811 = vpack.c.b16 %v531, %v529
      %v812 = vpack.c.b16 %v534, %v532
      %v813 = vpack.c.b16 %v535, %v533
      %v814 = vpack.c.b16 %v538, %v536
      %v815 = vpack.c.b16 %v539, %v537
      %v816 = vpack.c.b16 %v542, %v540
      %v817 = vpack.c.b16 %v543, %v541
      %v818 = vpack.c.b16 %v546, %v544
      %v819 = vpack.c.b16 %v547, %v545
      %v820 = vpack.c.b16 %v550, %v548
      %v821 = vpack.c.b16 %v551, %v549
      %v822 = vpack.c.b16 %v554, %v552
      %v823 = vpack.c.b16 %v555, %v553
      %v824 = vpack.c.b16 %v558, %v556
      %v825 = vpack.c.b16 %v559, %v557
      %v826 = vpack.c.b16 %v562, %v560
      %v827 = vpack.c.b16 %v563, %v561
      %v828 = vpack.c.b16 %v566, %v564
      %v829 = vpack.c.b16 %v567, %v565
      %v830 = vpack.c.b16 %v570, %v568
      %v831 = vpack.c.b16 %v571, %v569
      %v832 = vpack.c.b16 %v574, %v572
      %v833 = vpack.c.b16 %v575, %v573
      %v834 = vpack.c.b16 %v578, %v576
      %v835 = vpack.c.b16 %v579, %v577
      %v836 = vpack.c.b16 %v582, %v580
      %v837 = vpack.c.b16 %v583, %v581
      %v838 = vpack.c.b16 %v586, %v584
      %v839 = vpack.c.b16 %v587, %v585
      %v840 = vpack.c.b16 %v590, %v588
      %v841 = vpack.c.b16 %v591, %v589
      %v842 = vpack.c.b16 %v594, %v592
      %v843 = vpack.c.b16 %v595, %v593
      %v844 = vpack.c.b16 %v598, %v596
      %v845 = vpack.c.b16 %v599, %v597
      %v846 = vpack.c.b16 %v602, %v600
      %v847 = vpack.c.b16 %v603, %v601
      %v848 = vpack.c.b16 %v606, %v604
      %v849 = vpack.c.b16 %v607, %v605
      %v850 = vpack.c.b16 %v610, %v608
      %v851 = vpack.c.b16 %v611, %v609
      %v852 = vpack.c.b16 %v614, %v612
      %v853 = vpack.c.b16 %v615, %v613
      %v854 = vpack.c.b16 %v618, %v616
      %v855 = vpack.c.b16 %v619, %v617
      %v856 = vpack.c.b16 %v622, %v620
      %v857 = vpack.c.b16 %v623, %v621
      %v858 = vpack.c.b16 %v626, %v624
      %v859 = vpack.c.b16 %v627, %v625
      %v860 = vpack.c.b16 %v630, %v628
      %v861 = vpack.c.b16 %v631, %v629
      %v862 = vpack.c.b16 %v634, %v632
      %v863 = vpack.c.b16 %v635, %v633
      %v864 = vpack.c.b16 %v638, %v636
      %v865 = vpack.c.b16 %v639, %v637
      %v866 = vpack.c.b16 %v642, %v640
      %v867 = vpack.c.b16 %v643, %v641
      %v868 = vpack.c.b16 %v646, %v644
      %v869 = vpack.c.b16 %v647, %v645
      %v870 = vpack.c.b16 %v650, %v648
      %v871 = vpack.c.b16 %v651, %v649
      %v872 = vpack.c.b16 %v654, %v652
      %v873 = vpack.c.b16 %v655, %v653
      %v874 = vpack.c.b16 %v658, %v656
      %v875 = vpack.c.b16 %v659, %v657
      %v876 = vpack.c.b16 %v662, %v660
      %v877 = vpack.c.b16 %v663, %v661
      %v878 = vpack.c.b16 %v666, %v664
      %v879 = vpack.c.b16 %v667, %v665
      %v880 = vpack.c.b16 %v670, %v668
      %v881 = vpack.c.b16 %v671, %v669
      %v882 = vpack.c.b16 %v674, %v672
      %v883 = vpack.c.b16 %v675, %v673
      %v884 = vpack.c.b16 %v678, %v676
      %v885 = vpack.c.b16 %v679, %v677
      %v886 = vpack.c.b16 %v682, %v680
      %v887 = vpack.c.b16 %v683, %v681
      %v888 = vpack.c.b16 %v686, %v684
      %v889 = vpack.c.b16 %v687, %v685
      %v890 = vpack.c.b16 %v690, %v688
      %v891 = vpack.c.b16 %v691, %v689
      %v892 = vpack.c.b16 %v694, %v692
      %v893 = vpack.c.b16 %v695, %v693
      %v894 = vpack.c.b16 %v698, %v696
      %v895 = vpack.c.b16 %v699, %v697
      %v896 = vpack.c.b16 %v702, %v700
      %v897 = vpack.c.b16 %v703, %v701
      %v898 = vpack.c.b16 %v706, %v704
      %v899 = vpack.c.b16 %v707, %v705
      %v900 = vpack.c.b16 %v710, %v708
      %v901 = vpack.c.b16 %v711, %v709
      %v902 = vpack.c.b16 %v714, %v712
      %v903 = vpack.c.b16 %v715, %v713
      %v904 = vpack.c.b16 %v718, %v716
      %v905 = vpack.c.b16 %v719, %v717
      %v906 = vpack.c.b16 %v722, %v720
      %v907 = vpack.c.b16 %v723, %v721
      %v908 = vpack.c.b16 %v726, %v724
      %v909 = vpack.c.b16 %v727, %v725
      %v910 = vpack.c.b16 %v730, %v728
      %v911 = vpack.c.b16 %v731, %v729
      %v912 = vpack.c.b16 %v734, %v732
      %v913 = vpack.c.b16 %v735, %v733
      %v914 = vpack.c.b16 %v738, %v736
      %v915 = vpack.c.b16 %v739, %v737
      %v916 = vpack.c.b16 %v742, %v740
      %v917 = vpack.c.b16 %v743, %v741
      %v918 = vpack.c.b16 %v746, %v744
      %v919 = vpack.c.b16 %v747, %v745
      %v920 = vpack.c.b16 %v750, %v748
      %v921 = vpack.c.b16 %v751, %v749
      %v922 = vpack.c.b16 %v754, %v752
      %v923 = vpack.c.b16 %v755, %v753
      %v924 = vpack.c.b16 %v758, %v756
      %v925 = vpack.c.b16 %v759, %v757
      %v926 = vpack.c.b16 %v762, %v760
      %v927 = vpack.c.b16 %v763, %v761
      %v928 = vpack.c.b16 %v766, %v764
      %v929 = vpack.c.b16 %v767, %v765
      %v930 = vpack.c.b16 %v770, %v768
      %v931 = vpack.c.b16 %v771, %v769
      %v932 = vpack.c.b16 %v774, %v772
      %v933 = vpack.c.b16 %v775, %v773
      %v934 = vpack.c.b16 %v778, %v776
      %v935 = vpack.c.b16 %v779, %v777
      %v936 = vpack.c.b16 %v782, %v780
      %v937 = vpack.c.b16 %v783, %v781
      %v938 = vpack.c.b16 %v786, %v784
      %v939 = vpack.c.b16 %v787, %v785
      %v940 = vpack.c.b16 %v790, %v788
      %v941 = vpack.c.b16 %v791, %v789
      %v942 = vpack.c.b16 %v794, %v792
      %v943 = vpack.c.b16 %v795, %v793
      %v944 = vpack.c.b16 %v798, %v796
      %v945 = vpack.c.b16 %v799, %v797
      %v946 = vpack.c.b16 %v802, %v800
      %v947 = vpack.c.b16 %v803, %v801
      %1092 = vmatprep.subr.bf16.mxu0 %v805
      %1093 = vmatpush1.bf16.msra.mxu0 %v804
      %1094 = vmatprep.subr.bf16.mxu0 %v807
      %1095 = vmatpush1.bf16.msra.mxu0 %v806
      %1096 = vmatprep.subr.bf16.mxu0 %v809
      %1097 = vmatpush1.bf16.msra.mxu0 %v808
      %1098 = vmatprep.subr.bf16.mxu0 %v811
      %1099 = vmatpush1.bf16.msra.mxu0 %v810
      %1100 = vmatprep.subr.bf16.mxu0 %v813
      %1101 = vmatpush1.bf16.msra.mxu0 %v812
      %1102 = vmatprep.subr.bf16.mxu0 %v815
      %1103 = vmatpush1.bf16.msra.mxu0 %v814
      %1104 = vmatprep.subr.bf16.mxu0 %v817
      %1105 = vmatpush1.bf16.msra.mxu0 %v816
      %1106 = vmatprep.subr.bf16.mxu0 %v819
      %1107 = vmatpush1.bf16.msra.mxu0 %v818
      %1108 = vmatprep.subr.bf16.mxu0 %v821
      %1109 = vmatpush1.bf16.msra.mxu0 %v820
      %1110 = vmatprep.subr.bf16.mxu0 %v823
      %1111 = vmatpush1.bf16.msra.mxu0 %v822
      %1112 = vmatprep.subr.bf16.mxu0 %v825
      %1113 = vmatpush1.bf16.msra.mxu0 %v824
      %1114 = vmatprep.subr.bf16.mxu0 %v827
      %1115 = vmatpush1.bf16.msra.mxu0 %v826
      %1116 = vmatprep.subr.bf16.mxu0 %v829
      %1117 = vmatpush1.bf16.msra.mxu0 %v828
      %1118 = vmatprep.subr.bf16.mxu0 %v831
      %1119 = vmatpush1.bf16.msra.mxu0 %v830
      %1120 = vmatprep.subr.bf16.mxu0 %v833
      %1121 = vmatpush1.bf16.msra.mxu0 %v832
      %1122 = vmatprep.subr.bf16.mxu0 %v835
      %1123 = vmatpush1.bf16.msra.mxu0 %v834
      %1124 = vmatprep.mubr.bf16.mxu0 %v355
      %1125 = vmatmul.mubr.bf16.gmra.mrb[0].mxu0 %v354
      %v1126 = vpop.f32.mrb[0].mxu0
      %v1127 = vadd.f32 0.0, %v1126
      %v1128 = vpop.f32.mrb[0].mxu0
      %v1129 = vadd.f32 0.0, %v1128
      %v1130 = vpop.f32.mrb[0].mxu0
      %v1131 = vadd.f32 0.0, %v1130
      %v1132 = vpop.f32.mrb[0].mxu0
      %v1133 = vadd.f32 0.0, %v1132
      %1134 = vdwg.mxu0
      %1135 = vmatprep.subr.bf16.mxu0 %v837
      %1136 = vmatpush1.bf16.msra.mxu0 %v836
      %1137 = vmatprep.subr.bf16.mxu0 %v839
      %1138 = vmatpush1.bf16.msra.mxu0 %v838
      %1139 = vmatprep.subr.bf16.mxu0 %v841
      %1140 = vmatpush1.bf16.msra.mxu0 %v840
      %1141 = vmatprep.subr.bf16.mxu0 %v843
      %1142 = vmatpush1.bf16.msra.mxu0 %v842
      %1143 = vmatprep.subr.bf16.mxu0 %v845
      %1144 = vmatpush1.bf16.msra.mxu0 %v844
      %1145 = vmatprep.subr.bf16.mxu0 %v847
      %1146 = vmatpush1.bf16.msra.mxu0 %v846
      %1147 = vmatprep.subr.bf16.mxu0 %v849
      %1148 = vmatpush1.bf16.msra.mxu0 %v848
      %1149 = vmatprep.subr.bf16.mxu0 %v851
      %1150 = vmatpush1.bf16.msra.mxu0 %v850
      %1151 = vmatprep.subr.bf16.mxu0 %v853
      %1152 = vmatpush1.bf16.msra.mxu0 %v852
      %1153 = vmatprep.subr.bf16.mxu0 %v855
      %1154 = vmatpush1.bf16.msra.mxu0 %v854
      %1155 = vmatprep.subr.bf16.mxu0 %v857
      %1156 = vmatpush1.bf16.msra.mxu0 %v856
      %1157 = vmatprep.subr.bf16.mxu0 %v859
      %1158 = vmatpush1.bf16.msra.mxu0 %v858
      %1159 = vmatprep.subr.bf16.mxu0 %v861
      %1160 = vmatpush1.bf16.msra.mxu0 %v860
      %1161 = vmatprep.subr.bf16.mxu0 %v863
      %1162 = vmatpush1.bf16.msra.mxu0 %v862
      %1163 = vmatprep.subr.bf16.mxu0 %v865
      %1164 = vmatpush1.bf16.msra.mxu0 %v864
      %1165 = vmatprep.subr.bf16.mxu0 %v867
      %1166 = vmatpush1.bf16.msra.mxu0 %v866
      %1167 = vmatprep.mubr.bf16.mxu0 %v357
      %1168 = vmatmul.mubr.bf16.gmra.mrb[0].mxu0 %v356
      %v1169 = vpop.f32.mrb[0].mxu0
      %v1170 = vadd.f32 %v1127, %v1169
      %v1171 = vpop.f32.mrb[0].mxu0
      %v1172 = vadd.f32 %v1129, %v1171
      %v1173 = vpop.f32.mrb[0].mxu0
      %v1174 = vadd.f32 %v1131, %v1173
      %v1175 = vpop.f32.mrb[0].mxu0
      %v1176 = vadd.f32 %v1133, %v1175
      %1177 = vdwg.mxu0
      %1178 = vmatprep.subr.bf16.mxu0 %v869
      %1179 = vmatpush1.bf16.msra.mxu0 %v868
      %1180 = vmatprep.subr.bf16.mxu0 %v871
      %1181 = vmatpush1.bf16.msra.mxu0 %v870
      %1182 = vmatprep.subr.bf16.mxu0 %v873
      %1183 = vmatpush1.bf16.msra.mxu0 %v872
      %1184 = vmatprep.subr.bf16.mxu0 %v875
      %1185 = vmatpush1.bf16.msra.mxu0 %v874
      %1186 = vmatprep.subr.bf16.mxu0 %v877
      %1187 = vmatpush1.bf16.msra.mxu0 %v876
      %1188 = vmatprep.subr.bf16.mxu0 %v879
      %1189 = vmatpush1.bf16.msra.mxu0 %v878
      %1190 = vmatprep.subr.bf16.mxu0 %v881
      %1191 = vmatpush1.bf16.msra.mxu0 %v880
      %1192 = vmatprep.subr.bf16.mxu0 %v883
      %1193 = vmatpush1.bf16.msra.mxu0 %v882
      %1194 = vmatprep.subr.bf16.mxu0 %v885
      %1195 = vmatpush1.bf16.msra.mxu0 %v884
      %1196 = vmatprep.subr.bf16.mxu0 %v887
      %1197 = vmatpush1.bf16.msra.mxu0 %v886
      %1198 = vmatprep.subr.bf16.mxu0 %v889
      %1199 = vmatpush1.bf16.msra.mxu0 %v888
      %1200 = vmatprep.subr.bf16.mxu0 %v891
      %1201 = vmatpush1.bf16.msra.mxu0 %v890
      %1202 = vmatprep.subr.bf16.mxu0 %v893
      %1203 = vmatpush1.bf16.msra.mxu0 %v892
      %1204 = vmatprep.subr.bf16.mxu0 %v895
      %1205 = vmatpush1.bf16.msra.mxu0 %v894
      %1206 = vmatprep.subr.bf16.mxu0 %v897
      %1207 = vmatpush1.bf16.msra.mxu0 %v896
      %1208 = vmatprep.subr.bf16.mxu0 %v899
      %1209 = vmatpush1.bf16.msra.mxu0 %v898
      %1210 = vmatprep.mubr.bf16.mxu0 %v359
      %1211 = vmatmul.mubr.bf16.gmra.mrb[0].mxu0 %v358
      %v1212 = vpop.f32.mrb[0].mxu0
      %v1213 = vadd.f32 %v1170, %v1212
      %v1214 = vpop.f32.mrb[0].mxu0
      %v1215 = vadd.f32 %v1172, %v1214
      %v1216 = vpop.f32.mrb[0].mxu0
      %v1217 = vadd.f32 %v1174, %v1216
      %v1218 = vpop.f32.mrb[0].mxu0
      %v1219 = vadd.f32 %v1176, %v1218
      %1220 = vdwg.mxu0
      %1221 = vmatprep.subr.bf16.mxu0 %v901
      %1222 = vmatpush1.bf16.msra.mxu0 %v900
      %1223 = vmatprep.subr.bf16.mxu0 %v903
      %1224 = vmatpush1.bf16.msra.mxu0 %v902
      %1225 = vmatprep.subr.bf16.mxu0 %v905
      %1226 = vmatpush1.bf16.msra.mxu0 %v904
      %1227 = vmatprep.subr.bf16.mxu0 %v907
      %1228 = vmatpush1.bf16.msra.mxu0 %v906
      %1229 = vmatprep.subr.bf16.mxu0 %v909
      %1230 = vmatpush1.bf16.msra.mxu0 %v908
      %1231 = vmatprep.subr.bf16.mxu0 %v911
      %1232 = vmatpush1.bf16.msra.mxu0 %v910
      %1233 = vmatprep.subr.bf16.mxu0 %v913
      %1234 = vmatpush1.bf16.msra.mxu0 %v912
      %1235 = vmatprep.subr.bf16.mxu0 %v915
      %1236 = vmatpush1.bf16.msra.mxu0 %v914
      %1237 = vmatprep.subr.bf16.mxu0 %v917
      %1238 = vmatpush1.bf16.msra.mxu0 %v916
      %1239 = vmatprep.subr.bf16.mxu0 %v919
      %1240 = vmatpush1.bf16.msra.mxu0 %v918
      %1241 = vmatprep.subr.bf16.mxu0 %v921
      %1242 = vmatpush1.bf16.msra.mxu0 %v920
      %1243 = vmatprep.subr.bf16.mxu0 %v923
      %1244 = vmatpush1.bf16.msra.mxu0 %v922
      %1245 = vmatprep.subr.bf16.mxu0 %v925
      %1246 = vmatpush1.bf16.msra.mxu0 %v924
      %1247 = vmatprep.subr.bf16.mxu0 %v927
      %1248 = vmatpush1.bf16.msra.mxu0 %v926
      %1249 = vmatprep.subr.bf16.mxu0 %v929
      %1250 = vmatpush1.bf16.msra.mxu0 %v928
      %1251 = vmatprep.subr.bf16.mxu0 %v931
      %1252 = vmatpush1.bf16.msra.mxu0 %v930
      %1253 = vmatprep.mubr.bf16.mxu0 %v361
      %1254 = vmatmul.mubr.bf16.gmra.mrb[0].mxu0 %v360
      %v1255 = vpop.f32.mrb[0].mxu0
      %v1256 = vadd.f32 %v1213, %v1255
      %v1257 = vpop.f32.mrb[0].mxu0
      %v1258 = vadd.f32 %v1215, %v1257
      %v1259 = vpop.f32.mrb[0].mxu0
      %v1260 = vadd.f32 %v1217, %v1259
      %v1261 = vpop.f32.mrb[0].mxu0
      %v1262 = vadd.f32 %v1219, %v1261
      %1263 = vdwg.mxu0
      %1264 = vmatprep.subr.bf16.mxu0 %v933
      %1265 = vmatpush1.bf16.msra.mxu0 %v932
      %1266 = vmatprep.subr.bf16.mxu0 %v935
      %1267 = vmatpush1.bf16.msra.mxu0 %v934
      %1268 = vmatprep.subr.bf16.mxu0 %v937
      %1269 = vmatpush1.bf16.msra.mxu0 %v936
      %1270 = vmatprep.subr.bf16.mxu0 %v939
      %1271 = vmatpush1.bf16.msra.mxu0 %v938
      %1272 = vmatprep.subr.bf16.mxu0 %v941
      %1273 = vmatpush1.bf16.msra.mxu0 %v940
      %1274 = vmatprep.subr.bf16.mxu0 %v943
      %1275 = vmatpush1.bf16.msra.mxu0 %v942
      %1276 = vmatprep.subr.bf16.mxu0 %v945
      %1277 = vmatpush1.bf16.msra.mxu0 %v944
      %1278 = vmatprep.subr.bf16.mxu0 %v947
      %1279 = vmatpush1.bf16.msra.mxu0 %v946
      %1280 = vmatprep.subr.bf16.mxu0 0
      %1281 = vmatpush1.bf16.msra.mxu0 0
      %1282 = vmatprep.subr.bf16.mxu0 0
      %1283 = vmatpush1.bf16.msra.mxu0 0
      %1284 = vmatprep.subr.bf16.mxu0 0
      %1285 = vmatpush1.bf16.msra.mxu0 0
      %1286 = vmatprep.subr.bf16.mxu0 0
      %1287 = vmatpush1.bf16.msra.mxu0 0
      %1288 = vmatprep.subr.bf16.mxu0 0
      %1289 = vmatpush1.bf16.msra.mxu0 0
      %1290 = vmatprep.subr.bf16.mxu0 0
      %1291 = vmatpush1.bf16.msra.mxu0 0
      %1292 = vmatprep.subr.bf16.mxu0 0
      %1293 = vmatpush1.bf16.msra.mxu0 0
      %1294 = vmatprep.subr.bf16.mxu0 0
      %1295 = vmatpush1.bf16.msra.mxu0 0
      %1296 = vmatprep.mubr.bf16.mxu0 0
      %1297 = vmatmul.mubr.bf16.gmra.mrb[0].mxu0 %v362
      %v1298 = vpop.f32.mrb[0].mxu0
      %v1299 = vadd.f32 %v1256, %v1298
      %v1300 = vpop.f32.mrb[0].mxu0
      %v1301 = vadd.f32 %v1258, %v1300
      %v1302 = vpop.f32.mrb[0].mxu0
      %v1303 = vadd.f32 %v1260, %v1302
      %v1304 = vpop.f32.mrb[0].mxu0
      %v1305 = vadd.f32 %v1262, %v1304
      %1306 = vdwg.mxu0
      %1309 = vrot.lane.b32.xlu0 %v1299, 64
      %v1310 = vpop.permute.xlu0 %1309
      %1311 = vrot.lane.b32.xlu0 %v1303, 64
      %v1312 = vpop.permute.xlu0 %1311
      %v1315 = vmax.f32 %v1299, %v1310
      %v1316 = vmax.f32 %v1303, %v1312
      %1319 = vrot.lane.b32.xlu0 %v1301, 64
      %v1320 = vpop.permute.xlu0 %1319
      %1321 = vrot.lane.b32.xlu0 %v1305, 64
      %v1322 = vpop.permute.xlu0 %1321
      %v1325 = vmax.f32 %v1301, %v1320
      %v1326 = vmax.f32 %v1305, %v1322
      %v1327 = vmax.f32 %v1315, %v1325
      %v1328 = vmax.f32 %v1316, %v1326
      %v1329 = vld [vmem:[%s2] sm:$0x1]
      %v1331 = vlaneseq
      %v1332 = vshrl.u32 %v1331, 7
      %v1333 = vsub.s32 0, %v1332
      %v1334 = vrot.slane %v1329, %v1333
      %v1336 = vadd.f32 %v1327, %v1334
      %v1337 = vadd.f32 %v1328, %v1334
      %v1338 = vpack.c.bf16 %v1337, %v1336
      %v1340 = vunpack.c.l.b16 %v1338
      %v1341 = vunpack.c.h.b16 %v1338
      %v1342 = vpack.c.b16 %v1340, %v1340
      %v1343 = vpack.c.b16 %v1341, %v1341
      %vm1346 = vcmask 519168
      %1347 = vst.msk [vmem:[%s170] sm:$0xf] %vm1346, %v1342
      %1348 = vst.msk [vmem:[%s170 + $0x4] sm:$0xf] %vm1346, %v1343
      %p1349 = scmp.lt.s32.totalorder %s14, 1
      %s1350 = scalar_select %p1349, %s14, 1
      %s1351 = smul.addr %s1350, 2
      %s1352 = smul.addr %s1351, 4
      %s1353 = scalar_lea.vmem %s3, %s1352
      // Predicated region
      $region33: #{forward.6} parent=31 // pred_check
        %p1354 = pneg %p100
      $region34: #{forward.6} parent=31 // pred_check_branch
        %1356 = sbr.rel (%p1354) target = $region36
      $region35: #{forward.6} parent=31 // pred_region
        _
      $region36: #{forward.6} parent=31 // pred_fallthru
        _
    $region32: #{forward.6} parent=5 // pred_fallthru
      _
    %p1357 = scmp.le.s32.totalorder 2, %s9
    // Predicated region
    $region37: #{forward.6} parent=5 // pred_check
      %p1358 = pneg %p1357
    $region38: #{forward.6} parent=5 // pred_check_branch
      %1360 = sbr.rel (%p1358) target = $region40
    $region39: #{forward.6} parent=5 // pred_region
      %s1361 = ssub.s32 %s9, 2
      // Predicated region
      $region41: #{forward.6} parent=39 // pred_check
        %p1362 = pneg %p106
      $region42: #{forward.6} parent=39 // pred_check_branch
        %1364 = sbr.rel (%p1362) target = $region44
      $region43: #{forward.6} parent=39 // pred_region
        %p1365 = scmp.lt.s32.totalorder %s15, 1
        %s1366 = scalar_select %p1365, %s15, 1
        %s1367 = smul.addr %s1366, 2
        %s1368 = smul.addr %s1367, 4
        %s1369 = scalar_lea.vmem %s3, %s1368
      $region44: #{forward.6} parent=39 // pred_fallthru
        _
    $region40: #{forward.6} parent=5 // pred_fallthru
      _
  $region6: #{forward.6} parent=0 // loop_footer
    %s13 = sadd.s32 1, %s9
  $region7: #{forward.6} parent=0 // loop_footer_branch
    %8 = sbr.rel target = $region3
  $region8: #{forward.6} parent=0 // loop_exit
    _

// kernel: forward.7
$region0: #{forward.7}
  #allocation0 [shape = 'u32[]', space=smem, size = 0x4, offset = 0x4, fixed_abs, tag = 'smem constant byte address 0x4 - core index']
  #allocation1 [shape = 'u32[144,128]{1,0:T(1,128)}', space=vmem, size = 0x12000, scoped, tag = 'internal scratch']
  %s0 = inlined_call_operand.vmem [shape: bf16[2,1024], index: 0, kind: input, shape index: {}]
  %s1 = inlined_call_operand.vmem [shape: bf16[1024,64], index: 1, kind: input, shape index: {}]
  %s2 = inlined_call_operand.vmem [shape: f32[1,64], index: 2, kind: input, shape index: {}]
  %s3 = inlined_call_operand.vmem [shape: bf16[64,10], index: 3, kind: input, shape index: {}]
  %s4 = inlined_call_operand.vmem [shape: f32[1,10], index: 4, kind: input, shape index: {}]
  %s5 = inlined_call_operand.hbm [shape: f32[2,10], index: 5, kind: output, shape index: {}]
  %s6 = sld [smem:[#allocation0]]
  $region30: #{forward.7} parent=0
    _
  %s8 = ssub.s32 1, %s6
  %s9 = scalar_select 0, %s8, %s6
  $region1: #{forward.7} parent=0
    #allocation2 [shape = 'u8[1024]{0}', space=vmem, size = 0x400, scoped, tag = 'output window, operand 0, single buffered']
    #allocation3 [shape = 's32[1]{0}', space=sflag, size = 0x4, scoped, tag = 'scoped memory for forward.7']
    %10 = vsyncpa [#allocation3], 0
    // Predicated region
    $region2: #{forward.7} parent=1 // pred_check
      _
    $region3: #{forward.7} parent=1 // pred_check_branch
      %12 = sbr.rel (0) target = $region5
    $region4: #{forward.7} parent=1 // pred_region
      _
    $region5: #{forward.7} parent=1 // pred_fallthru
      _
    // Predicated region
    $region6: #{forward.7} parent=1 // pred_check
      _
    $region7: #{forward.7} parent=1 // pred_check_branch
      %14 = sbr.rel (0) target = $region9
    $region8: #{forward.7} parent=1 // pred_region
      _
    $region9: #{forward.7} parent=1 // pred_fallthru
      _
    // Predicated region
    $region10: #{forward.7} parent=1 // pred_check
      _
    $region11: #{forward.7} parent=1 // pred_check_branch
      %16 = sbr.rel (0) target = $region13
    $region12: #{forward.7} parent=1 // pred_region
      _
    $region13: #{forward.7} parent=1 // pred_fallthru
      _
    // Predicated region
    $region14: #{forward.7} parent=1 // pred_check
      _
    $region15: #{forward.7} parent=1 // pred_check_branch
      %18 = sbr.rel (0) target = $region17
    $region16: #{forward.7} parent=1 // pred_region
      _
    $region17: #{forward.7} parent=1 // pred_fallthru
      _
    // Predicated region
    $region18: #{forward.7} parent=1 // pred_check
      _
    $region19: #{forward.7} parent=1 // pred_check_branch
      %20 = sbr.rel (0) target = $region21
    $region20: #{forward.7} parent=1 // pred_region
      _
    $region21: #{forward.7} parent=1 // pred_fallthru
      _
    %v22 = vld [vmem:[%s0] sm:$0xff]
    %v23 = vld [vmem:[%s1] sm:$0xf]
    %v24 = vld [vmem:[%s1 + $0x4] sm:$0xf]
    %v25 = vld [vmem:[%s1 + $0x8] sm:$0xf]
    %v26 = vld [vmem:[%s1 + $0xc] sm:$0xf]
    %v27 = vld [vmem:[%s1 + $0x10] sm:$0xf]
    %v28 = vld [vmem:[%s1 + $0x14] sm:$0xf]
    %v29 = vld [vmem:[%s1 + $0x18] sm:$0xf]
    %v30 = vld [vmem:[%s1 + $0x1c] sm:$0xf]
    %v31 = vld [vmem:[%s1 + $0x20] sm:$0xf]
    %v32 = vld [vmem:[%s1 + $0x24] sm:$0xf]
    %v33 = vld [vmem:[%s1 + $0x28] sm:$0xf]
    %v34 = vld [vmem:[%s1 + $0x2c] sm:$0xf]
    %v35 = vld [vmem:[%s1 + $0x30] sm:$0xf]
    %v36 = vld [vmem:[%s1 + $0x34] sm:$0xf]
    %v37 = vld [vmem:[%s1 + $0x38] sm:$0xf]
    %v38 = vld [vmem:[%s1 + $0x3c] sm:$0xf]
    %v39 = vld [vmem:[%s1 + $0x40] sm:$0xf]
    %v40 = vld [vmem:[%s1 + $0x44] sm:$0xf]
    %v41 = vld [vmem:[%s1 + $0x48] sm:$0xf]
    %v42 = vld [vmem:[%s1 + $0x4c] sm:$0xf]
    %v43 = vld [vmem:[%s1 + $0x50] sm:$0xf]
    %v44 = vld [vmem:[%s1 + $0x54] sm:$0xf]
    %v45 = vld [vmem:[%s1 + $0x58] sm:$0xf]
    %v46 = vld [vmem:[%s1 + $0x5c] sm:$0xf]
    %v47 = vld [vmem:[%s1 + $0x60] sm:$0xf]
    %v48 = vld [vmem:[%s1 + $0x64] sm:$0xf]
    %v49 = vld [vmem:[%s1 + $0x68] sm:$0xf]
    %v50 = vld [vmem:[%s1 + $0x6c] sm:$0xf]
    %v51 = vld [vmem:[%s1 + $0x70] sm:$0xf]
    %v52 = vld [vmem:[%s1 + $0x74] sm:$0xf]
    %v53 = vld [vmem:[%s1 + $0x78] sm:$0xf]
    %v54 = vld [vmem:[%s1 + $0x7c] sm:$0xf]
    %v55 = vld [vmem:[%s1 + $0x80] sm:$0xf]
    %v56 = vld [vmem:[%s1 + $0x84] sm:$0xf]
    %v57 = vld [vmem:[%s1 + $0x88] sm:$0xf]
    %v58 = vld [vmem:[%s1 + $0x8c] sm:$0xf]
    %v59 = vld [vmem:[%s1 + $0x90] sm:$0xf]
    %v60 = vld [vmem:[%s1 + $0x94] sm:$0xf]
    %v61 = vld [vmem:[%s1 + $0x98] sm:$0xf]
    %v62 = vld [vmem:[%s1 + $0x9c] sm:$0xf]
    %v63 = vld [vmem:[%s1 + $0xa0] sm:$0xf]
    %v64 = vld [vmem:[%s1 + $0xa4] sm:$0xf]
    %v65 = vld [vmem:[%s1 + $0xa8] sm:$0xf]
    %v66 = vld [vmem:[%s1 + $0xac] sm:$0xf]
    %v67 = vld [vmem:[%s1 + $0xb0] sm:$0xf]
    %v68 = vld [vmem:[%s1 + $0xb4] sm:$0xf]
    %v69 = vld [vmem:[%s1 + $0xb8] sm:$0xf]
    %v70 = vld [vmem:[%s1 + $0xbc] sm:$0xf]
    %v71 = vld [vmem:[%s1 + $0xc0] sm:$0xf]
    %v72 = vld [vmem:[%s1 + $0xc4] sm:$0xf]
    %v73 = vld [vmem:[%s1 + $0xc8] sm:$0xf]
    %v74 = vld [vmem:[%s1 + $0xcc] sm:$0xf]
    %v75 = vld [vmem:[%s1 + $0xd0] sm:$0xf]
    %v76 = vld [vmem:[%s1 + $0xd4] sm:$0xf]
    %v77 = vld [vmem:[%s1 + $0xd8] sm:$0xf]
    %v78 = vld [vmem:[%s1 + $0xdc] sm:$0xf]
    %v79 = vld [vmem:[%s1 + $0xe0] sm:$0xf]
    %v80 = vld [vmem:[%s1 + $0xe4] sm:$0xf]
    %v81 = vld [vmem:[%s1 + $0xe8] sm:$0xf]
    %v82 = vld [vmem:[%s1 + $0xec] sm:$0xf]
    %v83 = vld [vmem:[%s1 + $0xf0] sm:$0xf]
    %v84 = vld [vmem:[%s1 + $0xf4] sm:$0xf]
    %v85 = vld [vmem:[%s1 + $0xf8] sm:$0xf]
    %v86 = vld [vmem:[%s1 + $0xfc] sm:$0xf]
    %v87 = vld [vmem:[%s1 + $0x100] sm:$0xf]
    %v88 = vld [vmem:[%s1 + $0x104] sm:$0xf]
    %v89 = vld [vmem:[%s1 + $0x108] sm:$0xf]
    %v90 = vld [vmem:[%s1 + $0x10c] sm:$0xf]
    %v91 = vld [vmem:[%s1 + $0x110] sm:$0xf]
    %v92 = vld [vmem:[%s1 + $0x114] sm:$0xf]
    %v93 = vld [vmem:[%s1 + $0x118] sm:$0xf]
    %v94 = vld [vmem:[%s1 + $0x11c] sm:$0xf]
    %v95 = vld [vmem:[%s1 + $0x120] sm:$0xf]
    %v96 = vld [vmem:[%s1 + $0x124] sm:$0xf]
    %v97 = vld [vmem:[%s1 + $0x128] sm:$0xf]
    %v98 = vld [vmem:[%s1 + $0x12c] sm:$0xf]
    %v99 = vld [vmem:[%s1 + $0x130] sm:$0xf]
    %v100 = vld [vmem:[%s1 + $0x134] sm:$0xf]
    %v101 = vld [vmem:[%s1 + $0x138] sm:$0xf]
    %v102 = vld [vmem:[%s1 + $0x13c] sm:$0xf]
    %v103 = vld [vmem:[%s1 + $0x140] sm:$0xf]
    %v104 = vld [vmem:[%s1 + $0x144] sm:$0xf]
    %v105 = vld [vmem:[%s1 + $0x148] sm:$0xf]
    %v106 = vld [vmem:[%s1 + $0x14c] sm:$0xf]
    %v107 = vld [vmem:[%s1 + $0x150] sm:$0xf]
    %v108 = vld [vmem:[%s1 + $0x154] sm:$0xf]
    %v109 = vld [vmem:[%s1 + $0x158] sm:$0xf]
    %v110 = vld [vmem:[%s1 + $0x15c] sm:$0xf]
    %v111 = vld [vmem:[%s1 + $0x160] sm:$0xf]
    %v112 = vld [vmem:[%s1 + $0x164] sm:$0xf]
    %v113 = vld [vmem:[%s1 + $0x168] sm:$0xf]
    %v114 = vld [vmem:[%s1 + $0x16c] sm:$0xf]
    %v115 = vld [vmem:[%s1 + $0x170] sm:$0xf]
    %v116 = vld [vmem:[%s1 + $0x174] sm:$0xf]
    %v117 = vld [vmem:[%s1 + $0x178] sm:$0xf]
    %v118 = vld [vmem:[%s1 + $0x17c] sm:$0xf]
    %v119 = vld [vmem:[%s1 + $0x180] sm:$0xf]
    %v120 = vld [vmem:[%s1 + $0x184] sm:$0xf]
    %v121 = vld [vmem:[%s1 + $0x188] sm:$0xf]
    %v122 = vld [vmem:[%s1 + $0x18c] sm:$0xf]
    %v123 = vld [vmem:[%s1 + $0x190] sm:$0xf]
    %v124 = vld [vmem:[%s1 + $0x194] sm:$0xf]
    %v125 = vld [vmem:[%s1 + $0x198] sm:$0xf]
    %v126 = vld [vmem:[%s1 + $0x19c] sm:$0xf]
    %v127 = vld [vmem:[%s1 + $0x1a0] sm:$0xf]
    %v128 = vld [vmem:[%s1 + $0x1a4] sm:$0xf]
    %v129 = vld [vmem:[%s1 + $0x1a8] sm:$0xf]
    %v130 = vld [vmem:[%s1 + $0x1ac] sm:$0xf]
    %v131 = vld [vmem:[%s1 + $0x1b0] sm:$0xf]
    %v132 = vld [vmem:[%s1 + $0x1b4] sm:$0xf]
    %v133 = vld [vmem:[%s1 + $0x1b8] sm:$0xf]
    %v134 = vld [vmem:[%s1 + $0x1bc] sm:$0xf]
    %v135 = vld [vmem:[%s1 + $0x1c0] sm:$0xf]
    %v136 = vld [vmem:[%s1 + $0x1c4] sm:$0xf]
    %v137 = vld [vmem:[%s1 + $0x1c8] sm:$0xf]
    %v138 = vld [vmem:[%s1 + $0x1cc] sm:$0xf]
    %v139 = vld [vmem:[%s1 + $0x1d0] sm:$0xf]
    %v140 = vld [vmem:[%s1 + $0x1d4] sm:$0xf]
    %v141 = vld [vmem:[%s1 + $0x1d8] sm:$0xf]
    %v142 = vld [vmem:[%s1 + $0x1dc] sm:$0xf]
    %v143 = vld [vmem:[%s1 + $0x1e0] sm:$0xf]
    %v144 = vld [vmem:[%s1 + $0x1e4] sm:$0xf]
    %v145 = vld [vmem:[%s1 + $0x1e8] sm:$0xf]
    %v146 = vld [vmem:[%s1 + $0x1ec] sm:$0xf]
    %v147 = vld [vmem:[%s1 + $0x1f0] sm:$0xf]
    %v148 = vld [vmem:[%s1 + $0x1f4] sm:$0xf]
    %v149 = vld [vmem:[%s1 + $0x1f8] sm:$0xf]
    %v150 = vld [vmem:[%s1 + $0x1fc] sm:$0xf]
    %v151 = vld [vmem:[%s2] sm:$0x1]
    %v153 = vlaneseq
    %v154 = vshrl.u32 %v153, 7
    %v155 = vsub.s32 0, %v154
    %v156 = vrot.slane %v151, %v155
    %v159 = vcombine.high %v22, %v22
    %v161 = vunpack.c.l.s4 1966171168
    %v162 = vunpack.c.0.s8 %v161
    %v163 = vlaneseq
    %v164 = vshrl.u32 %v163, 7
    %v165 = vsub.s32 %v162, %v164
    %v166 = vrot.slane %v22, %v165
    %v168 = vunpack.c.l.s4 1966171168
    %v169 = vunpack.c.0.s8 %v168
    %v170 = vlaneseq
    %v171 = vshrl.u32 %v170, 7
    %v172 = vsub.s32 %v169, %v171
    %v173 = vrot.slane %v159, %v172
    %v174 = vcombine.high %v166, %v166
    %v175 = vcombine.high %v173, %v173
    %v177 = vunpack.c.l.s4 1966171168
    %v178 = vunpack.c.0.s8 %v177
    %v179 = vlaneseq
    %v180 = vshrl.u32 %v179, 7
    %v181 = vsub.s32 %v178, %v180
    %v182 = vrot.slane %v166, %v181
    %v184 = vunpack.c.l.s4 1966171168
    %v185 = vunpack.c.0.s8 %v184
    %v186 = vlaneseq
    %v187 = vshrl.u32 %v186, 7
    %v188 = vsub.s32 %v185, %v187
    %v189 = vrot.slane %v173, %v188
    %v191 = vunpack.c.l.s4 1966171168
    %v192 = vunpack.c.0.s8 %v191
    %v193 = vlaneseq
    %v194 = vshrl.u32 %v193, 7
    %v195 = vsub.s32 %v192, %v194
    %v196 = vrot.slane %v174, %v195
    %v198 = vunpack.c.l.s4 1966171168
    %v199 = vunpack.c.0.s8 %v198
    %v200 = vlaneseq
    %v201 = vshrl.u32 %v200, 7
    %v202 = vsub.s32 %v199, %v201
    %v203 = vrot.slane %v175, %v202
    %v204 = vcombine.high %v182, %v182
    %v205 = vcombine.high %v189, %v189
    %v206 = vcombine.high %v196, %v196
    %v207 = vcombine.high %v203, %v203
    %v344 = vunpack.c.l.b16 %v23
    %v345 = vunpack.c.l.b16 %v24
    %v346 = vunpack.c.l.b16 %v25
    %v347 = vunpack.c.l.b16 %v26
    %v348 = vunpack.c.l.b16 %v27
    %v349 = vunpack.c.l.b16 %v28
    %v350 = vunpack.c.l.b16 %v29
    %v351 = vunpack.c.l.b16 %v30
    %v352 = vunpack.c.l.b16 %v31
    %v353 = vunpack.c.l.b16 %v32
    %v354 = vunpack.c.l.b16 %v33
    %v355 = vunpack.c.l.b16 %v34
    %v356 = vunpack.c.l.b16 %v35
    %v357 = vunpack.c.l.b16 %v36
    %v358 = vunpack.c.l.b16 %v37
    %v359 = vunpack.c.l.b16 %v38
    %v360 = vunpack.c.l.b16 %v39
    %v361 = vunpack.c.l.b16 %v40
    %v362 = vunpack.c.l.b16 %v41
    %v363 = vunpack.c.l.b16 %v42
    %v364 = vunpack.c.l.b16 %v43
    %v365 = vunpack.c.l.b16 %v44
    %v366 = vunpack.c.l.b16 %v45
    %v367 = vunpack.c.l.b16 %v46
    %v368 = vunpack.c.l.b16 %v47
    %v369 = vunpack.c.l.b16 %v48
    %v370 = vunpack.c.l.b16 %v49
    %v371 = vunpack.c.l.b16 %v50
    %v372 = vunpack.c.l.b16 %v51
    %v373 = vunpack.c.l.b16 %v52
    %v374 = vunpack.c.l.b16 %v53
    %v375 = vunpack.c.l.b16 %v54
    %v376 = vunpack.c.l.b16 %v55
    %v377 = vunpack.c.l.b16 %v56
    %v378 = vunpack.c.l.b16 %v57
    %v379 = vunpack.c.l.b16 %v58
    %v380 = vunpack.c.l.b16 %v59
    %v381 = vunpack.c.l.b16 %v60
    %v382 = vunpack.c.l.b16 %v61
    %v383 = vunpack.c.l.b16 %v62
    %v384 = vunpack.c.l.b16 %v63
    %v385 = vunpack.c.l.b16 %v64
    %v386 = vunpack.c.l.b16 %v65
    %v387 = vunpack.c.l.b16 %v66
    %v388 = vunpack.c.l.b16 %v67
    %v389 = vunpack.c.l.b16 %v68
    %v390 = vunpack.c.l.b16 %v69
    %v391 = vunpack.c.l.b16 %v70
    %v392 = vunpack.c.l.b16 %v71
    %v393 = vunpack.c.l.b16 %v72
    %v394 = vunpack.c.l.b16 %v73
    %v395 = vunpack.c.l.b16 %v74
    %v396 = vunpack.c.l.b16 %v75
    %v397 = vunpack.c.l.b16 %v76
    %v398 = vunpack.c.l.b16 %v77
    %v399 = vunpack.c.l.b16 %v78
    %v400 = vunpack.c.l.b16 %v79
    %v401 = vunpack.c.l.b16 %v80
    %v402 = vunpack.c.l.b16 %v81
    %v403 = vunpack.c.l.b16 %v82
    %v404 = vunpack.c.l.b16 %v83
    %v405 = vunpack.c.l.b16 %v84
    %v406 = vunpack.c.l.b16 %v85
    %v407 = vunpack.c.l.b16 %v86
    %v408 = vunpack.c.l.b16 %v87
    %v409 = vunpack.c.l.b16 %v88
    %v410 = vunpack.c.l.b16 %v89
    %v411 = vunpack.c.l.b16 %v90
    %v412 = vunpack.c.l.b16 %v91
    %v413 = vunpack.c.l.b16 %v92
    %v414 = vunpack.c.l.b16 %v93
    %v415 = vunpack.c.l.b16 %v94
    %v416 = vunpack.c.l.b16 %v95
    %v417 = vunpack.c.l.b16 %v96
    %v418 = vunpack.c.l.b16 %v97
    %v419 = vunpack.c.l.b16 %v98
    %v420 = vunpack.c.l.b16 %v99
    %v421 = vunpack.c.l.b16 %v100
    %v422 = vunpack.c.l.b16 %v101
    %v423 = vunpack.c.l.b16 %v102
    %v424 = vunpack.c.l.b16 %v103
    %v425 = vunpack.c.l.b16 %v104
    %v426 = vunpack.c.l.b16 %v105
    %v427 = vunpack.c.l.b16 %v106
    %v428 = vunpack.c.l.b16 %v107
    %v429 = vunpack.c.l.b16 %v108
    %v430 = vunpack.c.l.b16 %v109
    %v431 = vunpack.c.l.b16 %v110
    %v432 = vunpack.c.l.b16 %v111
    %v433 = vunpack.c.l.b16 %v112
    %v434 = vunpack.c.l.b16 %v113
    %v435 = vunpack.c.l.b16 %v114
    %v436 = vunpack.c.l.b16 %v115
    %v437 = vunpack.c.l.b16 %v116
    %v438 = vunpack.c.l.b16 %v117
    %v439 = vunpack.c.l.b16 %v118
    %v440 = vunpack.c.l.b16 %v119
    %v441 = vunpack.c.l.b16 %v120
    %v442 = vunpack.c.l.b16 %v121
    %v443 = vunpack.c.l.b16 %v122
    %v444 = vunpack.c.l.b16 %v123
    %v445 = vunpack.c.l.b16 %v124
    %v446 = vunpack.c.l.b16 %v125
    %v447 = vunpack.c.l.b16 %v126
    %v448 = vunpack.c.l.b16 %v127
    %v449 = vunpack.c.l.b16 %v128
    %v450 = vunpack.c.l.b16 %v129
    %v451 = vunpack.c.l.b16 %v130
    %v452 = vunpack.c.l.b16 %v131
    %v453 = vunpack.c.l.b16 %v132
    %v454 = vunpack.c.l.b16 %v133
    %v455 = vunpack.c.l.b16 %v134
    %v456 = vunpack.c.l.b16 %v135
    %v457 = vunpack.c.l.b16 %v136
    %v458 = vunpack.c.l.b16 %v137
    %v459 = vunpack.c.l.b16 %v138
    %v460 = vunpack.c.l.b16 %v139
    %v461 = vunpack.c.l.b16 %v140
    %v462 = vunpack.c.l.b16 %v141
    %v463 = vunpack.c.l.b16 %v142
    %v464 = vunpack.c.l.b16 %v143
    %v465 = vunpack.c.l.b16 %v144
    %v466 = vunpack.c.l.b16 %v145
    %v467 = vunpack.c.l.b16 %v146
    %v468 = vunpack.c.l.b16 %v147
    %v469 = vunpack.c.l.b16 %v148
    %v470 = vunpack.c.l.b16 %v149
    %v471 = vunpack.c.l.b16 %v150
    %v472 = vpack.c.b16 %v345, %v344
    %v473 = vpack.c.b16 %v347, %v346
    %v474 = vpack.c.b16 %v349, %v348
    %v475 = vpack.c.b16 %v351, %v350
    %v476 = vpack.c.b16 %v353, %v352
    %v477 = vpack.c.b16 %v355, %v354
    %v478 = vpack.c.b16 %v357, %v356
    %v479 = vpack.c.b16 %v359, %v358
    %v480 = vpack.c.b16 %v361, %v360
    %v481 = vpack.c.b16 %v363, %v362
    %v482 = vpack.c.b16 %v365, %v364
    %v483 = vpack.c.b16 %v367, %v366
    %v484 = vpack.c.b16 %v369, %v368
    %v485 = vpack.c.b16 %v371, %v370
    %v486 = vpack.c.b16 %v373, %v372
    %v487 = vpack.c.b16 %v375, %v374
    %v488 = vpack.c.b16 %v377, %v376
    %v489 = vpack.c.b16 %v379, %v378
    %v490 = vpack.c.b16 %v381, %v380
    %v491 = vpack.c.b16 %v383, %v382
    %v492 = vpack.c.b16 %v385, %v384
    %v493 = vpack.c.b16 %v387, %v386
    %v494 = vpack.c.b16 %v389, %v388
    %v495 = vpack.c.b16 %v391, %v390
    %v496 = vpack.c.b16 %v393, %v392
    %v497 = vpack.c.b16 %v395, %v394
    %v498 = vpack.c.b16 %v397, %v396
    %v499 = vpack.c.b16 %v399, %v398
    %v500 = vpack.c.b16 %v401, %v400
    %v501 = vpack.c.b16 %v403, %v402
    %v502 = vpack.c.b16 %v405, %v404
    %v503 = vpack.c.b16 %v407, %v406
    %v504 = vpack.c.b16 %v409, %v408
    %v505 = vpack.c.b16 %v411, %v410
    %v506 = vpack.c.b16 %v413, %v412
    %v507 = vpack.c.b16 %v415, %v414
    %v508 = vpack.c.b16 %v417, %v416
    %v509 = vpack.c.b16 %v419, %v418
    %v510 = vpack.c.b16 %v421, %v420
    %v511 = vpack.c.b16 %v423, %v422
    %v512 = vpack.c.b16 %v425, %v424
    %v513 = vpack.c.b16 %v427, %v426
    %v514 = vpack.c.b16 %v429, %v428
    %v515 = vpack.c.b16 %v431, %v430
    %v516 = vpack.c.b16 %v433, %v432
    %v517 = vpack.c.b16 %v435, %v434
    %v518 = vpack.c.b16 %v437, %v436
    %v519 = vpack.c.b16 %v439, %v438
    %v520 = vpack.c.b16 %v441, %v440
    %v521 = vpack.c.b16 %v443, %v442
    %v522 = vpack.c.b16 %v445, %v444
    %v523 = vpack.c.b16 %v447, %v446
    %v524 = vpack.c.b16 %v449, %v448
    %v525 = vpack.c.b16 %v451, %v450
    %v526 = vpack.c.b16 %v453, %v452
    %v527 = vpack.c.b16 %v455, %v454
    %v528 = vpack.c.b16 %v457, %v456
    %v529 = vpack.c.b16 %v459, %v458
    %v530 = vpack.c.b16 %v461, %v460
    %v531 = vpack.c.b16 %v463, %v462
    %v532 = vpack.c.b16 %v465, %v464
    %v533 = vpack.c.b16 %v467, %v466
    %v534 = vpack.c.b16 %v469, %v468
    %v535 = vpack.c.b16 %v471, %v470
    %600 = vmatprep.subr.bf16.mxu0 0
    %601 = vmatpush1.bf16.msra.mxu0 %v472
    %602 = vmatprep.subr.bf16.mxu0 0
    %603 = vmatpush1.bf16.msra.mxu0 %v473
    %604 = vmatprep.subr.bf16.mxu0 0
    %605 = vmatpush1.bf16.msra.mxu0 %v474
    %606 = vmatprep.subr.bf16.mxu0 0
    %607 = vmatpush1.bf16.msra.mxu0 %v475
    %608 = vmatprep.subr.bf16.mxu0 0
    %609 = vmatpush1.bf16.msra.mxu0 %v476
    %610 = vmatprep.subr.bf16.mxu0 0
    %611 = vmatpush1.bf16.msra.mxu0 %v477
    %612 = vmatprep.subr.bf16.mxu0 0
    %613 = vmatpush1.bf16.msra.mxu0 %v478
    %614 = vmatprep.subr.bf16.mxu0 0
    %615 = vmatpush1.bf16.msra.mxu0 %v479
    %616 = vmatprep.subr.bf16.mxu0 0
    %617 = vmatpush1.bf16.msra.mxu0 %v480
    %618 = vmatprep.subr.bf16.mxu0 0
    %619 = vmatpush1.bf16.msra.mxu0 %v481
    %620 = vmatprep.subr.bf16.mxu0 0
    %621 = vmatpush1.bf16.msra.mxu0 %v482
    %622 = vmatprep.subr.bf16.mxu0 0
    %623 = vmatpush1.bf16.msra.mxu0 %v483
    %624 = vmatprep.subr.bf16.mxu0 0
    %625 = vmatpush1.bf16.msra.mxu0 %v484
    %626 = vmatprep.subr.bf16.mxu0 0
    %627 = vmatpush1.bf16.msra.mxu0 %v485
    %628 = vmatprep.subr.bf16.mxu0 0
    %629 = vmatpush1.bf16.msra.mxu0 %v486
    %630 = vmatprep.subr.bf16.mxu0 0
    %631 = vmatpush1.bf16.msra.mxu0 %v487
    %632 = vmatprep.mubr.bf16.mxu0 %v196
    %633 = vmatmul.mubr.bf16.gmra.mrb[0].mxu0 %v182
    %v634 = vpop.f32.mrb[0].mxu0
    %v635 = vadd.f32 %v156, %v634
    %v636 = vpop.f32.mrb[0].mxu0
    %v637 = vpop.f32.mrb[0].mxu0
    %v638 = vpop.f32.mrb[0].mxu0
    %639 = vdwg.mxu0
    %640 = vmatprep.subr.bf16.mxu0 0
    %641 = vmatpush1.bf16.msra.mxu0 %v488
    %642 = vmatprep.subr.bf16.mxu0 0
    %643 = vmatpush1.bf16.msra.mxu0 %v489
    %644 = vmatprep.subr.bf16.mxu0 0
    %645 = vmatpush1.bf16.msra.mxu0 %v490
    %646 = vmatprep.subr.bf16.mxu0 0
    %647 = vmatpush1.bf16.msra.mxu0 %v491
    %648 = vmatprep.subr.bf16.mxu0 0
    %649 = vmatpush1.bf16.msra.mxu0 %v492
    %650 = vmatprep.subr.bf16.mxu0 0
    %651 = vmatpush1.bf16.msra.mxu0 %v493
    %652 = vmatprep.subr.bf16.mxu0 0
    %653 = vmatpush1.bf16.msra.mxu0 %v494
    %654 = vmatprep.subr.bf16.mxu0 0
    %655 = vmatpush1.bf16.msra.mxu0 %v495
    %656 = vmatprep.subr.bf16.mxu0 0
    %657 = vmatpush1.bf16.msra.mxu0 %v496
    %658 = vmatprep.subr.bf16.mxu0 0
    %659 = vmatpush1.bf16.msra.mxu0 %v497
    %660 = vmatprep.subr.bf16.mxu0 0
    %661 = vmatpush1.bf16.msra.mxu0 %v498
    %662 = vmatprep.subr.bf16.mxu0 0
    %663 = vmatpush1.bf16.msra.mxu0 %v499
    %664 = vmatprep.subr.bf16.mxu0 0
    %665 = vmatpush1.bf16.msra.mxu0 %v500
    %666 = vmatprep.subr.bf16.mxu0 0
    %667 = vmatpush1.bf16.msra.mxu0 %v501
    %668 = vmatprep.subr.bf16.mxu0 0
    %669 = vmatpush1.bf16.msra.mxu0 %v502
    %670 = vmatprep.subr.bf16.mxu0 0
    %671 = vmatpush1.bf16.msra.mxu0 %v503
    %672 = vmatprep.mubr.bf16.mxu0 %v206
    %673 = vmatmul.mubr.bf16.gmra.mrb[0].mxu0 %v204
    %v674 = vpop.f32.mrb[0].mxu0
    %v675 = vadd.f32 %v635, %v674
    %v676 = vpop.f32.mrb[0].mxu0
    %v677 = vpop.f32.mrb[0].mxu0
    %v678 = vpop.f32.mrb[0].mxu0
    %679 = vdwg.mxu0
    %680 = vmatprep.subr.bf16.mxu0 0
    %681 = vmatpush1.bf16.msra.mxu0 %v504
    %682 = vmatprep.subr.bf16.mxu0 0
    %683 = vmatpush1.bf16.msra.mxu0 %v505
    %684 = vmatprep.subr.bf16.mxu0 0
    %685 = vmatpush1.bf16.msra.mxu0 %v506
    %686 = vmatprep.subr.bf16.mxu0 0
    %687 = vmatpush1.bf16.msra.mxu0 %v507
    %688 = vmatprep.subr.bf16.mxu0 0
    %689 = vmatpush1.bf16.msra.mxu0 %v508
    %690 = vmatprep.subr.bf16.mxu0 0
    %691 = vmatpush1.bf16.msra.mxu0 %v509
    %692 = vmatprep.subr.bf16.mxu0 0
    %693 = vmatpush1.bf16.msra.mxu0 %v510
    %694 = vmatprep.subr.bf16.mxu0 0
    %695 = vmatpush1.bf16.msra.mxu0 %v511
    %696 = vmatprep.subr.bf16.mxu0 0
    %697 = vmatpush1.bf16.msra.mxu0 %v512
    %698 = vmatprep.subr.bf16.mxu0 0
    %699 = vmatpush1.bf16.msra.mxu0 %v513
    %700 = vmatprep.subr.bf16.mxu0 0
    %701 = vmatpush1.bf16.msra.mxu0 %v514
    %702 = vmatprep.subr.bf16.mxu0 0
    %703 = vmatpush1.bf16.msra.mxu0 %v515
    %704 = vmatprep.subr.bf16.mxu0 0
    %705 = vmatpush1.bf16.msra.mxu0 %v516
    %706 = vmatprep.subr.bf16.mxu0 0
    %707 = vmatpush1.bf16.msra.mxu0 %v517
    %708 = vmatprep.subr.bf16.mxu0 0
    %709 = vmatpush1.bf16.msra.mxu0 %v518
    %710 = vmatprep.subr.bf16.mxu0 0
    %711 = vmatpush1.bf16.msra.mxu0 %v519
    %712 = vmatprep.mubr.bf16.mxu0 %v203
    %713 = vmatmul.mubr.bf16.gmra.mrb[0].mxu0 %v189
    %v714 = vpop.f32.mrb[0].mxu0
    %v715 = vadd.f32 %v675, %v714
    %v716 = vpop.f32.mrb[0].mxu0
    %v717 = vpop.f32.mrb[0].mxu0
    %v718 = vpop.f32.mrb[0].mxu0
    %719 = vdwg.mxu0
    %720 = vmatprep.subr.bf16.mxu0 0
    %721 = vmatpush1.bf16.msra.mxu0 %v520
    %722 = vmatprep.subr.bf16.mxu0 0
    %723 = vmatpush1.bf16.msra.mxu0 %v521
    %724 = vmatprep.subr.bf16.mxu0 0
    %725 = vmatpush1.bf16.msra.mxu0 %v522
    %726 = vmatprep.subr.bf16.mxu0 0
    %727 = vmatpush1.bf16.msra.mxu0 %v523
    %728 = vmatprep.subr.bf16.mxu0 0
    %729 = vmatpush1.bf16.msra.mxu0 %v524
    %730 = vmatprep.subr.bf16.mxu0 0
    %731 = vmatpush1.bf16.msra.mxu0 %v525
    %732 = vmatprep.subr.bf16.mxu0 0
    %733 = vmatpush1.bf16.msra.mxu0 %v526
    %734 = vmatprep.subr.bf16.mxu0 0
    %735 = vmatpush1.bf16.msra.mxu0 %v527
    %736 = vmatprep.subr.bf16.mxu0 0
    %737 = vmatpush1.bf16.msra.mxu0 %v528
    %738 = vmatprep.subr.bf16.mxu0 0
    %739 = vmatpush1.bf16.msra.mxu0 %v529
    %740 = vmatprep.subr.bf16.mxu0 0
    %741 = vmatpush1.bf16.msra.mxu0 %v530
    %742 = vmatprep.subr.bf16.mxu0 0
    %743 = vmatpush1.bf16.msra.mxu0 %v531
    %744 = vmatprep.subr.bf16.mxu0 0
    %745 = vmatpush1.bf16.msra.mxu0 %v532
    %746 = vmatprep.subr.bf16.mxu0 0
    %747 = vmatpush1.bf16.msra.mxu0 %v533
    %748 = vmatprep.subr.bf16.mxu0 0
    %749 = vmatpush1.bf16.msra.mxu0 %v534
    %750 = vmatprep.subr.bf16.mxu0 0
    %751 = vmatpush1.bf16.msra.mxu0 %v535
    %752 = vmatprep.mubr.bf16.mxu0 %v207
    %753 = vmatmul.mubr.bf16.gmra.mrb[0].mxu0 %v205
    %v754 = vpop.f32.mrb[0].mxu0
    %v755 = vadd.f32 %v715, %v754
    %v756 = vpop.f32.mrb[0].mxu0
    %v757 = vpop.f32.mrb[0].mxu0
    %v758 = vpop.f32.mrb[0].mxu0
    %759 = vdwg.mxu0
    %v760 = vpack.c.bf16 %v755, %v755
    %v761 = vld [vmem:[%s3] sm:$0xf]
    %v762 = vld [vmem:[%s3 + $0x4] sm:$0xf]
    %v763 = vld [vmem:[%s3 + $0x8] sm:$0xf]
    %v764 = vld [vmem:[%s3 + $0xc] sm:$0xf]
    %v765 = vld [vmem:[%s3 + $0x10] sm:$0xf]
    %v766 = vld [vmem:[%s3 + $0x14] sm:$0xf]
    %v767 = vld [vmem:[%s3 + $0x18] sm:$0xf]
    %v768 = vld [vmem:[%s3 + $0x1c] sm:$0xf]
    %v769 = vld [vmem:[%s4] sm:$0x1]
    %v771 = vlaneseq
    %v772 = vshrl.u32 %v771, 7
    %v773 = vsub.s32 0, %v772
    %v774 = vrot.slane %v769, %v773
    %v784 = vunpack.c.l.b16 %v761
    %v785 = vunpack.c.l.b16 %v762
    %v786 = vunpack.c.l.b16 %v763
    %v787 = vunpack.c.l.b16 %v764
    %v788 = vunpack.c.l.b16 %v765
    %v789 = vunpack.c.l.b16 %v766
    %v790 = vunpack.c.l.b16 %v767
    %v791 = vunpack.c.l.b16 %v768
    %v792 = vpack.c.b16 %v785, %v784
    %v793 = vpack.c.b16 %v787, %v786
    %v794 = vpack.c.b16 %v789, %v788
    %v795 = vpack.c.b16 %v791, %v790
    %vm800 = vcmask 523264
    %v802 = vsel %vm800, %v760, 0
    %804 = vmatprep.subr.bf16.mxu0 0
    %805 = vmatpush1.bf16.msra.mxu0 %v792
    %806 = vmatprep.subr.bf16.mxu0 0
    %807 = vmatpush1.bf16.msra.mxu0 %v793
    %808 = vmatprep.subr.bf16.mxu0 0
    %809 = vmatpush1.bf16.msra.mxu0 %v794
    %810 = vmatprep.subr.bf16.mxu0 0
    %811 = vmatpush1.bf16.msra.mxu0 %v795
    %812 = vmatprep.subr.bf16.mxu0 0
    %813 = vmatpush1.bf16.msra.mxu0 0
    %814 = vmatprep.subr.bf16.mxu0 0
    %815 = vmatpush1.bf16.msra.mxu0 0
    %816 = vmatprep.subr.bf16.mxu0 0
    %817 = vmatpush1.bf16.msra.mxu0 0
    %818 = vmatprep.subr.bf16.mxu0 0
    %819 = vmatpush1.bf16.msra.mxu0 0
    %820 = vmatprep.subr.bf16.mxu0 0
    %821 = vmatpush1.bf16.msra.mxu0 0
    %822 = vmatprep.subr.bf16.mxu0 0
    %823 = vmatpush1.bf16.msra.mxu0 0
    %824 = vmatprep.subr.bf16.mxu0 0
    %825 = vmatpush1.bf16.msra.mxu0 0
    %826 = vmatprep.subr.bf16.mxu0 0
    %827 = vmatpush1.bf16.msra.mxu0 0
    %828 = vmatprep.subr.bf16.mxu0 0
    %829 = vmatpush1.bf16.msra.mxu0 0
    %830 = vmatprep.subr.bf16.mxu0 0
    %831 = vmatpush1.bf16.msra.mxu0 0
    %832 = vmatprep.subr.bf16.mxu0 0
    %833 = vmatpush1.bf16.msra.mxu0 0
    %834 = vmatprep.subr.bf16.mxu0 0
    %835 = vmatpush1.bf16.msra.mxu0 0
    %836 = vmatprep.mubr.bf16.mxu0 0
    %837 = vmatmul.mubr.bf16.gmra.mrb[0].mxu0 %v802
    %v838 = vpop.f32.mrb[0].mxu0
    %v839 = vadd.f32 %v774, %v838
    %v840 = vpop.f32.mrb[0].mxu0
    %v841 = vpop.f32.mrb[0].mxu0
    %v842 = vpop.f32.mrb[0].mxu0
    %843 = vdwg.mxu0
    %vm844 = vcmask 74752
    %845 = vst.msk [vmem:[#allocation2] sm:$0x3] %vm844, %v839
    // Predicated region
    $region22: #{forward.7} parent=1 // pred_check
      _
    $region23: #{forward.7} parent=1 // pred_check_branch
      %847 = sbr.rel (0) target = $region25
    $region24: #{forward.7} parent=1 // pred_region
      %s849 = ssub.s32 32, 32
      %850 = vsyncadd [#allocation3], %s849
      %s852 = sshll.u32 [#allocation2], 4
      %s853 = int_to_ptr.vmem [resolvable:$true] %s852
      %855 = dma.vmem_to_hbm [thread:$0]  %s853, 32, %s5, [#allocation3]
    $region25: #{forward.7} parent=1 // pred_fallthru
      _
    // Predicated region
    $region26: #{forward.7} parent=1 // pred_check
      _
    $region27: #{forward.7} parent=1 // pred_check_branch
      %857 = sbr.rel (0) target = $region29
    $region28: #{forward.7} parent=1 // pred_region
      %858 = dma.done [#allocation3], 32
    $region29: #{forward.7} parent=1 // pred_fallthru
      _
    %859 = vsyncpa [#allocation3], 1

</llo_original>
